<compile_context>
chip_gen: v7x
topology: tpu7x:2x2x1
jax: 0.10.0
libtpu: 0.0.40
codegen_flags: <defaults>
</compile_context>

<pallas_src>
import functools

import numpy as np
import jax
import jax.numpy as jnp
from jax.experimental import pallas as pl
from jax.experimental.pallas import tpu as pltpu


_SQRT_2_OVER_PI = 0.7978845608028654
_NEG_INF = -1e9


def _gelu(x):
    # TODO(synk): nn.GELU() in PyTorch is the exact erf form; the tanh approximation is used
    # here for Mosaic-lowering safety (max abs deviation ~3e-3).
    return 0.5 * x * (1.0 + jnp.tanh(_SQRT_2_OVER_PI * (x + 0.044715 * x * x * x)))


def _ln(x, g, b, eps=1e-5):
    mu = jnp.mean(x, axis=-1, keepdims=True)
    var = jnp.mean(jnp.square(x - mu), axis=-1, keepdims=True)
    return (x - mu) * jax.lax.rsqrt(var + eps) * g + b


# ----------------------------------------------------------------------------- fused kernel

def _mixing_block_kernel(
        x_ref, pvec_ref, bias_ref,
        pw_ref, dww_ref, ci1w_ref, ci2w_ref, pjw_ref, qkvw_ref,
        si1w_ref, si2w_ref, prw_ref, f1w_ref, f2w_ref,
        o_ref,
        pad_scr, dw2d_scr,
        *, H, W, heads, hd, kk, offs):
    f32 = jnp.float32
    bf16 = jnp.bfloat16

    def vec(name):                         # static slice of the packed 1-D parameter table
        off, n = offs[name]
        return pvec_ref[:, off:off + n]    # (1, n) f32

    def mm(a, w_ref):                      # matmul in the weight's dtype, f32 accumulation
        w = w_ref[...]
        return jnp.dot(a.astype(w.dtype), w, preferred_element_type=f32)

    Lw = x_ref.shape[1]
    C = x_ref.shape[2]
    Ch = C // 2
    pd = kk // 2
    scale = float(hd) ** -0.5

    x = x_ref[0].astype(f32)                                         # (Lw, C) image row-major

    # ---- norm1 + fused [proj_attn | proj_cnn] projection (per-token; order-equivariant) ----
    xn = _ln(x, vec("norm1_g"), vec("norm1_b"))
    pj = mm(xn, pw_ref)                                              # (Lw, Ch + C)
    x_attn = _ln(pj[:, :Ch] + vec("proj_attn_b"),
                 vec("proj_attn_norm_g"), vec("proj_attn_norm_b"))   # (Lw, Ch)
    x_cnn = _ln(pj[:, Ch:] + vec("proj_cnn_b"),
                vec("proj_cnn_norm_g"), vec("proj_cnn_norm_b"))      # (Lw, C)

    # ---------------- conv branch (tokens already in image order) ----------------
    pad_scr[...] = jnp.zeros(pad_scr.shape, f32)
    for r in range(H):                       # H contiguous row-block stores into the interior
        pad_scr[pd + r, pd:pd + W, :] = x_cnn[r * W:(r + 1) * W, :]
    padded = pad_scr[...]                                            # load padded image once
    dww = dww_ref[...].astype(f32)                                   # (kk, kk, C), loaded once

    # depthwise kk x kk conv + folded BatchNorm (eval mode) + GELU
    acc = jnp.zeros((H, W, C), f32) + vec("dw_b").reshape(1, 1, C)
    for dh in range(kk):
        for dj in range(kk):
            acc = acc + padded[dh:dh + H, dj:dj + W, :] * dww[dh, dj:dj + 1, :]
    x_dw = _gelu(acc * vec("dw_bn_scale").reshape(1, 1, C)
                 + vec("dw_bn_shift").reshape(1, 1, C))              # (H, W, C)

    # back to (Lw, C) token order (image order => contiguous row blocks)
    for r in range(H):
        dw2d_scr[r * W:(r + 1) * W, :] = x_dw[r]
    dw2d = dw2d_scr[...]                                             # (Lw, C)

    # channel interaction on the globally pooled conv features -> per-channel v gate
    pooled = jnp.sum(dw2d, axis=0, keepdims=True) * (1.0 / Lw)       # (1, C)
    ci_mid = _gelu(mm(pooled, ci1w_ref) + vec("ci1_b"))
    gate = jax.nn.sigmoid(mm(ci_mid, ci2w_ref) + vec("ci2_b"))       # (1, Ch)

    # 1x1 projection of the conv branch: dim -> dim // 2
    x_proj = mm(dw2d, pjw_ref) + vec("pj_b")                         # (Lw, Ch)

    # ---------------- attention branch (all windows batched per head) ----------------
    qkv = mm(x_attn, qkvw_ref) + vec("qkv_b")                        # (Lw, 3Ch)
    q_all = qkv[:, :Ch] * scale
    kT = qkv[:, Ch:2 * Ch].T                                         # one transpose for all heads
    v_all = qkv[:, 2 * Ch:] * gate                                   # channel gating of v
    heads_out = []
    for h in range(heads):
        q_h = q_all[:, h * hd:(h + 1) * hd]                          # (Lw, hd)
        kT_h = kT[h * hd:(h + 1) * hd, :]                            # (hd, Lw)
        v_h = v_all[:, h * hd:(h + 1) * hd]                          # (Lw, hd)
        s = jnp.dot(q_h.astype(bf16), kT_h.astype(bf16),
                    preferred_element_type=f32)                      # (Lw, Lw)
        s = s + bias_ref[h]                    # f32 block-diag rel-pos bias + -1e9 window mask
        s = s - jnp.max(s, axis=-1, keepdims=True)
        p = jnp.exp(s)
        p = p * pl.reciprocal(jnp.sum(p, axis=-1, keepdims=True))    # exact reciprocal
        heads_out.append(jnp.dot(p.astype(bf16), v_h.astype(bf16),
                                 preferred_element_type=f32))
    x_atten = heads_out[0] if heads == 1 else jnp.concatenate(heads_out, axis=-1)   # (Lw, Ch)

    # spatial interaction -> per-token gate for the conv branch, then folded conv_norm BN
    si_mid = _gelu(mm(x_atten, si1w_ref) + vec("si1_b"))
    si = mm(si_mid, si2w_ref) + vec("si2_b")                         # (Lw, 1)
    x_cnn_br = (jax.nn.sigmoid(si) * x_proj) * vec("conv_norm_scale") + vec("conv_norm_shift")

    # attn LayerNorm + concat([x_atten_n, x_cnn_br]) @ proj in one matmul
    x_atten_n = _ln(x_atten, vec("attn_norm_g"), vec("attn_norm_b"))
    xcat = jnp.concatenate([x_atten_n, x_cnn_br], axis=-1)           # (Lw, C)
    attn_out = mm(xcat, prw_ref) + vec("proj_b")                     # (Lw, C)

    # ---------------- residual + MLP tail ----------------
    y = x + attn_out
    z = _ln(y, vec("norm2_g"), vec("norm2_b"))
    hmid = _gelu(mm(z, f1w_ref) + vec("fc1_b"))
    y = y + mm(hmid, f2w_ref) + vec("fc2_b")
    o_ref[0] = y.astype(o_ref.dtype)


# ----------------------------------------------------------------------------- param prep

_VEC_NAMES = [
    "norm1_g", "norm1_b",
    "proj_attn_b", "proj_attn_norm_g", "proj_attn_norm_b",
    "proj_cnn_b", "proj_cnn_norm_g", "proj_cnn_norm_b",
    "dw_b", "dw_bn_scale", "dw_bn_shift",
    "ci1_b", "ci2_b", "pj_b", "conv_norm_scale", "conv_norm_shift",
    "qkv_b", "si1_b", "si2_b",
    "attn_norm_g", "attn_norm_b", "proj_b",
    "norm2_g", "norm2_b", "fc1_b", "fc2_b",
]


def prepare_block_params(p):
    """One-time conversion of raw module params into kernel-ready operands."""
    ws = p["window_size"]
    reso = p["reso"]
    heads = p["num_heads"]
    kk = p["dwconv_kernel_size"]
    H = W = int(3 * reso * 0.5)          # as in the source: H = W = 3 * patches_resolution * 0.5
    # NOTE: the source pads (with a quirky F.pad axis order) when ws does not divide H/W;
    # with the configs used here no padding occurs.
    assert H % ws == 0 and W % ws == 0, (
        "TODO(synk): fused kernel assumes window_size divides H and W (no window padding)")
    L = H * W
    C = int(p["norm1_g"].shape[0])
    Ch = C // 2

    # block-diagonal relative position bias + -1e9 cross-window mask, in IMAGE token order.
    # Built once here (not per call), so nothing O(L^2) is recomputed per forward.
    rr = np.arange(L) // W
    cc = np.arange(L) % W
    win = (rr // ws) * (W // ws) + (cc // ws)
    nidx = (rr % ws) * ws + (cc % ws)
    same = win[:, None] == win[None, :]
    rel = np.asarray(p["rel_pos_bias"], np.float32)                 # (heads, N, N)
    bias = np.where(same[None], rel[:, nidx[:, None], nidx[None, :]], _NEG_INF)

    # pack all small 1-D params into one lane-aligned (1, T) f32 table
    chunks, offs, cur = [], {}, 0
    for name in _VEC_NAMES:
        v = np.asarray(p[name], np.float32).reshape(-1)
        n = v.size
        offs[name] = (cur, n)
        padn = (-n) % 128
        chunks.append(v)
        if padn:
            chunks.append(np.zeros(padn, np.float32))
        cur += n + padn
    pvec = jnp.asarray(np.concatenate(chunks)[None, :])

    bf16 = jnp.bfloat16
    f32 = jnp.float32
    weights = dict(
        pw=jnp.concatenate([p["proj_attn_w"], p["proj_cnn_w"]], axis=1).astype(bf16),
        dw_w=p["dw_w"].astype(f32),
        ci1_w=p["ci1_w"].astype(f32),
        ci2_w=p["ci2_w"].astype(f32),
        pj_w=p["pj_w"].astype(bf16),
        qkv_w=p["qkv_w"].astype(bf16),
        si1_w=p["si1_w"].astype(f32),
        si2_w=p["si2_w"].astype(f32),
        proj_w=p["proj_w"].astype(bf16),
        fc1_w=p["fc1_w"].astype(bf16),
        fc2_w=p["fc2_w"].astype(bf16),
    )
    return dict(H=H, W=W, heads=heads, hd=Ch // heads, kk=kk, ws=ws,
                pvec=pvec, offs=offs, bias=jnp.asarray(bias, jnp.float32),
                weights=weights)


# ----------------------------------------------------------------------------- wrapper

def _bcast_spec(shape):
    nd = len(shape)

    def index_map(b):
        return (0,) * nd

    return pl.BlockSpec(shape, index_map)


def mixing_block(x, bp):
    B, L, C = x.shape
    H, W = bp["H"], bp["W"]
    assert H * W == L, "token count must equal H*W"
    kk = bp["kk"]
    pd = kk // 2
    w = bp["weights"]
    weight_list = [w["pw"], w["dw_w"], w["ci1_w"], w["ci2_w"], w["pj_w"], w["qkv_w"],
                   w["si1_w"], w["si2_w"], w["proj_w"], w["fc1_w"], w["fc2_w"]]

    kern = functools.partial(_mixing_block_kernel, H=H, W=W, heads=bp["heads"],
                             hd=bp["hd"], kk=kk, offs=bp["offs"])
    # grid=(B,) "parallel": v7x megacore splits the batch across its 2 TensorCores;
    # on single-TC v5e/v6e it is a short serial loop over B.
    return pl.pallas_call(
        kern,
        grid=(B,),
        in_specs=([pl.BlockSpec((1, L, C), lambda b: (b, 0, 0)),
                   _bcast_spec(bp["pvec"].shape),
                   _bcast_spec(bp["bias"].shape)]
                  + [_bcast_spec(a.shape) for a in weight_list]),
        out_specs=pl.BlockSpec((1, L, C), lambda b: (b, 0, 0)),
        out_shape=jax.ShapeDtypeStruct((B, L, C), x.dtype),
        scratch_shapes=[pltpu.VMEM((H + 2 * pd, W + 2 * pd, C), jnp.float32),
                        pltpu.VMEM((L, C), jnp.float32)],
        compiler_params=pltpu.CompilerParams(dimension_semantics=("parallel",)),
    )(x, bp["pvec"], bp["bias"], *weight_list)


def basic_layer(x, H, W, prepared_params_list):
    for bp in prepared_params_list:
        x = mixing_block(x, bp)
    # downsample is None in this configuration
    # TODO(synk): the source MixingBlock also returns x.reshape(B, reso, reso, reso, C)
    # .permute(0,4,1,2,3), which is shape-inconsistent (L = (1.5*reso)**2 != reso**3); skipped.
    return (H, W, x, H, W)


# ----------------------------------------------------------------------------- parameter init

def init_params(key, dim=32, num_heads=2, window_size=3, dwconv_kernel_size=3,
                mlp_ratio=4.0, reso=4):
    Ch = dim // 2
    N = window_size * window_size
    hidden = int(dim * mlp_ratio)
    keys = iter(jax.random.split(key, 100))

    def nrm(shape, std=0.02):
        return (std * jax.random.normal(next(keys), shape)).astype(jnp.float32)

    def ln_params(c):
        return 1.0 + nrm((c,)), nrm((c,))

    def bn_fold(c, eps=1e-5):
        gamma = 1.0 + nrm((c,))
        beta = nrm((c,))
        mean = nrm((c,))
        var = 1.0 + jnp.abs(nrm((c,)))
        s = gamma * jax.lax.rsqrt(var + eps)
        return s, beta - mean * s

    p = dict(num_heads=num_heads, window_size=window_size,
             dwconv_kernel_size=dwconv_kernel_size, reso=reso)

    p["norm1_g"], p["norm1_b"] = ln_params(dim)
    p["norm2_g"], p["norm2_b"] = ln_params(dim)

    p["proj_attn_w"], p["proj_attn_b"] = nrm((dim, Ch)), nrm((Ch,))
    p["proj_attn_norm_g"], p["proj_attn_norm_b"] = ln_params(Ch)
    p["proj_cnn_w"], p["proj_cnn_b"] = nrm((dim, dim)), nrm((dim,))
    p["proj_cnn_norm_g"], p["proj_cnn_norm_b"] = ln_params(dim)

    # depthwise conv (C,1,k,k) -> (k,k,C) + BN(dim) folded into post-conv affine
    p["dw_w"] = nrm((dwconv_kernel_size, dwconv_kernel_size, dim))
    p["dw_b"] = nrm((dim,))
    p["dw_bn_scale"], p["dw_bn_shift"] = bn_fold(dim)

    # channel interaction: conv1x1(dim->dim//8)+BN+GELU+conv1x1(dim//8->dim//2); BN folded into conv1
    c8 = dim // 8
    w1, b1 = nrm((dim, c8)), nrm((c8,))
    s1, sh1 = bn_fold(c8)
    p["ci1_w"], p["ci1_b"] = w1 * s1[None, :], b1 * s1 + sh1
    p["ci2_w"], p["ci2_b"] = nrm((c8, Ch)), nrm((Ch,))

    # projection conv1x1(dim -> dim//2), conv_norm BN(dim//2)
    p["pj_w"], p["pj_b"] = nrm((dim, Ch)), nrm((Ch,))
    p["conv_norm_scale"], p["conv_norm_shift"] = bn_fold(Ch)

    p["qkv_w"], p["qkv_b"] = nrm((Ch, 3 * Ch)), nrm((3 * Ch,))

    # spatial interaction: conv1x1(Ch->dim//16)+BN+GELU+conv1x1(dim//16->1); BN folded into conv1
    c16 = dim // 16
    w1, b1 = nrm((Ch, c16)), nrm((c16,))
    s1, sh1 = bn_fold(c16)
    p["si1_w"], p["si1_b"] = w1 * s1[None, :], b1 * s1 + sh1
    p["si2_w"], p["si2_b"] = nrm((c16, 1)), nrm((1,))

    p["attn_norm_g"], p["attn_norm_b"] = ln_params(Ch)
    p["proj_w"], p["proj_b"] = nrm((dim, dim)), nrm((dim,))

    p["fc1_w"], p["fc1_b"] = nrm((dim, hidden)), nrm((hidden,))
    p["fc2_w"], p["fc2_b"] = nrm((hidden, dim)), nrm((dim,))

    # relative position bias (heads, N, N)
    table = nrm(((2 * window_size - 1) ** 2, num_heads))
    coords = np.stack(np.meshgrid(np.arange(window_size), np.arange(window_size), indexing="ij"))
    cf = coords.reshape(2, -1)
    rel = (cf[:, :, None] - cf[:, None, :]).transpose(1, 2, 0)
    rel[:, :, 0] += window_size - 1
    rel[:, :, 1] += window_size - 1
    rel[:, :, 0] *= 2 * window_size - 1
    idx = rel.sum(-1).reshape(-1)
    bias = table[idx].reshape(N, N, num_heads)
    p["rel_pos_bias"] = jnp.transpose(bias, (2, 0, 1)).astype(jnp.float32)
    return p


# ----------------------------------------------------------------------------- main

if __name__ == "__main__":
    dim, num_heads, window_size, dwconv_k = 32, 2, 3, 3
    mlp_ratio, reso, depth = 4.0, 4, 1
    H = W = int(3 * reso * 0.5)           # = 6, matching MixingBlock's internal H/W
    B = 2
    L = H * W                             # 36 tokens

    key = jax.random.PRNGKey(0)
    kx, kp = jax.random.split(key)
    x = jax.random.normal(kx, (B, L, dim), dtype=jnp.float32)
    raw_params = [init_params(jax.random.fold_in(kp, i), dim=dim, num_heads=num_heads,
                              window_size=window_size, dwconv_kernel_size=dwconv_k,
                              mlp_ratio=mlp_ratio, reso=reso)
                  for i in range(depth)]
    prepared = [prepare_block_params(p) for p in raw_params]

    fwd = jax.jit(lambda inp: basic_layer(inp, H, W, prepared)[2])
    y = jax.block_until_ready(fwd(x))
    assert y.shape == (B, L, dim)
    assert bool(jnp.all(jnp.isfinite(y)))
    print("KERNEL_OK")
</pallas_src>

<mosaic_0001>
module attributes {stable_mosaic.version = 11 : i64} {
  func.func @_mixing_block_kernel(%arg0: i32, %arg1: memref<1x36x32xf32, #tpu.memory_space<vmem>>, %arg2: memref<1x3328xf32, #tpu.memory_space<vmem>>, %arg3: memref<2x36x36xf32, #tpu.memory_space<vmem>>, %arg4: memref<32x48xbf16, #tpu.memory_space<vmem>>, %arg5: memref<3x3x32xf32, #tpu.memory_space<vmem>>, %arg6: memref<32x4xf32, #tpu.memory_space<vmem>>, %arg7: memref<4x16xf32, #tpu.memory_space<vmem>>, %arg8: memref<32x16xbf16, #tpu.memory_space<vmem>>, %arg9: memref<16x48xbf16, #tpu.memory_space<vmem>>, %arg10: memref<16x2xf32, #tpu.memory_space<vmem>>, %arg11: memref<2x1xf32, #tpu.memory_space<vmem>>, %arg12: memref<32x32xbf16, #tpu.memory_space<vmem>>, %arg13: memref<32x128xbf16, #tpu.memory_space<vmem>>, %arg14: memref<128x32xbf16, #tpu.memory_space<vmem>>, %arg15: memref<1x36x32xf32, #tpu.memory_space<vmem>>, %arg16: memref<8x8x32xf32, #tpu.memory_space<vmem>>, %arg17: memref<36x32xf32, #tpu.memory_space<vmem>>) attributes {dimension_semantics = [#tpu.dimension_semantics<parallel>], iteration_bounds = array<i64: 2>, scalar_prefetch = 0 : i64, scratch_operands = 2 : i64, tpu.core_type = #tpu.core_type<tc>, window_params = [{transform_indices = @transform_0, window_bounds = array<i64: 1, 36, 32>}, {pipeline_mode = #tpu.pipeline_mode<synchronous>, transform_indices = @transform_1, window_bounds = array<i64: 1, 3328>}, {pipeline_mode = #tpu.pipeline_mode<synchronous>, transform_indices = @transform_2, window_bounds = array<i64: 2, 36, 36>}, {pipeline_mode = #tpu.pipeline_mode<synchronous>, transform_indices = @transform_3, window_bounds = array<i64: 32, 48>}, {pipeline_mode = #tpu.pipeline_mode<synchronous>, transform_indices = @transform_4, window_bounds = array<i64: 3, 3, 32>}, {pipeline_mode = #tpu.pipeline_mode<synchronous>, transform_indices = @transform_5, window_bounds = array<i64: 32, 4>}, {pipeline_mode = #tpu.pipeline_mode<synchronous>, transform_indices = @transform_6, window_bounds = array<i64: 4, 16>}, {pipeline_mode = #tpu.pipeline_mode<synchronous>, transform_indices = @transform_7, window_bounds = array<i64: 32, 16>}, {pipeline_mode = #tpu.pipeline_mode<synchronous>, transform_indices = @transform_8, window_bounds = array<i64: 16, 48>}, {pipeline_mode = #tpu.pipeline_mode<synchronous>, transform_indices = @transform_9, window_bounds = array<i64: 16, 2>}, {pipeline_mode = #tpu.pipeline_mode<synchronous>, transform_indices = @transform_10, window_bounds = array<i64: 2, 1>}, {pipeline_mode = #tpu.pipeline_mode<synchronous>, transform_indices = @transform_11, window_bounds = array<i64: 32, 32>}, {pipeline_mode = #tpu.pipeline_mode<synchronous>, transform_indices = @transform_12, window_bounds = array<i64: 32, 128>}, {pipeline_mode = #tpu.pipeline_mode<synchronous>, transform_indices = @transform_13, window_bounds = array<i64: 128, 32>}, {transform_indices = @transform_14, window_bounds = array<i64: 1, 36, 32>}]} {
    %c0 = arith.constant 0 : index
    %c0_0 = arith.constant 0 : index
    %c0_1 = arith.constant 0 : index
    %0 = vector.load %arg1[%c0, %c0_0, %c0_1] : memref<1x36x32xf32, #tpu.memory_space<vmem>>, vector<1x36x32xf32>
    %1 = vector.shape_cast %0 : vector<1x36x32xf32> to vector<36x32xf32>
    %c0_2 = arith.constant 0 : index
    %c0_3 = arith.constant 0 : index
    %2 = vector.load %arg2[%c0_2, %c0_3] : memref<1x3328xf32, #tpu.memory_space<vmem>>, vector<1x32xf32>
    %c0_4 = arith.constant 0 : index
    %c128 = arith.constant 128 : index
    %3 = vector.load %arg2[%c0_4, %c128] : memref<1x3328xf32, #tpu.memory_space<vmem>>, vector<1x32xf32>
    %cst = arith.constant dense<0.000000e+00> : vector<36xf32>
    %4 = vector.multi_reduction <add>, %1, %cst [1] : vector<36x32xf32> to vector<36xf32>
    %5 = vector.shape_cast %4 : vector<36xf32> to vector<36x1xf32>
    %cst_5 = arith.constant 3.200000e+01 : f32
    %6 = vector.broadcast %cst_5 : f32 to vector<36x1xf32>
    %7 = arith.divf %5, %6 : vector<36x1xf32>
    %8 = vector.broadcast %7 : vector<36x1xf32> to vector<36x32xf32>
    %9 = arith.subf %1, %8 : vector<36x32xf32>
    %10 = arith.mulf %9, %9 : vector<36x32xf32>
    %cst_6 = arith.constant dense<0.000000e+00> : vector<36xf32>
    %11 = vector.multi_reduction <add>, %10, %cst_6 [1] : vector<36x32xf32> to vector<36xf32>
    %12 = vector.shape_cast %11 : vector<36xf32> to vector<36x1xf32>
    %cst_7 = arith.constant 3.200000e+01 : f32
    %13 = vector.broadcast %cst_7 : f32 to vector<36x1xf32>
    %14 = arith.divf %12, %13 : vector<36x1xf32>
    %15 = vector.broadcast %7 : vector<36x1xf32> to vector<36x32xf32>
    %16 = arith.subf %1, %15 : vector<36x32xf32>
    %cst_8 = arith.constant 9.99999974E-6 : f32
    %17 = vector.broadcast %cst_8 : f32 to vector<36x1xf32>
    %18 = arith.addf %14, %17 : vector<36x1xf32>
    %19 = math.rsqrt %18 : vector<36x1xf32>
    %20 = vector.broadcast %19 : vector<36x1xf32> to vector<36x32xf32>
    %21 = arith.mulf %16, %20 : vector<36x32xf32>
    %22 = vector.broadcast %2 : vector<1x32xf32> to vector<36x32xf32>
    %23 = arith.mulf %21, %22 : vector<36x32xf32>
    %24 = vector.broadcast %3 : vector<1x32xf32> to vector<36x32xf32>
    %25 = arith.addf %23, %24 : vector<36x32xf32>
    %c0_9 = arith.constant 0 : index
    %c0_10 = arith.constant 0 : index
    %26 = vector.load %arg4[%c0_9, %c0_10] : memref<32x48xbf16, #tpu.memory_space<vmem>>, vector<32x48xbf16>
    %27 = arith.truncf %25 : vector<36x32xf32> to vector<36x32xbf16>
    %cst_11 = arith.constant dense<0.000000e+00> : vector<36x48xf32>
    %28 = tpu.matmul %27, %26, %cst_11 {dimension_numbers = #tpu.dot_dimension_numbers<[1], [0], [0], [1], [0, 0, 1, 1], [], []>} : vector<36x32xbf16>, vector<32x48xbf16>, vector<36x48xf32> -> vector<36x48xf32>
    %29 = vector.extract_strided_slice %28 {offsets = [0, 0], sizes = [36, 16], strides = [1, 1]} : vector<36x48xf32> to vector<36x16xf32>
    %c0_12 = arith.constant 0 : index
    %c256 = arith.constant 256 : index
    %30 = vector.load %arg2[%c0_12, %c256] : memref<1x3328xf32, #tpu.memory_space<vmem>>, vector<1x16xf32>
    %31 = vector.broadcast %30 : vector<1x16xf32> to vector<36x16xf32>
    %32 = arith.addf %29, %31 : vector<36x16xf32>
    %c0_13 = arith.constant 0 : index
    %c384 = arith.constant 384 : index
    %33 = vector.load %arg2[%c0_13, %c384] : memref<1x3328xf32, #tpu.memory_space<vmem>>, vector<1x16xf32>
    %c0_14 = arith.constant 0 : index
    %c512 = arith.constant 512 : index
    %34 = vector.load %arg2[%c0_14, %c512] : memref<1x3328xf32, #tpu.memory_space<vmem>>, vector<1x16xf32>
    %cst_15 = arith.constant dense<0.000000e+00> : vector<36xf32>
    %35 = vector.multi_reduction <add>, %32, %cst_15 [1] : vector<36x16xf32> to vector<36xf32>
    %36 = vector.shape_cast %35 : vector<36xf32> to vector<36x1xf32>
    %cst_16 = arith.constant 1.600000e+01 : f32
    %37 = vector.broadcast %cst_16 : f32 to vector<36x1xf32>
    %38 = arith.divf %36, %37 : vector<36x1xf32>
    %39 = vector.broadcast %38 : vector<36x1xf32> to vector<36x16xf32>
    %40 = arith.subf %32, %39 : vector<36x16xf32>
    %41 = arith.mulf %40, %40 : vector<36x16xf32>
    %cst_17 = arith.constant dense<0.000000e+00> : vector<36xf32>
    %42 = vector.multi_reduction <add>, %41, %cst_17 [1] : vector<36x16xf32> to vector<36xf32>
    %43 = vector.shape_cast %42 : vector<36xf32> to vector<36x1xf32>
    %cst_18 = arith.constant 1.600000e+01 : f32
    %44 = vector.broadcast %cst_18 : f32 to vector<36x1xf32>
    %45 = arith.divf %43, %44 : vector<36x1xf32>
    %46 = vector.broadcast %38 : vector<36x1xf32> to vector<36x16xf32>
    %47 = arith.subf %32, %46 : vector<36x16xf32>
    %cst_19 = arith.constant 9.99999974E-6 : f32
    %48 = vector.broadcast %cst_19 : f32 to vector<36x1xf32>
    %49 = arith.addf %45, %48 : vector<36x1xf32>
    %50 = math.rsqrt %49 : vector<36x1xf32>
    %51 = vector.broadcast %50 : vector<36x1xf32> to vector<36x16xf32>
    %52 = arith.mulf %47, %51 : vector<36x16xf32>
    %53 = vector.broadcast %33 : vector<1x16xf32> to vector<36x16xf32>
    %54 = arith.mulf %52, %53 : vector<36x16xf32>
    %55 = vector.broadcast %34 : vector<1x16xf32> to vector<36x16xf32>
    %56 = arith.addf %54, %55 : vector<36x16xf32>
    %57 = vector.extract_strided_slice %28 {offsets = [0, 16], sizes = [36, 32], strides = [1, 1]} : vector<36x48xf32> to vector<36x32xf32>
    %c0_20 = arith.constant 0 : index
    %c640 = arith.constant 640 : index
    %58 = vector.load %arg2[%c0_20, %c640] : memref<1x3328xf32, #tpu.memory_space<vmem>>, vector<1x32xf32>
    %59 = vector.broadcast %58 : vector<1x32xf32> to vector<36x32xf32>
    %60 = arith.addf %57, %59 : vector<36x32xf32>
    %c0_21 = arith.constant 0 : index
    %c768 = arith.constant 768 : index
    %61 = vector.load %arg2[%c0_21, %c768] : memref<1x3328xf32, #tpu.memory_space<vmem>>, vector<1x32xf32>
    %c0_22 = arith.constant 0 : index
    %c896 = arith.constant 896 : index
    %62 = vector.load %arg2[%c0_22, %c896] : memref<1x3328xf32, #tpu.memory_space<vmem>>, vector<1x32xf32>
    %cst_23 = arith.constant dense<0.000000e+00> : vector<36xf32>
    %63 = vector.multi_reduction <add>, %60, %cst_23 [1] : vector<36x32xf32> to vector<36xf32>
    %64 = vector.shape_cast %63 : vector<36xf32> to vector<36x1xf32>
    %cst_24 = arith.constant 3.200000e+01 : f32
    %65 = vector.broadcast %cst_24 : f32 to vector<36x1xf32>
    %66 = arith.divf %64, %65 : vector<36x1xf32>
    %67 = vector.broadcast %66 : vector<36x1xf32> to vector<36x32xf32>
    %68 = arith.subf %60, %67 : vector<36x32xf32>
    %69 = arith.mulf %68, %68 : vector<36x32xf32>
    %cst_25 = arith.constant dense<0.000000e+00> : vector<36xf32>
    %70 = vector.multi_reduction <add>, %69, %cst_25 [1] : vector<36x32xf32> to vector<36xf32>
    %71 = vector.shape_cast %70 : vector<36xf32> to vector<36x1xf32>
    %cst_26 = arith.constant 3.200000e+01 : f32
    %72 = vector.broadcast %cst_26 : f32 to vector<36x1xf32>
    %73 = arith.divf %71, %72 : vector<36x1xf32>
    %74 = vector.broadcast %66 : vector<36x1xf32> to vector<36x32xf32>
    %75 = arith.subf %60, %74 : vector<36x32xf32>
    %cst_27 = arith.constant 9.99999974E-6 : f32
    %76 = vector.broadcast %cst_27 : f32 to vector<36x1xf32>
    %77 = arith.addf %73, %76 : vector<36x1xf32>
    %78 = math.rsqrt %77 : vector<36x1xf32>
    %79 = vector.broadcast %78 : vector<36x1xf32> to vector<36x32xf32>
    %80 = arith.mulf %75, %79 : vector<36x32xf32>
    %81 = vector.broadcast %61 : vector<1x32xf32> to vector<36x32xf32>
    %82 = arith.mulf %80, %81 : vector<36x32xf32>
    %83 = vector.broadcast %62 : vector<1x32xf32> to vector<36x32xf32>
    %84 = arith.addf %82, %83 : vector<36x32xf32>
    %cst_28 = arith.constant 0.000000e+00 : f32
    %85 = vector.broadcast %cst_28 : f32 to vector<8x8x32xf32>
    %c0_29 = arith.constant 0 : index
    %c0_30 = arith.constant 0 : index
    %c0_31 = arith.constant 0 : index
    %86 = vector.load %arg16[%c0_29, %c0_30, %c0_31] : memref<8x8x32xf32, #tpu.memory_space<vmem>>, vector<8x8x32xf32>
    tpu.vector_store %arg16[%c0_29, %c0_30, %c0_31], %85 {strides = array<i32>} : memref<8x8x32xf32, #tpu.memory_space<vmem>>, vector<8x8x32xf32>,
    %87 = vector.extract_strided_slice %84 {offsets = [0, 0], sizes = [6, 32], strides = [1, 1]} : vector<36x32xf32> to vector<6x32xf32>
    %c1 = arith.constant 1 : index
    %c1_32 = arith.constant 1 : index
    %c0_33 = arith.constant 0 : index
    %88 = vector.load %arg16[%c1, %c1_32, %c0_33] : memref<8x8x32xf32, #tpu.memory_space<vmem>>, vector<1x6x32xf32>
    %89 = vector.shape_cast %88 : vector<1x6x32xf32> to vector<6x32xf32>
    %90 = vector.shape_cast %87 : vector<6x32xf32> to vector<1x6x32xf32>
    tpu.vector_store %arg16[%c1, %c1_32, %c0_33], %90 {strides = array<i32>} : memref<8x8x32xf32, #tpu.memory_space<vmem>>, vector<1x6x32xf32>,
    %91 = vector.extract_strided_slice %84 {offsets = [6, 0], sizes = [6, 32], strides = [1, 1]} : vector<36x32xf32> to vector<6x32xf32>
    %c2 = arith.constant 2 : index
    %c1_34 = arith.constant 1 : index
    %c0_35 = arith.constant 0 : index
    %92 = vector.load %arg16[%c2, %c1_34, %c0_35] : memref<8x8x32xf32, #tpu.memory_space<vmem>>, vector<1x6x32xf32>
    %93 = vector.shape_cast %92 : vector<1x6x32xf32> to vector<6x32xf32>
    %94 = vector.shape_cast %91 : vector<6x32xf32> to vector<1x6x32xf32>
    tpu.vector_store %arg16[%c2, %c1_34, %c0_35], %94 {strides = array<i32>} : memref<8x8x32xf32, #tpu.memory_space<vmem>>, vector<1x6x32xf32>,
    %95 = vector.extract_strided_slice %84 {offsets = [12, 0], sizes = [6, 32], strides = [1, 1]} : vector<36x32xf32> to vector<6x32xf32>
    %c3 = arith.constant 3 : index
    %c1_36 = arith.constant 1 : index
    %c0_37 = arith.constant 0 : index
    %96 = vector.load %arg16[%c3, %c1_36, %c0_37] : memref<8x8x32xf32, #tpu.memory_space<vmem>>, vector<1x6x32xf32>
    %97 = vector.shape_cast %96 : vector<1x6x32xf32> to vector<6x32xf32>
    %98 = vector.shape_cast %95 : vector<6x32xf32> to vector<1x6x32xf32>
    tpu.vector_store %arg16[%c3, %c1_36, %c0_37], %98 {strides = array<i32>} : memref<8x8x32xf32, #tpu.memory_space<vmem>>, vector<1x6x32xf32>,
    %99 = vector.extract_strided_slice %84 {offsets = [18, 0], sizes = [6, 32], strides = [1, 1]} : vector<36x32xf32> to vector<6x32xf32>
    %c4 = arith.constant 4 : index
    %c1_38 = arith.constant 1 : index
    %c0_39 = arith.constant 0 : index
    %100 = vector.load %arg16[%c4, %c1_38, %c0_39] : memref<8x8x32xf32, #tpu.memory_space<vmem>>, vector<1x6x32xf32>
    %101 = vector.shape_cast %100 : vector<1x6x32xf32> to vector<6x32xf32>
    %102 = vector.shape_cast %99 : vector<6x32xf32> to vector<1x6x32xf32>
    tpu.vector_store %arg16[%c4, %c1_38, %c0_39], %102 {strides = array<i32>} : memref<8x8x32xf32, #tpu.memory_space<vmem>>, vector<1x6x32xf32>,
    %103 = vector.extract_strided_slice %84 {offsets = [24, 0], sizes = [6, 32], strides = [1, 1]} : vector<36x32xf32> to vector<6x32xf32>
    %c5 = arith.constant 5 : index
    %c1_40 = arith.constant 1 : index
    %c0_41 = arith.constant 0 : index
    %104 = vector.load %arg16[%c5, %c1_40, %c0_41] : memref<8x8x32xf32, #tpu.memory_space<vmem>>, vector<1x6x32xf32>
    %105 = vector.shape_cast %104 : vector<1x6x32xf32> to vector<6x32xf32>
    %106 = vector.shape_cast %103 : vector<6x32xf32> to vector<1x6x32xf32>
    tpu.vector_store %arg16[%c5, %c1_40, %c0_41], %106 {strides = array<i32>} : memref<8x8x32xf32, #tpu.memory_space<vmem>>, vector<1x6x32xf32>,
    %107 = vector.extract_strided_slice %84 {offsets = [30, 0], sizes = [6, 32], strides = [1, 1]} : vector<36x32xf32> to vector<6x32xf32>
    %c6 = arith.constant 6 : index
    %c1_42 = arith.constant 1 : index
    %c0_43 = arith.constant 0 : index
    %108 = vector.load %arg16[%c6, %c1_42, %c0_43] : memref<8x8x32xf32, #tpu.memory_space<vmem>>, vector<1x6x32xf32>
    %109 = vector.shape_cast %108 : vector<1x6x32xf32> to vector<6x32xf32>
    %110 = vector.shape_cast %107 : vector<6x32xf32> to vector<1x6x32xf32>
    tpu.vector_store %arg16[%c6, %c1_42, %c0_43], %110 {strides = array<i32>} : memref<8x8x32xf32, #tpu.memory_space<vmem>>, vector<1x6x32xf32>,
    %c0_44 = arith.constant 0 : index
    %c0_45 = arith.constant 0 : index
    %c0_46 = arith.constant 0 : index
    %111 = vector.load %arg16[%c0_44, %c0_45, %c0_46] : memref<8x8x32xf32, #tpu.memory_space<vmem>>, vector<8x8x32xf32>
    %c0_47 = arith.constant 0 : index
    %c0_48 = arith.constant 0 : index
    %c0_49 = arith.constant 0 : index
    %112 = vector.load %arg5[%c0_47, %c0_48, %c0_49] : memref<3x3x32xf32, #tpu.memory_space<vmem>>, vector<3x3x32xf32>
    %cst_50 = arith.constant 0.000000e+00 : f32
    %113 = vector.broadcast %cst_50 : f32 to vector<6x6x32xf32>
    %c0_51 = arith.constant 0 : index
    %c1024 = arith.constant 1024 : index
    %114 = vector.load %arg2[%c0_51, %c1024] : memref<1x3328xf32, #tpu.memory_space<vmem>>, vector<1x32xf32>
    %115 = vector.shape_cast %114 : vector<1x32xf32> to vector<1x1x32xf32>
    %116 = vector.broadcast %115 : vector<1x1x32xf32> to vector<6x6x32xf32>
    %117 = arith.addf %113, %116 : vector<6x6x32xf32>
    %118 = vector.extract_strided_slice %111 {offsets = [0, 0, 0], sizes = [6, 6, 32], strides = [1, 1, 1]} : vector<8x8x32xf32> to vector<6x6x32xf32>
    %119 = vector.extract_strided_slice %112 {offsets = [0, 0, 0], sizes = [1, 1, 32], strides = [1, 1, 1]} : vector<3x3x32xf32> to vector<1x1x32xf32>
    %120 = vector.shape_cast %119 : vector<1x1x32xf32> to vector<1x32xf32>
    %121 = vector.shape_cast %120 : vector<1x32xf32> to vector<1x1x32xf32>
    %122 = vector.broadcast %121 : vector<1x1x32xf32> to vector<6x6x32xf32>
    %123 = arith.mulf %118, %122 : vector<6x6x32xf32>
    %124 = arith.addf %117, %123 : vector<6x6x32xf32>
    %125 = vector.extract_strided_slice %111 {offsets = [0, 1, 0], sizes = [6, 6, 32], strides = [1, 1, 1]} : vector<8x8x32xf32> to vector<6x6x32xf32>
    %126 = vector.extract_strided_slice %112 {offsets = [0, 1, 0], sizes = [1, 1, 32], strides = [1, 1, 1]} : vector<3x3x32xf32> to vector<1x1x32xf32>
    %127 = vector.shape_cast %126 : vector<1x1x32xf32> to vector<1x32xf32>
    %128 = vector.shape_cast %127 : vector<1x32xf32> to vector<1x1x32xf32>
    %129 = vector.broadcast %128 : vector<1x1x32xf32> to vector<6x6x32xf32>
    %130 = arith.mulf %125, %129 : vector<6x6x32xf32>
    %131 = arith.addf %124, %130 : vector<6x6x32xf32>
    %132 = vector.extract_strided_slice %111 {offsets = [0, 2, 0], sizes = [6, 6, 32], strides = [1, 1, 1]} : vector<8x8x32xf32> to vector<6x6x32xf32>
    %133 = vector.extract_strided_slice %112 {offsets = [0, 2, 0], sizes = [1, 1, 32], strides = [1, 1, 1]} : vector<3x3x32xf32> to vector<1x1x32xf32>
    %134 = vector.shape_cast %133 : vector<1x1x32xf32> to vector<1x32xf32>
    %135 = vector.shape_cast %134 : vector<1x32xf32> to vector<1x1x32xf32>
    %136 = vector.broadcast %135 : vector<1x1x32xf32> to vector<6x6x32xf32>
    %137 = arith.mulf %132, %136 : vector<6x6x32xf32>
    %138 = arith.addf %131, %137 : vector<6x6x32xf32>
    %139 = vector.extract_strided_slice %111 {offsets = [1, 0, 0], sizes = [6, 6, 32], strides = [1, 1, 1]} : vector<8x8x32xf32> to vector<6x6x32xf32>
    %140 = vector.extract_strided_slice %112 {offsets = [1, 0, 0], sizes = [1, 1, 32], strides = [1, 1, 1]} : vector<3x3x32xf32> to vector<1x1x32xf32>
    %141 = vector.shape_cast %140 : vector<1x1x32xf32> to vector<1x32xf32>
    %142 = vector.shape_cast %141 : vector<1x32xf32> to vector<1x1x32xf32>
    %143 = vector.broadcast %142 : vector<1x1x32xf32> to vector<6x6x32xf32>
    %144 = arith.mulf %139, %143 : vector<6x6x32xf32>
    %145 = arith.addf %138, %144 : vector<6x6x32xf32>
    %146 = vector.extract_strided_slice %111 {offsets = [1, 1, 0], sizes = [6, 6, 32], strides = [1, 1, 1]} : vector<8x8x32xf32> to vector<6x6x32xf32>
    %147 = vector.extract_strided_slice %112 {offsets = [1, 1, 0], sizes = [1, 1, 32], strides = [1, 1, 1]} : vector<3x3x32xf32> to vector<1x1x32xf32>
    %148 = vector.shape_cast %147 : vector<1x1x32xf32> to vector<1x32xf32>
    %149 = vector.shape_cast %148 : vector<1x32xf32> to vector<1x1x32xf32>
    %150 = vector.broadcast %149 : vector<1x1x32xf32> to vector<6x6x32xf32>
    %151 = arith.mulf %146, %150 : vector<6x6x32xf32>
    %152 = arith.addf %145, %151 : vector<6x6x32xf32>
    %153 = vector.extract_strided_slice %111 {offsets = [1, 2, 0], sizes = [6, 6, 32], strides = [1, 1, 1]} : vector<8x8x32xf32> to vector<6x6x32xf32>
    %154 = vector.extract_strided_slice %112 {offsets = [1, 2, 0], sizes = [1, 1, 32], strides = [1, 1, 1]} : vector<3x3x32xf32> to vector<1x1x32xf32>
    %155 = vector.shape_cast %154 : vector<1x1x32xf32> to vector<1x32xf32>
    %156 = vector.shape_cast %155 : vector<1x32xf32> to vector<1x1x32xf32>
    %157 = vector.broadcast %156 : vector<1x1x32xf32> to vector<6x6x32xf32>
    %158 = arith.mulf %153, %157 : vector<6x6x32xf32>
    %159 = arith.addf %152, %158 : vector<6x6x32xf32>
    %160 = vector.extract_strided_slice %111 {offsets = [2, 0, 0], sizes = [6, 6, 32], strides = [1, 1, 1]} : vector<8x8x32xf32> to vector<6x6x32xf32>
    %161 = vector.extract_strided_slice %112 {offsets = [2, 0, 0], sizes = [1, 1, 32], strides = [1, 1, 1]} : vector<3x3x32xf32> to vector<1x1x32xf32>
    %162 = vector.shape_cast %161 : vector<1x1x32xf32> to vector<1x32xf32>
    %163 = vector.shape_cast %162 : vector<1x32xf32> to vector<1x1x32xf32>
    %164 = vector.broadcast %163 : vector<1x1x32xf32> to vector<6x6x32xf32>
    %165 = arith.mulf %160, %164 : vector<6x6x32xf32>
    %166 = arith.addf %159, %165 : vector<6x6x32xf32>
    %167 = vector.extract_strided_slice %111 {offsets = [2, 1, 0], sizes = [6, 6, 32], strides = [1, 1, 1]} : vector<8x8x32xf32> to vector<6x6x32xf32>
    %168 = vector.extract_strided_slice %112 {offsets = [2, 1, 0], sizes = [1, 1, 32], strides = [1, 1, 1]} : vector<3x3x32xf32> to vector<1x1x32xf32>
    %169 = vector.shape_cast %168 : vector<1x1x32xf32> to vector<1x32xf32>
    %170 = vector.shape_cast %169 : vector<1x32xf32> to vector<1x1x32xf32>
    %171 = vector.broadcast %170 : vector<1x1x32xf32> to vector<6x6x32xf32>
    %172 = arith.mulf %167, %171 : vector<6x6x32xf32>
    %173 = arith.addf %166, %172 : vector<6x6x32xf32>
    %174 = vector.extract_strided_slice %111 {offsets = [2, 2, 0], sizes = [6, 6, 32], strides = [1, 1, 1]} : vector<8x8x32xf32> to vector<6x6x32xf32>
    %175 = vector.extract_strided_slice %112 {offsets = [2, 2, 0], sizes = [1, 1, 32], strides = [1, 1, 1]} : vector<3x3x32xf32> to vector<1x1x32xf32>
    %176 = vector.shape_cast %175 : vector<1x1x32xf32> to vector<1x32xf32>
    %177 = vector.shape_cast %176 : vector<1x32xf32> to vector<1x1x32xf32>
    %178 = vector.broadcast %177 : vector<1x1x32xf32> to vector<6x6x32xf32>
    %179 = arith.mulf %174, %178 : vector<6x6x32xf32>
    %180 = arith.addf %173, %179 : vector<6x6x32xf32>
    %c0_52 = arith.constant 0 : index
    %c1152 = arith.constant 1152 : index
    %181 = vector.load %arg2[%c0_52, %c1152] : memref<1x3328xf32, #tpu.memory_space<vmem>>, vector<1x32xf32>
    %182 = vector.shape_cast %181 : vector<1x32xf32> to vector<1x1x32xf32>
    %183 = vector.broadcast %182 : vector<1x1x32xf32> to vector<6x6x32xf32>
    %184 = arith.mulf %180, %183 : vector<6x6x32xf32>
    %c0_53 = arith.constant 0 : index
    %c1280 = arith.constant 1280 : index
    %185 = vector.load %arg2[%c0_53, %c1280] : memref<1x3328xf32, #tpu.memory_space<vmem>>, vector<1x32xf32>
    %186 = vector.shape_cast %185 : vector<1x32xf32> to vector<1x1x32xf32>
    %187 = vector.broadcast %186 : vector<1x1x32xf32> to vector<6x6x32xf32>
    %188 = arith.addf %184, %187 : vector<6x6x32xf32>
    %cst_54 = arith.constant 5.000000e-01 : f32
    %189 = vector.broadcast %cst_54 : f32 to vector<6x6x32xf32>
    %190 = arith.mulf %189, %188 : vector<6x6x32xf32>
    %cst_55 = arith.constant 4.471500e-02 : f32
    %191 = vector.broadcast %cst_55 : f32 to vector<6x6x32xf32>
    %192 = arith.mulf %191, %188 : vector<6x6x32xf32>
    %193 = arith.mulf %192, %188 : vector<6x6x32xf32>
    %194 = arith.mulf %193, %188 : vector<6x6x32xf32>
    %195 = arith.addf %188, %194 : vector<6x6x32xf32>
    %cst_56 = arith.constant 0.797884583 : f32
    %196 = vector.broadcast %cst_56 : f32 to vector<6x6x32xf32>
    %197 = arith.mulf %196, %195 : vector<6x6x32xf32>
    %198 = math.tanh %197 : vector<6x6x32xf32>
    %cst_57 = arith.constant 1.000000e+00 : f32
    %199 = vector.broadcast %cst_57 : f32 to vector<6x6x32xf32>
    %200 = arith.addf %199, %198 : vector<6x6x32xf32>
    %201 = arith.mulf %190, %200 : vector<6x6x32xf32>
    %202 = vector.extract_strided_slice %201 {offsets = [0, 0, 0], sizes = [1, 6, 32], strides = [1, 1, 1]} : vector<6x6x32xf32> to vector<1x6x32xf32>
    %203 = vector.shape_cast %202 : vector<1x6x32xf32> to vector<6x32xf32>
    %c0_58 = arith.constant 0 : index
    %c0_59 = arith.constant 0 : index
    %204 = vector.load %arg17[%c0_58, %c0_59] : memref<36x32xf32, #tpu.memory_space<vmem>>, vector<6x32xf32>
    tpu.vector_store %arg17[%c0_58, %c0_59], %203 {strides = array<i32>} : memref<36x32xf32, #tpu.memory_space<vmem>>, vector<6x32xf32>,
    %205 = vector.extract_strided_slice %201 {offsets = [1, 0, 0], sizes = [1, 6, 32], strides = [1, 1, 1]} : vector<6x6x32xf32> to vector<1x6x32xf32>
    %206 = vector.shape_cast %205 : vector<1x6x32xf32> to vector<6x32xf32>
    %c6_60 = arith.constant 6 : index
    %c0_61 = arith.constant 0 : index
    %207 = vector.load %arg17[%c6_60, %c0_61] : memref<36x32xf32, #tpu.memory_space<vmem>>, vector<6x32xf32>
    tpu.vector_store %arg17[%c6_60, %c0_61], %206 {strides = array<i32>} : memref<36x32xf32, #tpu.memory_space<vmem>>, vector<6x32xf32>,
    %208 = vector.extract_strided_slice %201 {offsets = [2, 0, 0], sizes = [1, 6, 32], strides = [1, 1, 1]} : vector<6x6x32xf32> to vector<1x6x32xf32>
    %209 = vector.shape_cast %208 : vector<1x6x32xf32> to vector<6x32xf32>
    %c12 = arith.constant 12 : index
    %c0_62 = arith.constant 0 : index
    %210 = vector.load %arg17[%c12, %c0_62] : memref<36x32xf32, #tpu.memory_space<vmem>>, vector<6x32xf32>
    tpu.vector_store %arg17[%c12, %c0_62], %209 {strides = array<i32>} : memref<36x32xf32, #tpu.memory_space<vmem>>, vector<6x32xf32>,
    %211 = vector.extract_strided_slice %201 {offsets = [3, 0, 0], sizes = [1, 6, 32], strides = [1, 1, 1]} : vector<6x6x32xf32> to vector<1x6x32xf32>
    %212 = vector.shape_cast %211 : vector<1x6x32xf32> to vector<6x32xf32>
    %c18 = arith.constant 18 : index
    %c0_63 = arith.constant 0 : index
    %213 = vector.load %arg17[%c18, %c0_63] : memref<36x32xf32, #tpu.memory_space<vmem>>, vector<6x32xf32>
    tpu.vector_store %arg17[%c18, %c0_63], %212 {strides = array<i32>} : memref<36x32xf32, #tpu.memory_space<vmem>>, vector<6x32xf32>,
    %214 = vector.extract_strided_slice %201 {offsets = [4, 0, 0], sizes = [1, 6, 32], strides = [1, 1, 1]} : vector<6x6x32xf32> to vector<1x6x32xf32>
    %215 = vector.shape_cast %214 : vector<1x6x32xf32> to vector<6x32xf32>
    %c24 = arith.constant 24 : index
    %c0_64 = arith.constant 0 : index
    %216 = vector.load %arg17[%c24, %c0_64] : memref<36x32xf32, #tpu.memory_space<vmem>>, vector<6x32xf32>
    tpu.vector_store %arg17[%c24, %c0_64], %215 {strides = array<i32>} : memref<36x32xf32, #tpu.memory_space<vmem>>, vector<6x32xf32>,
    %217 = vector.extract_strided_slice %201 {offsets = [5, 0, 0], sizes = [1, 6, 32], strides = [1, 1, 1]} : vector<6x6x32xf32> to vector<1x6x32xf32>
    %218 = vector.shape_cast %217 : vector<1x6x32xf32> to vector<6x32xf32>
    %c30 = arith.constant 30 : index
    %c0_65 = arith.constant 0 : index
    %219 = vector.load %arg17[%c30, %c0_65] : memref<36x32xf32, #tpu.memory_space<vmem>>, vector<6x32xf32>
    tpu.vector_store %arg17[%c30, %c0_65], %218 {strides = array<i32>} : memref<36x32xf32, #tpu.memory_space<vmem>>, vector<6x32xf32>,
    %c0_66 = arith.constant 0 : index
    %c0_67 = arith.constant 0 : index
    %220 = vector.load %arg17[%c0_66, %c0_67] : memref<36x32xf32, #tpu.memory_space<vmem>>, vector<36x32xf32>
    %cst_68 = arith.constant dense<0.000000e+00> : vector<32xf32>
    %221 = vector.multi_reduction <add>, %220, %cst_68 [0] : vector<36x32xf32> to vector<32xf32>
    %222 = vector.shape_cast %221 : vector<32xf32> to vector<1x32xf32>
    %cst_69 = arith.constant 0.027777778 : f32
    %223 = vector.broadcast %cst_69 : f32 to vector<1x32xf32>
    %224 = arith.mulf %222, %223 : vector<1x32xf32>
    %c0_70 = arith.constant 0 : index
    %c0_71 = arith.constant 0 : index
    %225 = vector.load %arg6[%c0_70, %c0_71] : memref<32x4xf32, #tpu.memory_space<vmem>>, vector<32x4xf32>
    %cst_72 = arith.constant dense<0.000000e+00> : vector<1x4xf32>
    %226 = tpu.matmul %224, %225, %cst_72 {dimension_numbers = #tpu.dot_dimension_numbers<[1], [0], [0], [1], [0, 0, 1, 1], [], []>} : vector<1x32xf32>, vector<32x4xf32>, vector<1x4xf32> -> vector<1x4xf32>
    %c0_73 = arith.constant 0 : index
    %c1408 = arith.constant 1408 : index
    %227 = vector.load %arg2[%c0_73, %c1408] : memref<1x3328xf32, #tpu.memory_space<vmem>>, vector<1x4xf32>
    %228 = arith.addf %226, %227 : vector<1x4xf32>
    %cst_74 = arith.constant 5.000000e-01 : f32
    %229 = vector.broadcast %cst_74 : f32 to vector<1x4xf32>
    %230 = arith.mulf %229, %228 : vector<1x4xf32>
    %cst_75 = arith.constant 4.471500e-02 : f32
    %231 = vector.broadcast %cst_75 : f32 to vector<1x4xf32>
    %232 = arith.mulf %231, %228 : vector<1x4xf32>
    %233 = arith.mulf %232, %228 : vector<1x4xf32>
    %234 = arith.mulf %233, %228 : vector<1x4xf32>
    %235 = arith.addf %228, %234 : vector<1x4xf32>
    %cst_76 = arith.constant 0.797884583 : f32
    %236 = vector.broadcast %cst_76 : f32 to vector<1x4xf32>
    %237 = arith.mulf %236, %235 : vector<1x4xf32>
    %238 = math.tanh %237 : vector<1x4xf32>
    %cst_77 = arith.constant 1.000000e+00 : f32
    %239 = vector.broadcast %cst_77 : f32 to vector<1x4xf32>
    %240 = arith.addf %239, %238 : vector<1x4xf32>
    %241 = arith.mulf %230, %240 : vector<1x4xf32>
    %c0_78 = arith.constant 0 : index
    %c0_79 = arith.constant 0 : index
    %242 = vector.load %arg7[%c0_78, %c0_79] : memref<4x16xf32, #tpu.memory_space<vmem>>, vector<4x16xf32>
    %cst_80 = arith.constant dense<0.000000e+00> : vector<1x16xf32>
    %243 = tpu.matmul %241, %242, %cst_80 {dimension_numbers = #tpu.dot_dimension_numbers<[1], [0], [0], [1], [0, 0, 1, 1], [], []>} : vector<1x4xf32>, vector<4x16xf32>, vector<1x16xf32> -> vector<1x16xf32>
    %c0_81 = arith.constant 0 : index
    %c1536 = arith.constant 1536 : index
    %244 = vector.load %arg2[%c0_81, %c1536] : memref<1x3328xf32, #tpu.memory_space<vmem>>, vector<1x16xf32>
    %245 = arith.addf %243, %244 : vector<1x16xf32>
    %246 = arith.negf %245 : vector<1x16xf32>
    %247 = math.exp %246 : vector<1x16xf32>
    %cst_82 = arith.constant 1.000000e+00 : f32
    %248 = vector.broadcast %cst_82 : f32 to vector<1x16xf32>
    %249 = arith.addf %248, %247 : vector<1x16xf32>
    %250 = arith.divf %248, %249 : vector<1x16xf32>
    %c0_83 = arith.constant 0 : index
    %c0_84 = arith.constant 0 : index
    %251 = vector.load %arg8[%c0_83, %c0_84] : memref<32x16xbf16, #tpu.memory_space<vmem>>, vector<32x16xbf16>
    %252 = arith.truncf %220 : vector<36x32xf32> to vector<36x32xbf16>
    %cst_85 = arith.constant dense<0.000000e+00> : vector<36x16xf32>
    %253 = tpu.matmul %252, %251, %cst_85 {dimension_numbers = #tpu.dot_dimension_numbers<[1], [0], [0], [1], [0, 0, 1, 1], [], []>} : vector<36x32xbf16>, vector<32x16xbf16>, vector<36x16xf32> -> vector<36x16xf32>
    %c0_86 = arith.constant 0 : index
    %c1664 = arith.constant 1664 : index
    %254 = vector.load %arg2[%c0_86, %c1664] : memref<1x3328xf32, #tpu.memory_space<vmem>>, vector<1x16xf32>
    %255 = vector.broadcast %254 : vector<1x16xf32> to vector<36x16xf32>
    %256 = arith.addf %253, %255 : vector<36x16xf32>
    %c0_87 = arith.constant 0 : index
    %c0_88 = arith.constant 0 : index
    %257 = vector.load %arg9[%c0_87, %c0_88] : memref<16x48xbf16, #tpu.memory_space<vmem>>, vector<16x48xbf16>
    %258 = arith.truncf %56 : vector<36x16xf32> to vector<36x16xbf16>
    %cst_89 = arith.constant dense<0.000000e+00> : vector<36x48xf32>
    %259 = tpu.matmul %258, %257, %cst_89 {dimension_numbers = #tpu.dot_dimension_numbers<[1], [0], [0], [1], [0, 0, 1, 1], [], []>} : vector<36x16xbf16>, vector<16x48xbf16>, vector<36x48xf32> -> vector<36x48xf32>
    %c0_90 = arith.constant 0 : index
    %c2048 = arith.constant 2048 : index
    %260 = vector.load %arg2[%c0_90, %c2048] : memref<1x3328xf32, #tpu.memory_space<vmem>>, vector<1x48xf32>
    %261 = vector.broadcast %260 : vector<1x48xf32> to vector<36x48xf32>
    %262 = arith.addf %259, %261 : vector<36x48xf32>
    %263 = vector.extract_strided_slice %262 {offsets = [0, 0], sizes = [36, 16], strides = [1, 1]} : vector<36x48xf32> to vector<36x16xf32>
    %cst_91 = arith.constant 0.353553385 : f32
    %264 = vector.broadcast %cst_91 : f32 to vector<36x16xf32>
    %265 = arith.mulf %263, %264 : vector<36x16xf32>
    %266 = vector.extract_strided_slice %262 {offsets = [0, 16], sizes = [36, 16], strides = [1, 1]} : vector<36x48xf32> to vector<36x16xf32>
    %267 = tpu.transpose %266, [1, 0] : vector<36x16xf32> -> vector<16x36xf32>
    %268 = vector.extract_strided_slice %262 {offsets = [0, 32], sizes = [36, 16], strides = [1, 1]} : vector<36x48xf32> to vector<36x16xf32>
    %269 = vector.broadcast %250 : vector<1x16xf32> to vector<36x16xf32>
    %270 = arith.mulf %268, %269 : vector<36x16xf32>
    %271 = vector.extract_strided_slice %265 {offsets = [0, 0], sizes = [36, 8], strides = [1, 1]} : vector<36x16xf32> to vector<36x8xf32>
    %272 = vector.extract_strided_slice %267 {offsets = [0, 0], sizes = [8, 36], strides = [1, 1]} : vector<16x36xf32> to vector<8x36xf32>
    %273 = vector.extract_strided_slice %270 {offsets = [0, 0], sizes = [36, 8], strides = [1, 1]} : vector<36x16xf32> to vector<36x8xf32>
    %274 = arith.truncf %271 : vector<36x8xf32> to vector<36x8xbf16>
    %275 = arith.truncf %272 : vector<8x36xf32> to vector<8x36xbf16>
    %cst_92 = arith.constant dense<0.000000e+00> : vector<36x36xf32>
    %276 = tpu.matmul %274, %275, %cst_92 {dimension_numbers = #tpu.dot_dimension_numbers<[1], [0], [0], [1], [0, 0, 1, 1], [], []>} : vector<36x8xbf16>, vector<8x36xbf16>, vector<36x36xf32> -> vector<36x36xf32>
    %c0_93 = arith.constant 0 : index
    %c0_94 = arith.constant 0 : index
    %c0_95 = arith.constant 0 : index
    %277 = vector.load %arg3[%c0_93, %c0_94, %c0_95] : memref<2x36x36xf32, #tpu.memory_space<vmem>>, vector<1x36x36xf32>
    %278 = vector.shape_cast %277 : vector<1x36x36xf32> to vector<36x36xf32>
    %279 = arith.addf %276, %278 : vector<36x36xf32>
    %cst_96 = arith.constant dense<0xFF800000> : vector<36xf32>
    %280 = vector.multi_reduction <maximumf>, %279, %cst_96 [1] : vector<36x36xf32> to vector<36xf32>
    %281 = vector.shape_cast %280 : vector<36xf32> to vector<36x1xf32>
    %282 = vector.broadcast %281 : vector<36x1xf32> to vector<36x36xf32>
    %283 = arith.subf %279, %282 : vector<36x36xf32>
    %284 = math.exp %283 : vector<36x36xf32>
    %cst_97 = arith.constant dense<0.000000e+00> : vector<36xf32>
    %285 = vector.multi_reduction <add>, %284, %cst_97 [1] : vector<36x36xf32> to vector<36xf32>
    %286 = vector.shape_cast %285 : vector<36xf32> to vector<36x1xf32>
    %287 = tpu.reciprocal %286 : vector<36x1xf32> -> vector<36x1xf32>
    %288 = vector.broadcast %287 : vector<36x1xf32> to vector<36x36xf32>
    %289 = arith.mulf %284, %288 : vector<36x36xf32>
    %290 = arith.truncf %289 : vector<36x36xf32> to vector<36x36xbf16>
    %291 = arith.truncf %273 : vector<36x8xf32> to vector<36x8xbf16>
    %cst_98 = arith.constant dense<0.000000e+00> : vector<36x8xf32>
    %292 = tpu.matmul %290, %291, %cst_98 {dimension_numbers = #tpu.dot_dimension_numbers<[1], [0], [0], [1], [0, 0, 1, 1], [], []>} : vector<36x36xbf16>, vector<36x8xbf16>, vector<36x8xf32> -> vector<36x8xf32>
    %293 = vector.extract_strided_slice %265 {offsets = [0, 8], sizes = [36, 8], strides = [1, 1]} : vector<36x16xf32> to vector<36x8xf32>
    %294 = vector.extract_strided_slice %267 {offsets = [8, 0], sizes = [8, 36], strides = [1, 1]} : vector<16x36xf32> to vector<8x36xf32>
    %295 = vector.extract_strided_slice %270 {offsets = [0, 8], sizes = [36, 8], strides = [1, 1]} : vector<36x16xf32> to vector<36x8xf32>
    %296 = arith.truncf %293 : vector<36x8xf32> to vector<36x8xbf16>
    %297 = arith.truncf %294 : vector<8x36xf32> to vector<8x36xbf16>
    %cst_99 = arith.constant dense<0.000000e+00> : vector<36x36xf32>
    %298 = tpu.matmul %296, %297, %cst_99 {dimension_numbers = #tpu.dot_dimension_numbers<[1], [0], [0], [1], [0, 0, 1, 1], [], []>} : vector<36x8xbf16>, vector<8x36xbf16>, vector<36x36xf32> -> vector<36x36xf32>
    %c1_100 = arith.constant 1 : index
    %c0_101 = arith.constant 0 : index
    %c0_102 = arith.constant 0 : index
    %299 = vector.load %arg3[%c1_100, %c0_101, %c0_102] : memref<2x36x36xf32, #tpu.memory_space<vmem>>, vector<1x36x36xf32>
    %300 = vector.shape_cast %299 : vector<1x36x36xf32> to vector<36x36xf32>
    %301 = arith.addf %298, %300 : vector<36x36xf32>
    %cst_103 = arith.constant dense<0xFF800000> : vector<36xf32>
    %302 = vector.multi_reduction <maximumf>, %301, %cst_103 [1] : vector<36x36xf32> to vector<36xf32>
    %303 = vector.shape_cast %302 : vector<36xf32> to vector<36x1xf32>
    %304 = vector.broadcast %303 : vector<36x1xf32> to vector<36x36xf32>
    %305 = arith.subf %301, %304 : vector<36x36xf32>
    %306 = math.exp %305 : vector<36x36xf32>
    %cst_104 = arith.constant dense<0.000000e+00> : vector<36xf32>
    %307 = vector.multi_reduction <add>, %306, %cst_104 [1] : vector<36x36xf32> to vector<36xf32>
    %308 = vector.shape_cast %307 : vector<36xf32> to vector<36x1xf32>
    %309 = tpu.reciprocal %308 : vector<36x1xf32> -> vector<36x1xf32>
    %310 = vector.broadcast %309 : vector<36x1xf32> to vector<36x36xf32>
    %311 = arith.mulf %306, %310 : vector<36x36xf32>
    %312 = arith.truncf %311 : vector<36x36xf32> to vector<36x36xbf16>
    %313 = arith.truncf %295 : vector<36x8xf32> to vector<36x8xbf16>
    %cst_105 = arith.constant dense<0.000000e+00> : vector<36x8xf32>
    %314 = tpu.matmul %312, %313, %cst_105 {dimension_numbers = #tpu.dot_dimension_numbers<[1], [0], [0], [1], [0, 0, 1, 1], [], []>} : vector<36x36xbf16>, vector<36x8xbf16>, vector<36x8xf32> -> vector<36x8xf32>
    %315 = tpu.concatenate %292, %314 in 1 : vector<36x8xf32>, vector<36x8xf32> -> vector<36x16xf32>
    %c0_106 = arith.constant 0 : index
    %c0_107 = arith.constant 0 : index
    %316 = vector.load %arg10[%c0_106, %c0_107] : memref<16x2xf32, #tpu.memory_space<vmem>>, vector<16x2xf32>
    %cst_108 = arith.constant dense<0.000000e+00> : vector<36x2xf32>
    %317 = tpu.matmul %315, %316, %cst_108 {dimension_numbers = #tpu.dot_dimension_numbers<[1], [0], [0], [1], [0, 0, 1, 1], [], []>} : vector<36x16xf32>, vector<16x2xf32>, vector<36x2xf32> -> vector<36x2xf32>
    %c0_109 = arith.constant 0 : index
    %c2176 = arith.constant 2176 : index
    %318 = vector.load %arg2[%c0_109, %c2176] : memref<1x3328xf32, #tpu.memory_space<vmem>>, vector<1x2xf32>
    %319 = vector.broadcast %318 : vector<1x2xf32> to vector<36x2xf32>
    %320 = arith.addf %317, %319 : vector<36x2xf32>
    %cst_110 = arith.constant 5.000000e-01 : f32
    %321 = vector.broadcast %cst_110 : f32 to vector<36x2xf32>
    %322 = arith.mulf %321, %320 : vector<36x2xf32>
    %cst_111 = arith.constant 4.471500e-02 : f32
    %323 = vector.broadcast %cst_111 : f32 to vector<36x2xf32>
    %324 = arith.mulf %323, %320 : vector<36x2xf32>
    %325 = arith.mulf %324, %320 : vector<36x2xf32>
    %326 = arith.mulf %325, %320 : vector<36x2xf32>
    %327 = arith.addf %320, %326 : vector<36x2xf32>
    %cst_112 = arith.constant 0.797884583 : f32
    %328 = vector.broadcast %cst_112 : f32 to vector<36x2xf32>
    %329 = arith.mulf %328, %327 : vector<36x2xf32>
    %330 = math.tanh %329 : vector<36x2xf32>
    %cst_113 = arith.constant 1.000000e+00 : f32
    %331 = vector.broadcast %cst_113 : f32 to vector<36x2xf32>
    %332 = arith.addf %331, %330 : vector<36x2xf32>
    %333 = arith.mulf %322, %332 : vector<36x2xf32>
    %c0_114 = arith.constant 0 : index
    %c0_115 = arith.constant 0 : index
    %334 = vector.load %arg11[%c0_114, %c0_115] : memref<2x1xf32, #tpu.memory_space<vmem>>, vector<2x1xf32>
    %cst_116 = arith.constant dense<0.000000e+00> : vector<36x1xf32>
    %335 = tpu.matmul %333, %334, %cst_116 {dimension_numbers = #tpu.dot_dimension_numbers<[1], [0], [0], [1], [0, 0, 1, 1], [], []>} : vector<36x2xf32>, vector<2x1xf32>, vector<36x1xf32> -> vector<36x1xf32>
    %c0_117 = arith.constant 0 : index
    %c2304 = arith.constant 2304 : index
    %336 = vector.load %arg2[%c0_117, %c2304] : memref<1x3328xf32, #tpu.memory_space<vmem>>, vector<1x1xf32>
    %337 = vector.broadcast %336 : vector<1x1xf32> to vector<36x1xf32>
    %338 = arith.addf %335, %337 : vector<36x1xf32>
    %339 = arith.negf %338 : vector<36x1xf32>
    %340 = math.exp %339 : vector<36x1xf32>
    %cst_118 = arith.constant 1.000000e+00 : f32
    %341 = vector.broadcast %cst_118 : f32 to vector<36x1xf32>
    %342 = arith.addf %341, %340 : vector<36x1xf32>
    %343 = arith.divf %341, %342 : vector<36x1xf32>
    %344 = vector.broadcast %343 : vector<36x1xf32> to vector<36x16xf32>
    %345 = arith.mulf %344, %256 : vector<36x16xf32>
    %c0_119 = arith.constant 0 : index
    %c1792 = arith.constant 1792 : index
    %346 = vector.load %arg2[%c0_119, %c1792] : memref<1x3328xf32, #tpu.memory_space<vmem>>, vector<1x16xf32>
    %347 = vector.broadcast %346 : vector<1x16xf32> to vector<36x16xf32>
    %348 = arith.mulf %345, %347 : vector<36x16xf32>
    %c0_120 = arith.constant 0 : index
    %c1920 = arith.constant 1920 : index
    %349 = vector.load %arg2[%c0_120, %c1920] : memref<1x3328xf32, #tpu.memory_space<vmem>>, vector<1x16xf32>
    %350 = vector.broadcast %349 : vector<1x16xf32> to vector<36x16xf32>
    %351 = arith.addf %348, %350 : vector<36x16xf32>
    %c0_121 = arith.constant 0 : index
    %c2432 = arith.constant 2432 : index
    %352 = vector.load %arg2[%c0_121, %c2432] : memref<1x3328xf32, #tpu.memory_space<vmem>>, vector<1x16xf32>
    %c0_122 = arith.constant 0 : index
    %c2560 = arith.constant 2560 : index
    %353 = vector.load %arg2[%c0_122, %c2560] : memref<1x3328xf32, #tpu.memory_space<vmem>>, vector<1x16xf32>
    %cst_123 = arith.constant dense<0.000000e+00> : vector<36xf32>
    %354 = vector.multi_reduction <add>, %315, %cst_123 [1] : vector<36x16xf32> to vector<36xf32>
    %355 = vector.shape_cast %354 : vector<36xf32> to vector<36x1xf32>
    %cst_124 = arith.constant 1.600000e+01 : f32
    %356 = vector.broadcast %cst_124 : f32 to vector<36x1xf32>
    %357 = arith.divf %355, %356 : vector<36x1xf32>
    %358 = vector.broadcast %357 : vector<36x1xf32> to vector<36x16xf32>
    %359 = arith.subf %315, %358 : vector<36x16xf32>
    %360 = arith.mulf %359, %359 : vector<36x16xf32>
    %cst_125 = arith.constant dense<0.000000e+00> : vector<36xf32>
    %361 = vector.multi_reduction <add>, %360, %cst_125 [1] : vector<36x16xf32> to vector<36xf32>
    %362 = vector.shape_cast %361 : vector<36xf32> to vector<36x1xf32>
    %cst_126 = arith.constant 1.600000e+01 : f32
    %363 = vector.broadcast %cst_126 : f32 to vector<36x1xf32>
    %364 = arith.divf %362, %363 : vector<36x1xf32>
    %365 = vector.broadcast %357 : vector<36x1xf32> to vector<36x16xf32>
    %366 = arith.subf %315, %365 : vector<36x16xf32>
    %cst_127 = arith.constant 9.99999974E-6 : f32
    %367 = vector.broadcast %cst_127 : f32 to vector<36x1xf32>
    %368 = arith.addf %364, %367 : vector<36x1xf32>
    %369 = math.rsqrt %368 : vector<36x1xf32>
    %370 = vector.broadcast %369 : vector<36x1xf32> to vector<36x16xf32>
    %371 = arith.mulf %366, %370 : vector<36x16xf32>
    %372 = vector.broadcast %352 : vector<1x16xf32> to vector<36x16xf32>
    %373 = arith.mulf %371, %372 : vector<36x16xf32>
    %374 = vector.broadcast %353 : vector<1x16xf32> to vector<36x16xf32>
    %375 = arith.addf %373, %374 : vector<36x16xf32>
    %376 = tpu.concatenate %375, %351 in 1 : vector<36x16xf32>, vector<36x16xf32> -> vector<36x32xf32>
    %c0_128 = arith.constant 0 : index
    %c0_129 = arith.constant 0 : index
    %377 = vector.load %arg12[%c0_128, %c0_129] : memref<32x32xbf16, #tpu.memory_space<vmem>>, vector<32x32xbf16>
    %378 = arith.truncf %376 : vector<36x32xf32> to vector<36x32xbf16>
    %cst_130 = arith.constant dense<0.000000e+00> : vector<36x32xf32>
    %379 = tpu.matmul %378, %377, %cst_130 {dimension_numbers = #tpu.dot_dimension_numbers<[1], [0], [0], [1], [0, 0, 1, 1], [], []>} : vector<36x32xbf16>, vector<32x32xbf16>, vector<36x32xf32> -> vector<36x32xf32>
    %c0_131 = arith.constant 0 : index
    %c2688 = arith.constant 2688 : index
    %380 = vector.load %arg2[%c0_131, %c2688] : memref<1x3328xf32, #tpu.memory_space<vmem>>, vector<1x32xf32>
    %381 = vector.broadcast %380 : vector<1x32xf32> to vector<36x32xf32>
    %382 = arith.addf %379, %381 : vector<36x32xf32>
    %383 = arith.addf %1, %382 : vector<36x32xf32>
    %c0_132 = arith.constant 0 : index
    %c2816 = arith.constant 2816 : index
    %384 = vector.load %arg2[%c0_132, %c2816] : memref<1x3328xf32, #tpu.memory_space<vmem>>, vector<1x32xf32>
    %c0_133 = arith.constant 0 : index
    %c2944 = arith.constant 2944 : index
    %385 = vector.load %arg2[%c0_133, %c2944] : memref<1x3328xf32, #tpu.memory_space<vmem>>, vector<1x32xf32>
    %cst_134 = arith.constant dense<0.000000e+00> : vector<36xf32>
    %386 = vector.multi_reduction <add>, %383, %cst_134 [1] : vector<36x32xf32> to vector<36xf32>
    %387 = vector.shape_cast %386 : vector<36xf32> to vector<36x1xf32>
    %cst_135 = arith.constant 3.200000e+01 : f32
    %388 = vector.broadcast %cst_135 : f32 to vector<36x1xf32>
    %389 = arith.divf %387, %388 : vector<36x1xf32>
    %390 = vector.broadcast %389 : vector<36x1xf32> to vector<36x32xf32>
    %391 = arith.subf %383, %390 : vector<36x32xf32>
    %392 = arith.mulf %391, %391 : vector<36x32xf32>
    %cst_136 = arith.constant dense<0.000000e+00> : vector<36xf32>
    %393 = vector.multi_reduction <add>, %392, %cst_136 [1] : vector<36x32xf32> to vector<36xf32>
    %394 = vector.shape_cast %393 : vector<36xf32> to vector<36x1xf32>
    %cst_137 = arith.constant 3.200000e+01 : f32
    %395 = vector.broadcast %cst_137 : f32 to vector<36x1xf32>
    %396 = arith.divf %394, %395 : vector<36x1xf32>
    %397 = vector.broadcast %389 : vector<36x1xf32> to vector<36x32xf32>
    %398 = arith.subf %383, %397 : vector<36x32xf32>
    %cst_138 = arith.constant 9.99999974E-6 : f32
    %399 = vector.broadcast %cst_138 : f32 to vector<36x1xf32>
    %400 = arith.addf %396, %399 : vector<36x1xf32>
    %401 = math.rsqrt %400 : vector<36x1xf32>
    %402 = vector.broadcast %401 : vector<36x1xf32> to vector<36x32xf32>
    %403 = arith.mulf %398, %402 : vector<36x32xf32>
    %404 = vector.broadcast %384 : vector<1x32xf32> to vector<36x32xf32>
    %405 = arith.mulf %403, %404 : vector<36x32xf32>
    %406 = vector.broadcast %385 : vector<1x32xf32> to vector<36x32xf32>
    %407 = arith.addf %405, %406 : vector<36x32xf32>
    %c0_139 = arith.constant 0 : index
    %c0_140 = arith.constant 0 : index
    %408 = vector.load %arg13[%c0_139, %c0_140] : memref<32x128xbf16, #tpu.memory_space<vmem>>, vector<32x128xbf16>
    %409 = arith.truncf %407 : vector<36x32xf32> to vector<36x32xbf16>
    %cst_141 = arith.constant dense<0.000000e+00> : vector<36x128xf32>
    %410 = tpu.matmul %409, %408, %cst_141 {dimension_numbers = #tpu.dot_dimension_numbers<[1], [0], [0], [1], [0, 0, 1, 1], [], []>} : vector<36x32xbf16>, vector<32x128xbf16>, vector<36x128xf32> -> vector<36x128xf32>
    %c0_142 = arith.constant 0 : index
    %c3072 = arith.constant 3072 : index
    %411 = vector.load %arg2[%c0_142, %c3072] : memref<1x3328xf32, #tpu.memory_space<vmem>>, vector<1x128xf32>
    %412 = vector.broadcast %411 : vector<1x128xf32> to vector<36x128xf32>
    %413 = arith.addf %410, %412 : vector<36x128xf32>
    %cst_143 = arith.constant 5.000000e-01 : f32
    %414 = vector.broadcast %cst_143 : f32 to vector<36x128xf32>
    %415 = arith.mulf %414, %413 : vector<36x128xf32>
    %cst_144 = arith.constant 4.471500e-02 : f32
    %416 = vector.broadcast %cst_144 : f32 to vector<36x128xf32>
    %417 = arith.mulf %416, %413 : vector<36x128xf32>
    %418 = arith.mulf %417, %413 : vector<36x128xf32>
    %419 = arith.mulf %418, %413 : vector<36x128xf32>
    %420 = arith.addf %413, %419 : vector<36x128xf32>
    %cst_145 = arith.constant 0.797884583 : f32
    %421 = vector.broadcast %cst_145 : f32 to vector<36x128xf32>
    %422 = arith.mulf %421, %420 : vector<36x128xf32>
    %423 = math.tanh %422 : vector<36x128xf32>
    %cst_146 = arith.constant 1.000000e+00 : f32
    %424 = vector.broadcast %cst_146 : f32 to vector<36x128xf32>
    %425 = arith.addf %424, %423 : vector<36x128xf32>
    %426 = arith.mulf %415, %425 : vector<36x128xf32>
    %c0_147 = arith.constant 0 : index
    %c0_148 = arith.constant 0 : index
    %427 = vector.load %arg14[%c0_147, %c0_148] : memref<128x32xbf16, #tpu.memory_space<vmem>>, vector<128x32xbf16>
    %428 = arith.truncf %426 : vector<36x128xf32> to vector<36x128xbf16>
    %cst_149 = arith.constant dense<0.000000e+00> : vector<36x32xf32>
    %429 = tpu.matmul %428, %427, %cst_149 {dimension_numbers = #tpu.dot_dimension_numbers<[1], [0], [0], [1], [0, 0, 1, 1], [], []>} : vector<36x128xbf16>, vector<128x32xbf16>, vector<36x32xf32> -> vector<36x32xf32>
    %430 = arith.addf %383, %429 : vector<36x32xf32>
    %c0_150 = arith.constant 0 : index
    %c3200 = arith.constant 3200 : index
    %431 = vector.load %arg2[%c0_150, %c3200] : memref<1x3328xf32, #tpu.memory_space<vmem>>, vector<1x32xf32>
    %432 = vector.broadcast %431 : vector<1x32xf32> to vector<36x32xf32>
    %433 = arith.addf %430, %432 : vector<36x32xf32>
    %c0_151 = arith.constant 0 : index
    %c0_152 = arith.constant 0 : index
    %c0_153 = arith.constant 0 : index
    %434 = vector.load %arg15[%c0_151, %c0_152, %c0_153] : memref<1x36x32xf32, #tpu.memory_space<vmem>>, vector<1x36x32xf32>
    %435 = vector.shape_cast %434 : vector<1x36x32xf32> to vector<36x32xf32>
    %436 = vector.shape_cast %433 : vector<36x32xf32> to vector<1x36x32xf32>
    tpu.vector_store %arg15[%c0_151, %c0_152, %c0_153], %436 {strides = array<i32>} : memref<1x36x32xf32, #tpu.memory_space<vmem>>, vector<1x36x32xf32>,
    return
  }
  func.func @transform_0(%arg0: i32) -> (i32, i32, i32) {
    %c0_i32 = arith.constant 0 : i32
    %c0_i32_0 = arith.constant 0 : i32
    %c0_i32_1 = arith.constant 0 : i32
    return %arg0, %c0_i32, %c0_i32_0 : i32, i32, i32
  }
  func.func @transform_1(%arg0: i32) -> (i32, i32) {
    %c0_i32 = arith.constant 0 : i32
    %c0_i32_0 = arith.constant 0 : i32
    %c0_i32_1 = arith.constant 0 : i32
    return %c0_i32, %c0_i32_0 : i32, i32
  }
  func.func @transform_2(%arg0: i32) -> (i32, i32, i32) {
    %c0_i32 = arith.constant 0 : i32
    %c0_i32_0 = arith.constant 0 : i32
    %c0_i32_1 = arith.constant 0 : i32
    %c0_i32_2 = arith.constant 0 : i32
    return %c0_i32, %c0_i32_0, %c0_i32_1 : i32, i32, i32
  }
  func.func @transform_3(%arg0: i32) -> (i32, i32) {
    %c0_i32 = arith.constant 0 : i32
    %c0_i32_0 = arith.constant 0 : i32
    %c0_i32_1 = arith.constant 0 : i32
    return %c0_i32, %c0_i32_0 : i32, i32
  }
  func.func @transform_4(%arg0: i32) -> (i32, i32, i32) {
    %c0_i32 = arith.constant 0 : i32
    %c0_i32_0 = arith.constant 0 : i32
    %c0_i32_1 = arith.constant 0 : i32
    %c0_i32_2 = arith.constant 0 : i32
    return %c0_i32, %c0_i32_0, %c0_i32_1 : i32, i32, i32
  }
  func.func @transform_5(%arg0: i32) -> (i32, i32) {
    %c0_i32 = arith.constant 0 : i32
    %c0_i32_0 = arith.constant 0 : i32
    %c0_i32_1 = arith.constant 0 : i32
    return %c0_i32, %c0_i32_0 : i32, i32
  }
  func.func @transform_6(%arg0: i32) -> (i32, i32) {
    %c0_i32 = arith.constant 0 : i32
    %c0_i32_0 = arith.constant 0 : i32
    %c0_i32_1 = arith.constant 0 : i32
    return %c0_i32, %c0_i32_0 : i32, i32
  }
  func.func @transform_7(%arg0: i32) -> (i32, i32) {
    %c0_i32 = arith.constant 0 : i32
    %c0_i32_0 = arith.constant 0 : i32
    %c0_i32_1 = arith.constant 0 : i32
    return %c0_i32, %c0_i32_0 : i32, i32
  }
  func.func @transform_8(%arg0: i32) -> (i32, i32) {
    %c0_i32 = arith.constant 0 : i32
    %c0_i32_0 = arith.constant 0 : i32
    %c0_i32_1 = arith.constant 0 : i32
    return %c0_i32, %c0_i32_0 : i32, i32
  }
  func.func @transform_9(%arg0: i32) -> (i32, i32) {
    %c0_i32 = arith.constant 0 : i32
    %c0_i32_0 = arith.constant 0 : i32
    %c0_i32_1 = arith.constant 0 : i32
    return %c0_i32, %c0_i32_0 : i32, i32
  }
  func.func @transform_10(%arg0: i32) -> (i32, i32) {
    %c0_i32 = arith.constant 0 : i32
    %c0_i32_0 = arith.constant 0 : i32
    %c0_i32_1 = arith.constant 0 : i32
    return %c0_i32, %c0_i32_0 : i32, i32
  }
  func.func @transform_11(%arg0: i32) -> (i32, i32) {
    %c0_i32 = arith.constant 0 : i32
    %c0_i32_0 = arith.constant 0 : i32
    %c0_i32_1 = arith.constant 0 : i32
    return %c0_i32, %c0_i32_0 : i32, i32
  }
  func.func @transform_12(%arg0: i32) -> (i32, i32) {
    %c0_i32 = arith.constant 0 : i32
    %c0_i32_0 = arith.constant 0 : i32
    %c0_i32_1 = arith.constant 0 : i32
    return %c0_i32, %c0_i32_0 : i32, i32
  }
  func.func @transform_13(%arg0: i32) -> (i32, i32) {
    %c0_i32 = arith.constant 0 : i32
    %c0_i32_0 = arith.constant 0 : i32
    %c0_i32_1 = arith.constant 0 : i32
    return %c0_i32, %c0_i32_0 : i32, i32
  }
  func.func @transform_14(%arg0: i32) -> (i32, i32, i32) {
    %c0_i32 = arith.constant 0 : i32
    %c0_i32_0 = arith.constant 0 : i32
    %c0_i32_1 = arith.constant 0 : i32
    return %arg0, %c0_i32, %c0_i32_0 : i32, i32, i32
  }
}

</mosaic_0001>

<llo_original>
// kernel: _lambda_.1
$region0: #{_lambda_.1}
  #allocation0 [shape = 'u32[]', space=smem, size = 0x4, offset = 0x4, fixed_abs, tag = 'smem constant byte address 0x4 - core index']
  #allocation1 [shape = 'u32[144,128]{1,0:T(1,128)}', space=vmem, size = 0x12000, scoped, tag = 'internal scratch']
  #allocation2 [shape = 'f32[8,8,32]{2,1,0:T(8,128)}', space=vmem, size = 0x8000, scoped, tag = 'scratch operand']
  #allocation3 [shape = 'f32[36,32]{1,0:T(8,128)}', space=vmem, size = 0x5000, scoped, tag = 'scratch operand']
  %s0 = inlined_call_operand.vmem [shape: f32[2,36,32], index: 0, kind: input, shape index: {}]
  %s1 = inlined_call_operand.hbm [shape: f32[1,3328], index: 1, kind: input, shape index: {}]
  %s2 = inlined_call_operand.vmem [shape: f32[2,36,36], index: 2, kind: input, shape index: {}]
  %s3 = inlined_call_operand.hbm [shape: bf16[32,48], index: 3, kind: input, shape index: {}]
  %s4 = inlined_call_operand.hbm [shape: f32[3,3,32], index: 4, kind: input, shape index: {}]
  %s5 = inlined_call_operand.vmem [shape: f32[32,4], index: 5, kind: input, shape index: {}]
  %s6 = inlined_call_operand.hbm [shape: f32[4,16], index: 6, kind: input, shape index: {}]
  %s7 = inlined_call_operand.hbm [shape: bf16[32,16], index: 7, kind: input, shape index: {}]
  %s8 = inlined_call_operand.hbm [shape: bf16[16,48], index: 8, kind: input, shape index: {}]
  %s9 = inlined_call_operand.hbm [shape: f32[16,2], index: 9, kind: input, shape index: {}]
  %s10 = inlined_call_operand.hbm [shape: f32[2,1], index: 10, kind: input, shape index: {}]
  %s11 = inlined_call_operand.vmem [shape: bf16[32,32], index: 11, kind: input, shape index: {}]
  %s12 = inlined_call_operand.vmem [shape: bf16[32,128], index: 12, kind: input, shape index: {}]
  %s13 = inlined_call_operand.vmem [shape: bf16[128,32], index: 13, kind: input, shape index: {}]
  %s14 = inlined_call_operand.vmem [shape: f32[2,36,32], index: 14, kind: output, shape index: {}]
  %s15 = sld [smem:[#allocation0]]
  $region121: #{_lambda_.1} parent=0
    _
  %s17 = ssub.s32 1, %s15
  %s18 = scalar_select 0, %s17, %s15
  $region1: #{_lambda_.1} parent=0
    #allocation4 [shape = 'u8[13312]{0}', space=vmem, size = 0x3400, scoped, tag = 'input window, operand 1, single buffered']
    #allocation5 [shape = 's32[2]{0}', space=sflag, size = 0x8, scoped, tag = 'scoped memory for _lambda_.1']
    #allocation6 [shape = 'u8[8192]{0}', space=vmem, size = 0x2000, scoped, tag = 'input window, operand 3, single buffered']
    #allocation7 [shape = 's32[1]{0}', space=sflag, size = 0x4, scoped, tag = 'scoped memory for _lambda_.1']
    #allocation8 [shape = 'u8[6144]{0}', space=vmem, size = 0x1800, scoped, tag = 'input window, operand 4, single buffered']
    #allocation9 [shape = 'u8[2048]{0}', space=vmem, size = 0x800, scoped, tag = 'input window, operand 6, single buffered']
    #allocation10 [shape = 's32[1]{0}', space=sflag, size = 0x4, scoped, tag = 'scoped memory for _lambda_.1']
    #allocation11 [shape = 'u8[8192]{0}', space=vmem, size = 0x2000, scoped, tag = 'input window, operand 7, single buffered']
    #allocation12 [shape = 'u8[4096]{0}', space=vmem, size = 0x1000, scoped, tag = 'input window, operand 8, single buffered']
    #allocation13 [shape = 's32[1]{0}', space=sflag, size = 0x4, scoped, tag = 'scoped memory for _lambda_.1']
    #allocation14 [shape = 'u8[8192]{0}', space=vmem, size = 0x2000, scoped, tag = 'input window, operand 9, single buffered']
    #allocation15 [shape = 'u8[1024]{0}', space=vmem, size = 0x400, scoped, tag = 'input window, operand 10, single buffered']
    #allocation16 [shape = 's32[1]{0}', space=sflag, size = 0x4, scoped, tag = 'scoped memory for _lambda_.1']
    %19 = vsyncpa [#allocation5], 0
    %20 = vsyncpa [#allocation7], 0
    %21 = vsyncpa [#allocation10], 0
    %22 = vsyncpa [#allocation13], 0
    %23 = vsyncpa [#allocation16], 0
    loop: start=0, step=1, limit=4
    $region2: #{_lambda_.1} parent=1 // loop_pre_header
      _
    $region3: #{_lambda_.1} parent=1 // loop_header
      %s25 = sphi 0, %s29
      %p26 = scmp.ge.s32.totalorder %s25, 4
      %s35 = sphi 0, %s37
      %s38 = sphi 0, %s35
      %s39 = sphi 0, %s38
      %s55 = sphi 0, %s39
      %s59 = sphi 0, %s59
      %s61 = sphi 0, %s59
      %s62 = sphi 0, %s61
      %s76 = sphi 0, %s62
      %s80 = sphi 0, %s80
      %s82 = sphi 0, %s80
      %s83 = sphi 0, %s82
      %s97 = sphi 0, %s83
      %s101 = sphi 0, %s101
      %s103 = sphi 0, %s101
      %s104 = sphi 0, %s103
      %s118 = sphi 0, %s104
      %s122 = sphi 0, %s122
      %s124 = sphi 0, %s122
      %s125 = sphi 0, %s124
      %s139 = sphi 0, %s125
      %s143 = sphi 0, %s143
      %s145 = sphi 0, %s143
      %s146 = sphi 0, %s145
      %s160 = sphi 0, %s146
      %s164 = sphi 0, %s164
      %s166 = sphi 0, %s164
      %s167 = sphi 0, %s166
      %s181 = sphi 0, %s167
      %s185 = sphi 0, %s185
      %s187 = sphi 0, %s185
      %s188 = sphi 0, %s187
      %s202 = sphi 0, %s188
      %s206 = sphi 0, %s206
      %s208 = sphi 0, %s206
      %s209 = sphi 0, %s208
      %s223 = sphi 0, %s209
      %s227 = sphi 0, %s227
      %s229 = sphi 0, %s227
      %s230 = sphi 0, %s229
      %s244 = sphi 0, %s230
      %s248 = sphi 0, %s248
      %s250 = sphi 0, %s248
      %s251 = sphi 0, %s250
      %s265 = sphi 0, %s251
      %s269 = sphi 0, %s269
      %s271 = sphi 0, %s269
      %s272 = sphi 0, %s271
      %s286 = sphi 0, %s272
      %s290 = sphi 0, %s290
      %s292 = sphi 0, %s290
      %s293 = sphi 0, %s292
      %s307 = sphi 0, %s293
      %s311 = sphi 0, %s311
      %s313 = sphi 0, %s311
      %s314 = sphi 0, %s313
      %s328 = sphi 0, %s314
      %s334 = sphi 0, %s336
      %s337 = sphi 0, %s334
      %s338 = sphi 0, %s337
      %s354 = sphi 0, %s338
    $region4: #{_lambda_.1} parent=1 // loop_header_branch
      %28 = sbr.rel (%p26) target = $region8
    $region5: #{_lambda_.1} parent=1 // loop_body
      %s30 = ssub.s32 %s25, 1
      %s31 = ssub.s32 %s25, 2
      %s32 = sadd.s32 %s25, 1
      %s33 = ssub.s32 %s25, %s32
      %p34 = scmp.eq.s32.totalorder %s33, 0
      %s36 = sadd.s32 %s35, 1
      %s37 = scalar_select %p34, %s35, %s36
      %p40 = pneg %p34
      %p41 = scmp.eq.s32.totalorder %s25, 1
      %p42 = por %p40, %p41
      %p43 = scmp.ne.s32.totalorder %s35, %s38
      %p44 = scmp.eq.s32.totalorder %s25, 0
      %p45 = por %p43, %p44
      %p46 = scmp.ne.s32.totalorder %s35, %s38
      %p47 = scmp.eq.s32.totalorder %s30, 1
      %p48 = por %p46, %p47
      %p49 = scmp.ne.s32.totalorder %s38, %s39
      %p50 = scmp.eq.s32.totalorder %s30, 0
      %p51 = por %p49, %p50
      %p52 = scmp.ne.s32.totalorder %s38, %s39
      %p53 = scmp.eq.s32.totalorder %s31, 1
      %p54 = por %p52, %p53
      %p56 = scmp.ne.s32.totalorder %s39, %s55
      %p57 = scmp.eq.s32.totalorder %s31, 0
      %p58 = por %p56, %p57
      %s60 = sadd.s32 %s59, 1
      %p63 = scmp.eq.s32.totalorder %s25, 1
      %p64 = scmp.ne.s32.totalorder %s59, %s61
      %p65 = scmp.eq.s32.totalorder %s25, 0
      %p66 = por %p64, %p65
      %p67 = scmp.ne.s32.totalorder %s59, %s61
      %p68 = scmp.eq.s32.totalorder %s30, 1
      %p69 = por %p67, %p68
      %p70 = scmp.ne.s32.totalorder %s61, %s62
      %p71 = scmp.eq.s32.totalorder %s30, 0
      %p72 = por %p70, %p71
      %p73 = scmp.ne.s32.totalorder %s61, %s62
      %p74 = scmp.eq.s32.totalorder %s31, 1
      %p75 = por %p73, %p74
      %p77 = scmp.ne.s32.totalorder %s62, %s76
      %p78 = scmp.eq.s32.totalorder %s31, 0
      %p79 = por %p77, %p78
      %s81 = sadd.s32 %s80, 1
      %p84 = scmp.eq.s32.totalorder %s25, 1
      %p85 = scmp.ne.s32.totalorder %s80, %s82
      %p86 = scmp.eq.s32.totalorder %s25, 0
      %p87 = por %p85, %p86
      %p88 = scmp.ne.s32.totalorder %s80, %s82
      %p89 = scmp.eq.s32.totalorder %s30, 1
      %p90 = por %p88, %p89
      %p91 = scmp.ne.s32.totalorder %s82, %s83
      %p92 = scmp.eq.s32.totalorder %s30, 0
      %p93 = por %p91, %p92
      %p94 = scmp.ne.s32.totalorder %s82, %s83
      %p95 = scmp.eq.s32.totalorder %s31, 1
      %p96 = por %p94, %p95
      %p98 = scmp.ne.s32.totalorder %s83, %s97
      %p99 = scmp.eq.s32.totalorder %s31, 0
      %p100 = por %p98, %p99
      %s102 = sadd.s32 %s101, 1
      %p105 = scmp.eq.s32.totalorder %s25, 1
      %p106 = scmp.ne.s32.totalorder %s101, %s103
      %p107 = scmp.eq.s32.totalorder %s25, 0
      %p108 = por %p106, %p107
      %p109 = scmp.ne.s32.totalorder %s101, %s103
      %p110 = scmp.eq.s32.totalorder %s30, 1
      %p111 = por %p109, %p110
      %p112 = scmp.ne.s32.totalorder %s103, %s104
      %p113 = scmp.eq.s32.totalorder %s30, 0
      %p114 = por %p112, %p113
      %p115 = scmp.ne.s32.totalorder %s103, %s104
      %p116 = scmp.eq.s32.totalorder %s31, 1
      %p117 = por %p115, %p116
      %p119 = scmp.ne.s32.totalorder %s104, %s118
      %p120 = scmp.eq.s32.totalorder %s31, 0
      %p121 = por %p119, %p120
      %s123 = sadd.s32 %s122, 1
      %p126 = scmp.eq.s32.totalorder %s25, 1
      %p127 = scmp.ne.s32.totalorder %s122, %s124
      %p128 = scmp.eq.s32.totalorder %s25, 0
      %p129 = por %p127, %p128
      %p130 = scmp.ne.s32.totalorder %s122, %s124
      %p131 = scmp.eq.s32.totalorder %s30, 1
      %p132 = por %p130, %p131
      %p133 = scmp.ne.s32.totalorder %s124, %s125
      %p134 = scmp.eq.s32.totalorder %s30, 0
      %p135 = por %p133, %p134
      %p136 = scmp.ne.s32.totalorder %s124, %s125
      %p137 = scmp.eq.s32.totalorder %s31, 1
      %p138 = por %p136, %p137
      %p140 = scmp.ne.s32.totalorder %s125, %s139
      %p141 = scmp.eq.s32.totalorder %s31, 0
      %p142 = por %p140, %p141
      %s144 = sadd.s32 %s143, 1
      %p147 = scmp.eq.s32.totalorder %s25, 1
      %p148 = scmp.ne.s32.totalorder %s143, %s145
      %p149 = scmp.eq.s32.totalorder %s25, 0
      %p150 = por %p148, %p149
      %p151 = scmp.ne.s32.totalorder %s143, %s145
      %p152 = scmp.eq.s32.totalorder %s30, 1
      %p153 = por %p151, %p152
      %p154 = scmp.ne.s32.totalorder %s145, %s146
      %p155 = scmp.eq.s32.totalorder %s30, 0
      %p156 = por %p154, %p155
      %p157 = scmp.ne.s32.totalorder %s145, %s146
      %p158 = scmp.eq.s32.totalorder %s31, 1
      %p159 = por %p157, %p158
      %p161 = scmp.ne.s32.totalorder %s146, %s160
      %p162 = scmp.eq.s32.totalorder %s31, 0
      %p163 = por %p161, %p162
      %s165 = sadd.s32 %s164, 1
      %p168 = scmp.eq.s32.totalorder %s25, 1
      %p169 = scmp.ne.s32.totalorder %s164, %s166
      %p170 = scmp.eq.s32.totalorder %s25, 0
      %p171 = por %p169, %p170
      %p172 = scmp.ne.s32.totalorder %s164, %s166
      %p173 = scmp.eq.s32.totalorder %s30, 1
      %p174 = por %p172, %p173
      %p175 = scmp.ne.s32.totalorder %s166, %s167
      %p176 = scmp.eq.s32.totalorder %s30, 0
      %p177 = por %p175, %p176
      %p178 = scmp.ne.s32.totalorder %s166, %s167
      %p179 = scmp.eq.s32.totalorder %s31, 1
      %p180 = por %p178, %p179
      %p182 = scmp.ne.s32.totalorder %s167, %s181
      %p183 = scmp.eq.s32.totalorder %s31, 0
      %p184 = por %p182, %p183
      %s186 = sadd.s32 %s185, 1
      %p189 = scmp.eq.s32.totalorder %s25, 1
      %p190 = scmp.ne.s32.totalorder %s185, %s187
      %p191 = scmp.eq.s32.totalorder %s25, 0
      %p192 = por %p190, %p191
      %p193 = scmp.ne.s32.totalorder %s185, %s187
      %p194 = scmp.eq.s32.totalorder %s30, 1
      %p195 = por %p193, %p194
      %p196 = scmp.ne.s32.totalorder %s187, %s188
      %p197 = scmp.eq.s32.totalorder %s30, 0
      %p198 = por %p196, %p197
      %p199 = scmp.ne.s32.totalorder %s187, %s188
      %p200 = scmp.eq.s32.totalorder %s31, 1
      %p201 = por %p199, %p200
      %p203 = scmp.ne.s32.totalorder %s188, %s202
      %p204 = scmp.eq.s32.totalorder %s31, 0
      %p205 = por %p203, %p204
      %s207 = sadd.s32 %s206, 1
      %p210 = scmp.eq.s32.totalorder %s25, 1
      %p211 = scmp.ne.s32.totalorder %s206, %s208
      %p212 = scmp.eq.s32.totalorder %s25, 0
      %p213 = por %p211, %p212
      %p214 = scmp.ne.s32.totalorder %s206, %s208
      %p215 = scmp.eq.s32.totalorder %s30, 1
      %p216 = por %p214, %p215
      %p217 = scmp.ne.s32.totalorder %s208, %s209
      %p218 = scmp.eq.s32.totalorder %s30, 0
      %p219 = por %p217, %p218
      %p220 = scmp.ne.s32.totalorder %s208, %s209
      %p221 = scmp.eq.s32.totalorder %s31, 1
      %p222 = por %p220, %p221
      %p224 = scmp.ne.s32.totalorder %s209, %s223
      %p225 = scmp.eq.s32.totalorder %s31, 0
      %p226 = por %p224, %p225
      %s228 = sadd.s32 %s227, 1
      %p231 = scmp.eq.s32.totalorder %s25, 1
      %p232 = scmp.ne.s32.totalorder %s227, %s229
      %p233 = scmp.eq.s32.totalorder %s25, 0
      %p234 = por %p232, %p233
      %p235 = scmp.ne.s32.totalorder %s227, %s229
      %p236 = scmp.eq.s32.totalorder %s30, 1
      %p237 = por %p235, %p236
      %p238 = scmp.ne.s32.totalorder %s229, %s230
      %p239 = scmp.eq.s32.totalorder %s30, 0
      %p240 = por %p238, %p239
      %p241 = scmp.ne.s32.totalorder %s229, %s230
      %p242 = scmp.eq.s32.totalorder %s31, 1
      %p243 = por %p241, %p242
      %p245 = scmp.ne.s32.totalorder %s230, %s244
      %p246 = scmp.eq.s32.totalorder %s31, 0
      %p247 = por %p245, %p246
      %s249 = sadd.s32 %s248, 1
      %p252 = scmp.eq.s32.totalorder %s25, 1
      %p253 = scmp.ne.s32.totalorder %s248, %s250
      %p254 = scmp.eq.s32.totalorder %s25, 0
      %p255 = por %p253, %p254
      %p256 = scmp.ne.s32.totalorder %s248, %s250
      %p257 = scmp.eq.s32.totalorder %s30, 1
      %p258 = por %p256, %p257
      %p259 = scmp.ne.s32.totalorder %s250, %s251
      %p260 = scmp.eq.s32.totalorder %s30, 0
      %p261 = por %p259, %p260
      %p262 = scmp.ne.s32.totalorder %s250, %s251
      %p263 = scmp.eq.s32.totalorder %s31, 1
      %p264 = por %p262, %p263
      %p266 = scmp.ne.s32.totalorder %s251, %s265
      %p267 = scmp.eq.s32.totalorder %s31, 0
      %p268 = por %p266, %p267
      %s270 = sadd.s32 %s269, 1
      %p273 = scmp.eq.s32.totalorder %s25, 1
      %p274 = scmp.ne.s32.totalorder %s269, %s271
      %p275 = scmp.eq.s32.totalorder %s25, 0
      %p276 = por %p274, %p275
      %p277 = scmp.ne.s32.totalorder %s269, %s271
      %p278 = scmp.eq.s32.totalorder %s30, 1
      %p279 = por %p277, %p278
      %p280 = scmp.ne.s32.totalorder %s271, %s272
      %p281 = scmp.eq.s32.totalorder %s30, 0
      %p282 = por %p280, %p281
      %p283 = scmp.ne.s32.totalorder %s271, %s272
      %p284 = scmp.eq.s32.totalorder %s31, 1
      %p285 = por %p283, %p284
      %p287 = scmp.ne.s32.totalorder %s272, %s286
      %p288 = scmp.eq.s32.totalorder %s31, 0
      %p289 = por %p287, %p288
      %s291 = sadd.s32 %s290, 1
      %p294 = scmp.eq.s32.totalorder %s25, 1
      %p295 = scmp.ne.s32.totalorder %s290, %s292
      %p296 = scmp.eq.s32.totalorder %s25, 0
      %p297 = por %p295, %p296
      %p298 = scmp.ne.s32.totalorder %s290, %s292
      %p299 = scmp.eq.s32.totalorder %s30, 1
      %p300 = por %p298, %p299
      %p301 = scmp.ne.s32.totalorder %s292, %s293
      %p302 = scmp.eq.s32.totalorder %s30, 0
      %p303 = por %p301, %p302
      %p304 = scmp.ne.s32.totalorder %s292, %s293
      %p305 = scmp.eq.s32.totalorder %s31, 1
      %p306 = por %p304, %p305
      %p308 = scmp.ne.s32.totalorder %s293, %s307
      %p309 = scmp.eq.s32.totalorder %s31, 0
      %p310 = por %p308, %p309
      %s312 = sadd.s32 %s311, 1
      %p315 = scmp.eq.s32.totalorder %s25, 1
      %p316 = scmp.ne.s32.totalorder %s311, %s313
      %p317 = scmp.eq.s32.totalorder %s25, 0
      %p318 = por %p316, %p317
      %p319 = scmp.ne.s32.totalorder %s311, %s313
      %p320 = scmp.eq.s32.totalorder %s30, 1
      %p321 = por %p319, %p320
      %p322 = scmp.ne.s32.totalorder %s313, %s314
      %p323 = scmp.eq.s32.totalorder %s30, 0
      %p324 = por %p322, %p323
      %p325 = scmp.ne.s32.totalorder %s313, %s314
      %p326 = scmp.eq.s32.totalorder %s31, 1
      %p327 = por %p325, %p326
      %p329 = scmp.ne.s32.totalorder %s314, %s328
      %p330 = scmp.eq.s32.totalorder %s31, 0
      %p331 = por %p329, %p330
      %s332 = ssub.s32 %s25, %s32
      %p333 = scmp.eq.s32.totalorder %s332, 0
      %s335 = sadd.s32 %s334, 1
      %s336 = scalar_select %p333, %s334, %s335
      %p339 = pneg %p333
      %p340 = scmp.eq.s32.totalorder %s25, 1
      %p341 = por %p339, %p340
      %p342 = scmp.ne.s32.totalorder %s334, %s337
      %p343 = scmp.eq.s32.totalorder %s25, 0
      %p344 = por %p342, %p343
      %p345 = scmp.ne.s32.totalorder %s334, %s337
      %p346 = scmp.eq.s32.totalorder %s30, 1
      %p347 = por %p345, %p346
      %p348 = scmp.ne.s32.totalorder %s337, %s338
      %p349 = scmp.eq.s32.totalorder %s30, 0
      %p350 = por %p348, %p349
      %p351 = scmp.ne.s32.totalorder %s337, %s338
      %p352 = scmp.eq.s32.totalorder %s31, 1
      %p353 = por %p351, %p352
      %p355 = scmp.ne.s32.totalorder %s338, %s354
      %p356 = scmp.eq.s32.totalorder %s31, 0
      %p357 = por %p355, %p356
      %p358 = scmp.le.s32.totalorder 1, %s25
      %p359 = scmp.lt.s32.totalorder %s25, 3
      %p360 = pnand %p358, %p359
      %p361 = pneg %p360
      // Predicated region
      $region9: #{_lambda_.1} parent=5 // pred_check
        _
      $region10: #{_lambda_.1} parent=5 // pred_check_branch
        %363 = sbr.rel (%p360) target = $region12
      $region11: #{_lambda_.1} parent=5 // pred_region
        %s364 = ssub.s32 %s25, 1
        // Predicated region
        $region13: #{_lambda_.1} parent=11 // pred_check
          %p365 = pneg %p72
        $region14: #{_lambda_.1} parent=11 // pred_check_branch
          %367 = sbr.rel (%p365) target = $region16
        $region15: #{_lambda_.1} parent=11 // pred_region
          %s369 = ssub.s32 416, 416
          %370 = vsyncadd [#allocation5], %s369
          %s372 = sshll.u32 [#allocation4], 4
          %s373 = int_to_ptr.vmem [resolvable:$true] %s372
          %375 = dma.hbm_to_vmem [thread:$0]  %s1, 416, %s373, [#allocation5]
        $region16: #{_lambda_.1} parent=11 // pred_fallthru
          _
        // Predicated region
        $region17: #{_lambda_.1} parent=11 // pred_check
          %p376 = pneg %p93
        $region18: #{_lambda_.1} parent=11 // pred_check_branch
          %378 = sbr.rel (%p376) target = $region20
        $region19: #{_lambda_.1} parent=11 // pred_region
          _
        $region20: #{_lambda_.1} parent=11 // pred_fallthru
          _
        // Predicated region
        $region21: #{_lambda_.1} parent=11 // pred_check
          %p379 = pneg %p114
        $region22: #{_lambda_.1} parent=11 // pred_check_branch
          %381 = sbr.rel (%p379) target = $region24
        $region23: #{_lambda_.1} parent=11 // pred_region
          %s383 = ssub.s32 256, 256
          %384 = vsyncadd [#allocation7], %s383
          %s385 = sshll.u32 [#allocation6], 4
          %s386 = int_to_ptr.vmem [resolvable:$true] %s385
          %391 = dma.hbm_to_vmem [thread:$0]  %s3, 256, %s386, [#allocation7], 64, 64, 4
        $region24: #{_lambda_.1} parent=11 // pred_fallthru
          _
        // Predicated region
        $region25: #{_lambda_.1} parent=11 // pred_check
          %p392 = pneg %p135
        $region26: #{_lambda_.1} parent=11 // pred_check_branch
          %394 = sbr.rel (%p392) target = $region28
        $region27: #{_lambda_.1} parent=11 // pred_region
          %s396 = ssub.s32 192, 192
          %397 = vsyncadd [#allocation7], %s396
          %s398 = sshll.u32 [#allocation8], 4
          %s399 = int_to_ptr.vmem [resolvable:$true] %s398
          %404 = dma.hbm_to_vmem [thread:$0]  %s4, 192, %s399, [#allocation7], 64, 64, 4
        $region28: #{_lambda_.1} parent=11 // pred_fallthru
          _
        // Predicated region
        $region29: #{_lambda_.1} parent=11 // pred_check
          %p405 = pneg %p156
        $region30: #{_lambda_.1} parent=11 // pred_check_branch
          %407 = sbr.rel (%p405) target = $region32
        $region31: #{_lambda_.1} parent=11 // pred_region
          _
        $region32: #{_lambda_.1} parent=11 // pred_fallthru
          _
        // Predicated region
        $region33: #{_lambda_.1} parent=11 // pred_check
          %p408 = pneg %p177
        $region34: #{_lambda_.1} parent=11 // pred_check_branch
          %410 = sbr.rel (%p408) target = $region36
        $region35: #{_lambda_.1} parent=11 // pred_region
          %s412 = ssub.s32 64, 64
          %413 = vsyncadd [#allocation10], %s412
          %s415 = sshll.u32 [#allocation9], 4
          %s416 = int_to_ptr.vmem [resolvable:$true] %s415
          %418 = dma.hbm_to_vmem [thread:$0]  %s6, 64, %s416, [#allocation10]
        $region36: #{_lambda_.1} parent=11 // pred_fallthru
          _
        // Predicated region
        $region37: #{_lambda_.1} parent=11 // pred_check
          %p419 = pneg %p198
        $region38: #{_lambda_.1} parent=11 // pred_check_branch
          %421 = sbr.rel (%p419) target = $region40
        $region39: #{_lambda_.1} parent=11 // pred_region
          %s423 = ssub.s32 256, 256
          %424 = vsyncadd [#allocation10], %s423
          %s425 = sshll.u32 [#allocation11], 4
          %s426 = int_to_ptr.vmem [resolvable:$true] %s425
          %431 = dma.hbm_to_vmem [thread:$0]  %s7, 256, %s426, [#allocation10], 64, 64, 4
        $region40: #{_lambda_.1} parent=11 // pred_fallthru
          _
        // Predicated region
        $region41: #{_lambda_.1} parent=11 // pred_check
          %p432 = pneg %p219
        $region42: #{_lambda_.1} parent=11 // pred_check_branch
          %434 = sbr.rel (%p432) target = $region44
        $region43: #{_lambda_.1} parent=11 // pred_region
          %s436 = ssub.s32 128, 128
          %437 = vsyncadd [#allocation13], %s436
          %s438 = sshll.u32 [#allocation12], 4
          %s439 = int_to_ptr.vmem [resolvable:$true] %s438
          %444 = dma.hbm_to_vmem [thread:$0]  %s8, 128, %s439, [#allocation13], 64, 64, 4
        $region44: #{_lambda_.1} parent=11 // pred_fallthru
          _
        // Predicated region
        $region45: #{_lambda_.1} parent=11 // pred_check
          %p445 = pneg %p240
        $region46: #{_lambda_.1} parent=11 // pred_check_branch
          %447 = sbr.rel (%p445) target = $region48
        $region47: #{_lambda_.1} parent=11 // pred_region
          %s449 = ssub.s32 256, 256
          %450 = vsyncadd [#allocation13], %s449
          %s451 = sshll.u32 [#allocation14], 4
          %s452 = int_to_ptr.vmem [resolvable:$true] %s451
          %457 = dma.hbm_to_vmem [thread:$0]  %s9, 256, %s452, [#allocation13], 128, 128, 8
        $region48: #{_lambda_.1} parent=11 // pred_fallthru
          _
        // Predicated region
        $region49: #{_lambda_.1} parent=11 // pred_check
          %p458 = pneg %p261
        $region50: #{_lambda_.1} parent=11 // pred_check_branch
          %460 = sbr.rel (%p458) target = $region52
        $region51: #{_lambda_.1} parent=11 // pred_region
          %s462 = ssub.s32 32, 32
          %463 = vsyncadd [#allocation16], %s462
          %s465 = sshll.u32 [#allocation15], 4
          %s466 = int_to_ptr.vmem [resolvable:$true] %s465
          %468 = dma.hbm_to_vmem [thread:$0]  %s10, 32, %s466, [#allocation16]
        $region52: #{_lambda_.1} parent=11 // pred_fallthru
          _
        // Predicated region
        $region53: #{_lambda_.1} parent=11 // pred_check
          %p469 = pneg %p282
        $region54: #{_lambda_.1} parent=11 // pred_check_branch
          %471 = sbr.rel (%p469) target = $region56
        $region55: #{_lambda_.1} parent=11 // pred_region
          _
        $region56: #{_lambda_.1} parent=11 // pred_fallthru
          _
        // Predicated region
        $region57: #{_lambda_.1} parent=11 // pred_check
          %p472 = pneg %p303
        $region58: #{_lambda_.1} parent=11 // pred_check_branch
          %474 = sbr.rel (%p472) target = $region60
        $region59: #{_lambda_.1} parent=11 // pred_region
          _
        $region60: #{_lambda_.1} parent=11 // pred_fallthru
          _
        // Predicated region
        $region61: #{_lambda_.1} parent=11 // pred_check
          %p475 = pneg %p324
        $region62: #{_lambda_.1} parent=11 // pred_check_branch
          %477 = sbr.rel (%p475) target = $region64
        $region63: #{_lambda_.1} parent=11 // pred_region
          _
        $region64: #{_lambda_.1} parent=11 // pred_fallthru
          _
      $region12: #{_lambda_.1} parent=5 // pred_fallthru
        _
      %p478 = scmp.lt.s32.totalorder %s25, 2
      // Predicated region
      $region65: #{_lambda_.1} parent=5 // pred_check
        %p479 = pneg %p478
      $region66: #{_lambda_.1} parent=5 // pred_check_branch
        %481 = sbr.rel (%p479) target = $region68
      $region67: #{_lambda_.1} parent=5 // pred_region
        // Predicated region
        $region69: #{_lambda_.1} parent=67 // pred_check
          %p482 = pneg %p45
        $region70: #{_lambda_.1} parent=67 // pred_check_branch
          %484 = sbr.rel (%p482) target = $region72
        $region71: #{_lambda_.1} parent=67 // pred_region
          %p485 = scmp.lt.s32.totalorder %s25, 1
          %s486 = scalar_select %p485, %s25, 1
          %s487 = smul.addr %s486, 5
          %s488 = smul.addr %s487, 8
          %s489 = scalar_lea.vmem %s0, %s488
        $region72: #{_lambda_.1} parent=67 // pred_fallthru
          _
      $region68: #{_lambda_.1} parent=5 // pred_fallthru
        _
      %p490 = scmp.le.s32.totalorder 1, %s25
      %p491 = scmp.lt.s32.totalorder %s25, 3
      %p492 = pnand %p490, %p491
      %p493 = pneg %p492
      // Predicated region
      $region73: #{_lambda_.1} parent=5 // pred_check
        _
      $region74: #{_lambda_.1} parent=5 // pred_check_branch
        %495 = sbr.rel (%p492) target = $region76
      $region75: #{_lambda_.1} parent=5 // pred_region
        %s496 = ssub.s32 %s25, 1
        // Predicated region
        $region77: #{_lambda_.1} parent=75 // pred_check
          %p497 = pneg %p72
        $region78: #{_lambda_.1} parent=75 // pred_check_branch
          %499 = sbr.rel (%p497) target = $region80
        $region79: #{_lambda_.1} parent=75 // pred_region
          %500 = dma.done [#allocation5], 416
        $region80: #{_lambda_.1} parent=75 // pred_fallthru
          _
        // Predicated region
        $region81: #{_lambda_.1} parent=75 // pred_check
          %p501 = pneg %p114
        $region82: #{_lambda_.1} parent=75 // pred_check_branch
          %503 = sbr.rel (%p501) target = $region84
        $region83: #{_lambda_.1} parent=75 // pred_region
          %504 = dma.done [#allocation7], 256
        $region84: #{_lambda_.1} parent=75 // pred_fallthru
          _
        // Predicated region
        $region85: #{_lambda_.1} parent=75 // pred_check
          %p505 = pneg %p135
        $region86: #{_lambda_.1} parent=75 // pred_check_branch
          %507 = sbr.rel (%p505) target = $region88
        $region87: #{_lambda_.1} parent=75 // pred_region
          %508 = dma.done [#allocation7], 192
        $region88: #{_lambda_.1} parent=75 // pred_fallthru
          _
        // Predicated region
        $region89: #{_lambda_.1} parent=75 // pred_check
          %p509 = pneg %p177
        $region90: #{_lambda_.1} parent=75 // pred_check_branch
          %511 = sbr.rel (%p509) target = $region92
        $region91: #{_lambda_.1} parent=75 // pred_region
          %512 = dma.done [#allocation10], 64
        $region92: #{_lambda_.1} parent=75 // pred_fallthru
          _
        // Predicated region
        $region93: #{_lambda_.1} parent=75 // pred_check
          %p513 = pneg %p198
        $region94: #{_lambda_.1} parent=75 // pred_check_branch
          %515 = sbr.rel (%p513) target = $region96
        $region95: #{_lambda_.1} parent=75 // pred_region
          %516 = dma.done [#allocation10], 256
        $region96: #{_lambda_.1} parent=75 // pred_fallthru
          _
        // Predicated region
        $region97: #{_lambda_.1} parent=75 // pred_check
          %p517 = pneg %p219
        $region98: #{_lambda_.1} parent=75 // pred_check_branch
          %519 = sbr.rel (%p517) target = $region100
        $region99: #{_lambda_.1} parent=75 // pred_region
          %520 = dma.done [#allocation13], 128
        $region100: #{_lambda_.1} parent=75 // pred_fallthru
          _
        // Predicated region
        $region101: #{_lambda_.1} parent=75 // pred_check
          %p521 = pneg %p240
        $region102: #{_lambda_.1} parent=75 // pred_check_branch
          %523 = sbr.rel (%p521) target = $region104
        $region103: #{_lambda_.1} parent=75 // pred_region
          %524 = dma.done [#allocation13], 256
        $region104: #{_lambda_.1} parent=75 // pred_fallthru
          _
        // Predicated region
        $region105: #{_lambda_.1} parent=75 // pred_check
          %p525 = pneg %p261
        $region106: #{_lambda_.1} parent=75 // pred_check_branch
          %527 = sbr.rel (%p525) target = $region108
        $region107: #{_lambda_.1} parent=75 // pred_region
          %528 = dma.done [#allocation16], 32
        $region108: #{_lambda_.1} parent=75 // pred_fallthru
          _
        %p529 = scmp.lt.s32.totalorder %s30, 1
        %s530 = scalar_select %p529, %s30, 1
        %s531 = smul.addr %s530, 5
        %s532 = smul.addr %s531, 8
        %s533 = scalar_lea.vmem %s0, %s532
        %p534 = pneg %p51
        %p535 = pneg %p48
        %p536 = pneg %p72
        %p537 = pneg %p69
        %p538 = pneg %p93
        %p539 = pneg %p90
        %p540 = pneg %p114
        %p541 = pneg %p111
        %p542 = pneg %p135
        %p543 = pneg %p132
        %p544 = pneg %p156
        %p545 = pneg %p153
        %p546 = pneg %p177
        %p547 = pneg %p174
        %p548 = pneg %p198
        %p549 = pneg %p195
        %p550 = pneg %p219
        %p551 = pneg %p216
        %p552 = pneg %p240
        %p553 = pneg %p237
        %p554 = pneg %p261
        %p555 = pneg %p258
        %p556 = pneg %p282
        %p557 = pneg %p279
        %p558 = pneg %p303
        %p559 = pneg %p300
        %p560 = pneg %p324
        %p561 = pneg %p321
        %p562 = pneg %p350
        %p563 = pneg %p347
        %p564 = scmp.lt.s32.totalorder %s30, 1
        %s565 = scalar_select %p564, %s30, 1
        %s566 = smul.addr %s565, 5
        %s567 = smul.addr %s566, 8
        %s568 = scalar_lea.vmem %s14, %s567
        %p569 = scmp.lt.s32.totalorder %s30, 1
        %s570 = scalar_select %p569, %s30, 1
        %s571 = smul.addr %s570, 5
        %s572 = smul.addr %s571, 8
        %s573 = scalar_lea.vmem %s0, %s572
        %p574 = scmp.lt.s32.totalorder %s30, 1
        %s575 = scalar_select %p574, %s30, 1
        %s576 = smul.addr %s575, 5
        %s577 = smul.addr %s576, 8
        %s578 = scalar_lea.vmem %s14, %s577
        %v580 = vld [vmem:[%s573] sm:$0xff]
        %v581 = vld [vmem:[%s573 + $0x8] sm:$0xff]
        %v582 = vld [vmem:[%s573 + $0x10] sm:$0xff]
        %v583 = vld [vmem:[%s573 + $0x18] sm:$0xff]
        %v584 = vld [vmem:[%s573 + $0x20] sm:$0xf]
        %v585 = vld [vmem:[#allocation4] sm:$0x1]
        %v586 = vld [vmem:[#allocation4 + $0x1] sm:$0x1]
        %vm587 = vcmask 261120
        %v588 = vsel %vm587, %v580, 0.0
        %589 = vadd.xlane.f32.xlu0 %v588
        %v590 = vpop.xlane.xlu0 %589
        %v591 = vsel %vm587, %v581, 0.0
        %592 = vadd.xlane.f32.xlu0 %v591
        %v593 = vpop.xlane.xlu0 %592
        %v594 = vsel %vm587, %v582, 0.0
        %595 = vadd.xlane.f32.xlu0 %v594
        %v596 = vpop.xlane.xlu0 %595
        %v597 = vsel %vm587, %v583, 0.0
        %598 = vadd.xlane.f32.xlu0 %v597
        %v599 = vpop.xlane.xlu0 %598
        %vm600 = vcmask 257024
        %v601 = vsel %vm600, %v584, 0.0
        %602 = vadd.xlane.f32.xlu0 %v601
        %v603 = vpop.xlane.xlu0 %602
        %v604 = vrcp.pop 32.0
        %v605 = vmul.f32 %v590, %v604
        %v606 = vmul.f32 %v593, %v604
        %v607 = vmul.f32 %v596, %v604
        %v608 = vmul.f32 %v599, %v604
        %v609 = vmul.f32 %v603, %v604
        %v610 = vsub.f32 %v580, %v605
        %v611 = vsub.f32 %v581, %v606
        %v612 = vsub.f32 %v582, %v607
        %v613 = vsub.f32 %v583, %v608
        %v614 = vsub.f32 %v584, %v609
        %v615 = vmul.f32 %v610, %v610
        %v616 = vmul.f32 %v611, %v611
        %v617 = vmul.f32 %v612, %v612
        %v618 = vmul.f32 %v613, %v613
        %v619 = vmul.f32 %v614, %v614
        %v620 = vsel %vm587, %v615, 0.0
        %621 = vadd.xlane.f32.xlu0 %v620
        %v622 = vpop.xlane.xlu0 %621
        %v623 = vsel %vm587, %v616, 0.0
        %624 = vadd.xlane.f32.xlu0 %v623
        %v625 = vpop.xlane.xlu0 %624
        %v626 = vsel %vm587, %v617, 0.0
        %627 = vadd.xlane.f32.xlu0 %v626
        %v628 = vpop.xlane.xlu0 %627
        %v629 = vsel %vm587, %v618, 0.0
        %630 = vadd.xlane.f32.xlu0 %v629
        %v631 = vpop.xlane.xlu0 %630
        %v632 = vsel %vm600, %v619, 0.0
        %633 = vadd.xlane.f32.xlu0 %v632
        %v634 = vpop.xlane.xlu0 %633
        %v635 = vmul.f32 %v622, %v604
        %v636 = vmul.f32 %v625, %v604
        %v637 = vmul.f32 %v628, %v604
        %v638 = vmul.f32 %v631, %v604
        %v639 = vmul.f32 %v634, %v604
        %v640 = vadd.f32 %v635, 1e-05
        %v641 = vadd.f32 %v636, 1e-05
        %v642 = vadd.f32 %v637, 1e-05
        %v643 = vadd.f32 %v638, 1e-05
        %v644 = vadd.f32 %v639, 1e-05
        %v645 = vrsqrt.pop %v640
        %v646 = vrsqrt.pop %v641
        %v647 = vrsqrt.pop %v642
        %v648 = vrsqrt.pop %v643
        %v649 = vrsqrt.pop %v644
        %v650 = vmul.f32 %v610, %v645
        %v651 = vmul.f32 %v611, %v646
        %v652 = vmul.f32 %v612, %v647
        %v653 = vmul.f32 %v613, %v648
        %v654 = vmul.f32 %v614, %v649
        %v656 = vlaneseq
        %v657 = vshrl.u32 %v656, 7
        %v658 = vsub.s32 0, %v657
        %v659 = vrot.slane %v585, %v658
        %v661 = vmul.f32 %v650, %v659
        %v662 = vmul.f32 %v651, %v659
        %v663 = vmul.f32 %v652, %v659
        %v664 = vmul.f32 %v653, %v659
        %v665 = vmul.f32 %v654, %v659
        %v667 = vlaneseq
        %v668 = vshrl.u32 %v667, 7
        %v669 = vsub.s32 0, %v668
        %v670 = vrot.slane %v586, %v669
        %v672 = vadd.f32 %v661, %v670
        %v673 = vadd.f32 %v662, %v670
        %v674 = vadd.f32 %v663, %v670
        %v675 = vadd.f32 %v664, %v670
        %v676 = vadd.f32 %v665, %v670
        %v677 = vld [vmem:[#allocation6] sm:$0xf]
        %v678 = vld [vmem:[#allocation6 + $0x4] sm:$0xf]
        %v679 = vld [vmem:[#allocation6 + $0x8] sm:$0xf]
        %v680 = vld [vmem:[#allocation6 + $0xc] sm:$0xf]
        %v681 = vpack.c.bf16 %v673, %v672
        %v682 = vpack.c.bf16 %v675, %v674
        %v683 = vpack.c.bf16 %v676, %v676
        %v688 = vunpack.c.l.b16 %v677
        %v689 = vunpack.c.l.b16 %v678
        %v690 = vunpack.c.l.b16 %v679
        %v691 = vunpack.c.l.b16 %v680
        %v692 = vpack.c.b16 %v689, %v688
        %v693 = vpack.c.b16 %v691, %v690
        %v697 = vsel %vm587, %v681, 0
        %v700 = vsel %vm587, %v682, 0
        %v703 = vsel %vm587, %v683, 0
        %705 = vmatprep.subr.bf16.mxu0 0
        %706 = vmatpush1.bf16.msra.mxu0 %v692
        %707 = vmatprep.subr.bf16.mxu0 0
        %708 = vmatpush1.bf16.msra.mxu0 %v693
        %709 = vmatprep.subr.bf16.mxu0 0
        %710 = vmatpush1.bf16.msra.mxu0 0
        %711 = vmatprep.subr.bf16.mxu0 0
        %712 = vmatpush1.bf16.msra.mxu0 0
        %713 = vmatprep.subr.bf16.mxu0 0
        %714 = vmatpush1.bf16.msra.mxu0 0
        %715 = vmatprep.subr.bf16.mxu0 0
        %716 = vmatpush1.bf16.msra.mxu0 0
        %717 = vmatprep.subr.bf16.mxu0 0
        %718 = vmatpush1.bf16.msra.mxu0 0
        %719 = vmatprep.subr.bf16.mxu0 0
        %720 = vmatpush1.bf16.msra.mxu0 0
        %721 = vmatprep.subr.bf16.mxu0 0
        %722 = vmatpush1.bf16.msra.mxu0 0
        %723 = vmatprep.subr.bf16.mxu0 0
        %724 = vmatpush1.bf16.msra.mxu0 0
        %725 = vmatprep.subr.bf16.mxu0 0
        %726 = vmatpush1.bf16.msra.mxu0 0
        %727 = vmatprep.subr.bf16.mxu0 0
        %728 = vmatpush1.bf16.msra.mxu0 0
        %729 = vmatprep.subr.bf16.mxu0 0
        %730 = vmatpush1.bf16.msra.mxu0 0
        %731 = vmatprep.subr.bf16.mxu0 0
        %732 = vmatpush1.bf16.msra.mxu0 0
        %733 = vmatprep.subr.bf16.mxu0 0
        %734 = vmatpush1.bf16.msra.mxu0 0
        %735 = vmatprep.subr.bf16.mxu0 0
        %736 = vmatpush1.bf16.msra.mxu0 0
        %737 = vmatprep.mubr.bf16.mxu0 0
        %738 = vmatmul.mubr.bf16.gmra.mrb[0].mxu0 %v697
        %v739 = vpop.f32.mrb[0].mxu0
        %v740 = vadd.f32 0.0, %v739
        %v741 = vpop.f32.mrb[0].mxu0
        %v742 = vpop.f32.mrb[0].mxu0
        %v743 = vadd.f32 0.0, %v742
        %v744 = vpop.f32.mrb[0].mxu0
        %745 = vmatprep.mubr.bf16.mxu0 0
        %746 = vmatmul.mubr.bf16.gmra.mrb[0].mxu0 %v700
        %v747 = vpop.f32.mrb[0].mxu0
        %v748 = vadd.f32 0.0, %v747
        %v749 = vpop.f32.mrb[0].mxu0
        %v750 = vpop.f32.mrb[0].mxu0
        %v751 = vadd.f32 0.0, %v750
        %v752 = vpop.f32.mrb[0].mxu0
        %753 = vmatprep.mubr.bf16.mxu0 0
        %754 = vmatmul.mubr.bf16.gmra.mrb[0].mxu0 %v703
        %v755 = vpop.f32.mrb[0].mxu0
        %v756 = vadd.f32 0.0, %v755
        %v757 = vpop.f32.mrb[0].mxu0
        %v758 = vpop.f32.mrb[0].mxu0
        %v759 = vpop.f32.mrb[0].mxu0
        %760 = vdwg.mxu0
        %v761 = vld [vmem:[#allocation4 + $0x2] sm:$0x1]
        %v763 = vlaneseq
        %v764 = vshrl.u32 %v763, 7
        %v765 = vsub.s32 0, %v764
        %v766 = vrot.slane %v761, %v765
        %v768 = vadd.f32 %v740, %v766
        %v769 = vadd.f32 %v743, %v766
        %v770 = vadd.f32 %v748, %v766
        %v771 = vadd.f32 %v751, %v766
        %v772 = vadd.f32 %v756, %v766
        %v773 = vld [vmem:[#allocation4 + $0x3] sm:$0x1]
        %v774 = vld [vmem:[#allocation4 + $0x4] sm:$0x1]
        %vm775 = vcmask 130048
        %v776 = vsel %vm775, %v768, 0.0
        %777 = vadd.xlane.f32.xlu0 %v776
        %v778 = vpop.xlane.xlu0 %777
        %v779 = vsel %vm775, %v769, 0.0
        %780 = vadd.xlane.f32.xlu0 %v779
        %v781 = vpop.xlane.xlu0 %780
        %v782 = vsel %vm775, %v770, 0.0
        %783 = vadd.xlane.f32.xlu0 %v782
        %v784 = vpop.xlane.xlu0 %783
        %v785 = vsel %vm775, %v771, 0.0
        %786 = vadd.xlane.f32.xlu0 %v785
        %v787 = vpop.xlane.xlu0 %786
        %vm788 = vcmask 125952
        %v789 = vsel %vm788, %v772, 0.0
        %790 = vadd.xlane.f32.xlu0 %v789
        %v791 = vpop.xlane.xlu0 %790
        %v792 = vrcp.pop 16.0
        %v793 = vmul.f32 %v778, %v792
        %v794 = vmul.f32 %v781, %v792
        %v795 = vmul.f32 %v784, %v792
        %v796 = vmul.f32 %v787, %v792
        %v797 = vmul.f32 %v791, %v792
        %v798 = vsub.f32 %v768, %v793
        %v799 = vsub.f32 %v769, %v794
        %v800 = vsub.f32 %v770, %v795
        %v801 = vsub.f32 %v771, %v796
        %v802 = vsub.f32 %v772, %v797
        %v803 = vmul.f32 %v798, %v798
        %v804 = vmul.f32 %v799, %v799
        %v805 = vmul.f32 %v800, %v800
        %v806 = vmul.f32 %v801, %v801
        %v807 = vmul.f32 %v802, %v802
        %v808 = vsel %vm775, %v803, 0.0
        %809 = vadd.xlane.f32.xlu0 %v808
        %v810 = vpop.xlane.xlu0 %809
        %v811 = vsel %vm775, %v804, 0.0
        %812 = vadd.xlane.f32.xlu0 %v811
        %v813 = vpop.xlane.xlu0 %812
        %v814 = vsel %vm775, %v805, 0.0
        %815 = vadd.xlane.f32.xlu0 %v814
        %v816 = vpop.xlane.xlu0 %815
        %v817 = vsel %vm775, %v806, 0.0
        %818 = vadd.xlane.f32.xlu0 %v817
        %v819 = vpop.xlane.xlu0 %818
        %v820 = vsel %vm788, %v807, 0.0
        %821 = vadd.xlane.f32.xlu0 %v820
        %v822 = vpop.xlane.xlu0 %821
        %v823 = vmul.f32 %v810, %v792
        %v824 = vmul.f32 %v813, %v792
        %v825 = vmul.f32 %v816, %v792
        %v826 = vmul.f32 %v819, %v792
        %v827 = vmul.f32 %v822, %v792
        %v828 = vadd.f32 %v823, 1e-05
        %v829 = vadd.f32 %v824, 1e-05
        %v830 = vadd.f32 %v825, 1e-05
        %v831 = vadd.f32 %v826, 1e-05
        %v832 = vadd.f32 %v827, 1e-05
        %v833 = vrsqrt.pop %v828
        %v834 = vrsqrt.pop %v829
        %v835 = vrsqrt.pop %v830
        %v836 = vrsqrt.pop %v831
        %v837 = vrsqrt.pop %v832
        %v838 = vmul.f32 %v798, %v833
        %v839 = vmul.f32 %v799, %v834
        %v840 = vmul.f32 %v800, %v835
        %v841 = vmul.f32 %v801, %v836
        %v842 = vmul.f32 %v802, %v837
        %v844 = vlaneseq
        %v845 = vshrl.u32 %v844, 7
        %v846 = vsub.s32 0, %v845
        %v847 = vrot.slane %v773, %v846
        %v849 = vmul.f32 %v838, %v847
        %v850 = vmul.f32 %v839, %v847
        %v851 = vmul.f32 %v840, %v847
        %v852 = vmul.f32 %v841, %v847
        %v853 = vmul.f32 %v842, %v847
        %v855 = vlaneseq
        %v856 = vshrl.u32 %v855, 7
        %v857 = vsub.s32 0, %v856
        %v858 = vrot.slane %v774, %v857
        %v860 = vadd.f32 %v849, %v858
        %v861 = vadd.f32 %v850, %v858
        %v862 = vadd.f32 %v851, %v858
        %v863 = vadd.f32 %v852, %v858
        %v864 = vadd.f32 %v853, %v858
        %v865 = vld [vmem:[#allocation4 + $0x5] sm:$0x1]
        %v867 = vlaneseq
        %v868 = vshrl.u32 %v867, 7
        %v869 = vsub.s32 0, %v868
        %v870 = vrot.slane %v865, %v869
        %871 = vrot.lane.b32.xlu0 %v870, 16
        %v872 = vpop.permute.xlu0 %871
        %v874 = vadd.f32 %v740, %v872
        %v875 = vadd.f32 %v743, %v872
        %v876 = vadd.f32 %v748, %v872
        %v877 = vadd.f32 %v751, %v872
        %v878 = vadd.f32 %v756, %v872
        %v879 = vld [vmem:[#allocation4 + $0x6] sm:$0x1]
        %v880 = vld [vmem:[#allocation4 + $0x7] sm:$0x1]
        %886 = vrot.lane.b32.xlu0 %v874, 112
        %v887 = vpop.permute.xlu0 %886
        %888 = vrot.lane.b32.xlu0 %v875, 112
        %v889 = vpop.permute.xlu0 %888
        %890 = vrot.lane.b32.xlu0 %v876, 112
        %v891 = vpop.permute.xlu0 %890
        %892 = vrot.lane.b32.xlu0 %v877, 112
        %v893 = vpop.permute.xlu0 %892
        %894 = vrot.lane.b32.xlu0 %v878, 112
        %v895 = vpop.permute.xlu0 %894
        %v901 = vsel %vm587, %v887, 0.0
        %902 = vadd.xlane.f32.xlu0 %v901
        %v903 = vpop.xlane.xlu0 %902
        %v904 = vsel %vm587, %v889, 0.0
        %905 = vadd.xlane.f32.xlu0 %v904
        %v906 = vpop.xlane.xlu0 %905
        %v907 = vsel %vm587, %v891, 0.0
        %908 = vadd.xlane.f32.xlu0 %v907
        %v909 = vpop.xlane.xlu0 %908
        %v910 = vsel %vm587, %v893, 0.0
        %911 = vadd.xlane.f32.xlu0 %v910
        %v912 = vpop.xlane.xlu0 %911
        %v913 = vsel %vm600, %v895, 0.0
        %914 = vadd.xlane.f32.xlu0 %v913
        %v915 = vpop.xlane.xlu0 %914
        %v916 = vmul.f32 %v903, %v604
        %v917 = vmul.f32 %v906, %v604
        %v918 = vmul.f32 %v909, %v604
        %v919 = vmul.f32 %v912, %v604
        %v920 = vmul.f32 %v915, %v604
        %v921 = vsub.f32 %v874, %v916
        %v922 = vsub.f32 %v875, %v917
        %v923 = vsub.f32 %v876, %v918
        %v924 = vsub.f32 %v877, %v919
        %v925 = vsub.f32 %v878, %v920
        %v926 = vmul.f32 %v921, %v921
        %v927 = vmul.f32 %v922, %v922
        %v928 = vmul.f32 %v923, %v923
        %v929 = vmul.f32 %v924, %v924
        %v930 = vmul.f32 %v925, %v925
        %936 = vrot.lane.b32.xlu0 %v926, 112
        %v937 = vpop.permute.xlu0 %936
        %938 = vrot.lane.b32.xlu0 %v927, 112
        %v939 = vpop.permute.xlu0 %938
        %940 = vrot.lane.b32.xlu0 %v928, 112
        %v941 = vpop.permute.xlu0 %940
        %942 = vrot.lane.b32.xlu0 %v929, 112
        %v943 = vpop.permute.xlu0 %942
        %944 = vrot.lane.b32.xlu0 %v930, 112
        %v945 = vpop.permute.xlu0 %944
        %v951 = vsel %vm587, %v937, 0.0
        %952 = vadd.xlane.f32.xlu0 %v951
        %v953 = vpop.xlane.xlu0 %952
        %v954 = vsel %vm587, %v939, 0.0
        %955 = vadd.xlane.f32.xlu0 %v954
        %v956 = vpop.xlane.xlu0 %955
        %v957 = vsel %vm587, %v941, 0.0
        %958 = vadd.xlane.f32.xlu0 %v957
        %v959 = vpop.xlane.xlu0 %958
        %v960 = vsel %vm587, %v943, 0.0
        %961 = vadd.xlane.f32.xlu0 %v960
        %v962 = vpop.xlane.xlu0 %961
        %v963 = vsel %vm600, %v945, 0.0
        %964 = vadd.xlane.f32.xlu0 %v963
        %v965 = vpop.xlane.xlu0 %964
        %v966 = vmul.f32 %v953, %v604
        %v967 = vmul.f32 %v956, %v604
        %v968 = vmul.f32 %v959, %v604
        %v969 = vmul.f32 %v962, %v604
        %v970 = vmul.f32 %v965, %v604
        %v971 = vadd.f32 %v966, 1e-05
        %v972 = vadd.f32 %v967, 1e-05
        %v973 = vadd.f32 %v968, 1e-05
        %v974 = vadd.f32 %v969, 1e-05
        %v975 = vadd.f32 %v970, 1e-05
        %v976 = vrsqrt.pop %v971
        %v977 = vrsqrt.pop %v972
        %v978 = vrsqrt.pop %v973
        %v979 = vrsqrt.pop %v974
        %v980 = vrsqrt.pop %v975
        %v981 = vmul.f32 %v921, %v976
        %v982 = vmul.f32 %v922, %v977
        %v983 = vmul.f32 %v923, %v978
        %v984 = vmul.f32 %v924, %v979
        %v985 = vmul.f32 %v925, %v980
        %v987 = vlaneseq
        %v988 = vshrl.u32 %v987, 7
        %v989 = vsub.s32 0, %v988
        %v990 = vrot.slane %v879, %v989
        %991 = vrot.lane.b32.xlu0 %v990, 16
        %v992 = vpop.permute.xlu0 %991
        %v994 = vmul.f32 %v981, %v992
        %v995 = vmul.f32 %v982, %v992
        %v996 = vmul.f32 %v983, %v992
        %v997 = vmul.f32 %v984, %v992
        %v998 = vmul.f32 %v985, %v992
        %v1000 = vlaneseq
        %v1001 = vshrl.u32 %v1000, 7
        %v1002 = vsub.s32 0, %v1001
        %v1003 = vrot.slane %v880, %v1002
        %1004 = vrot.lane.b32.xlu0 %v1003, 16
        %v1005 = vpop.permute.xlu0 %1004
        %v1007 = vadd.f32 %v994, %v1005
        %v1008 = vadd.f32 %v995, %v1005
        %v1009 = vadd.f32 %v996, %v1005
        %v1010 = vadd.f32 %v997, %v1005
        %v1011 = vadd.f32 %v998, %v1005
        %1012 = vst.msk [vmem:[#allocation2] sm:$0xff] %vm587, 0.0
        %1013 = vst.msk [vmem:[#allocation2 + $0x8] sm:$0xff] %vm587, 0.0
        %1014 = vst.msk [vmem:[#allocation2 + $0x10] sm:$0xff] %vm587, 0.0
        %1015 = vst.msk [vmem:[#allocation2 + $0x18] sm:$0xff] %vm587, 0.0
        %1016 = vst.msk [vmem:[#allocation2 + $0x20] sm:$0xff] %vm587, 0.0
        %1017 = vst.msk [vmem:[#allocation2 + $0x28] sm:$0xff] %vm587, 0.0
        %1018 = vst.msk [vmem:[#allocation2 + $0x30] sm:$0xff] %vm587, 0.0
        %1019 = vst.msk [vmem:[#allocation2 + $0x38] sm:$0xff] %vm587, 0.0
        %1021 = vrot.lane.b32.xlu0 %v1007, 112
        %v1022 = vpop.permute.xlu0 %1021
        %s1024 = scalar_lea.vmem [#allocation2], 8
        %vm1025 = vcmask 259072
        %1026 = vst.msk [vmem:[%s1024 + $0x1] sm:$0x3f] %vm1025, %v1022
        %1028 = vrot.lane.b32.xlu0 %v1008, 112
        %v1029 = vpop.permute.xlu0 %1028
        %s1031 = scalar_lea.vmem [#allocation2], 16
        %vm1032 = vcmask 261126
        %1033 = vst.msk [vmem:[%s1031 - $0x5] sm:$0xc0] %vm1032, %v1022
        %1034 = vst.msk [vmem:[%s1031 + $0x3] sm:$0xf] %vm600, %v1029
        %1036 = vrot.lane.b32.xlu0 %v1009, 112
        %v1037 = vpop.permute.xlu0 %1036
        %s1039 = scalar_lea.vmem [#allocation2], 24
        %vm1040 = vcmask 261124
        %1041 = vst.msk [vmem:[%s1039 - $0x3] sm:$0xf0] %vm1040, %v1029
        %vm1042 = vcmask 254976
        %1043 = vst.msk [vmem:[%s1039 + $0x5] sm:$0x3] %vm1042, %v1037
        %s1044 = scalar_lea.vmem [#allocation2], 32
        %vm1045 = vcmask 261122
        %1046 = vst.msk [vmem:[%s1044 - $0x1] sm:$0xfc] %vm1045, %v1037
        %1048 = vrot.lane.b32.xlu0 %v1010, 112
        %v1049 = vpop.permute.xlu0 %1048
        %s1051 = scalar_lea.vmem [#allocation2], 40
        %1052 = vst.msk [vmem:[%s1051 + $0x1] sm:$0x3f] %vm1025, %v1049
        %1054 = vrot.lane.b32.xlu0 %v1011, 112
        %v1055 = vpop.permute.xlu0 %1054
        %s1057 = scalar_lea.vmem [#allocation2], 48
        %1058 = vst.msk [vmem:[%s1057 - $0x5] sm:$0xc0] %vm1032, %v1049
        %1059 = vst.msk [vmem:[%s1057 + $0x3] sm:$0xf] %vm600, %v1055
        %v1060 = vld [vmem:[#allocation2] sm:$0xff]
        %v1061 = vld [vmem:[#allocation2 + $0x8] sm:$0xff]
        %v1062 = vld [vmem:[#allocation2 + $0x10] sm:$0xff]
        %v1063 = vld [vmem:[#allocation2 + $0x18] sm:$0xff]
        %v1064 = vld [vmem:[#allocation2 + $0x20] sm:$0xff]
        %v1065 = vld [vmem:[#allocation2 + $0x28] sm:$0xff]
        %v1066 = vld [vmem:[#allocation2 + $0x30] sm:$0xff]
        %v1067 = vld [vmem:[#allocation2 + $0x38] sm:$0xff]
        %v1068 = vld [vmem:[#allocation8] sm:$0x7]
        %v1069 = vld [vmem:[#allocation8 + $0x4] sm:$0x7]
        %v1070 = vld [vmem:[#allocation8 + $0x8] sm:$0x7]
        %v1071 = vld [vmem:[#allocation4 + $0x8] sm:$0x1]
        %v1073 = vlaneseq
        %v1074 = vshrl.u32 %v1073, 7
        %v1075 = vsub.s32 0, %v1074
        %v1076 = vrot.slane %v1071, %v1075
        %v1078 = vadd.f32 %v1076, 0.0
        %v1079 = vlaneseq
        %v1080 = vshrl.u32 %v1079, 7
        %v1081 = vsub.s32 0, %v1080
        %v1082 = vrot.slane %v1068, %v1081
        %v1083 = vmul.f32 %v1060, %v1082
        %v1084 = vmul.f32 %v1061, %v1082
        %v1085 = vmul.f32 %v1062, %v1082
        %v1086 = vmul.f32 %v1063, %v1082
        %v1087 = vmul.f32 %v1064, %v1082
        %v1088 = vmul.f32 %v1065, %v1082
        %v1089 = vadd.f32 %v1078, %v1083
        %v1090 = vadd.f32 %v1078, %v1084
        %v1091 = vadd.f32 %v1078, %v1085
        %v1092 = vadd.f32 %v1078, %v1086
        %v1093 = vadd.f32 %v1078, %v1087
        %v1094 = vadd.f32 %v1078, %v1088
        %v1095 = vlaneseq
        %v1096 = vshrl.u32 %v1095, 7
        %v1097 = vsub.s32 1, %v1096
        %v1098 = vrot.slane %v1068, %v1097
        %v1099 = vmul.f32 %v1060, %v1098
        %v1100 = vmul.f32 %v1061, %v1098
        %v1101 = vmul.f32 %v1062, %v1098
        %v1102 = vmul.f32 %v1063, %v1098
        %v1103 = vmul.f32 %v1064, %v1098
        %v1104 = vmul.f32 %v1065, %v1098
        %v1111 = vrot.slane %v1099, 1
        %v1112 = vrot.slane %v1100, 1
        %v1113 = vrot.slane %v1101, 1
        %v1114 = vrot.slane %v1102, 1
        %v1115 = vrot.slane %v1103, 1
        %v1116 = vrot.slane %v1104, 1
        %v1123 = vadd.f32 %v1089, %v1111
        %v1124 = vadd.f32 %v1090, %v1112
        %v1125 = vadd.f32 %v1091, %v1113
        %v1126 = vadd.f32 %v1092, %v1114
        %v1127 = vadd.f32 %v1093, %v1115
        %v1128 = vadd.f32 %v1094, %v1116
        %v1129 = vlaneseq
        %v1130 = vshrl.u32 %v1129, 7
        %v1131 = vsub.s32 2, %v1130
        %v1132 = vrot.slane %v1068, %v1131
        %v1133 = vmul.f32 %v1060, %v1132
        %v1134 = vmul.f32 %v1061, %v1132
        %v1135 = vmul.f32 %v1062, %v1132
        %v1136 = vmul.f32 %v1063, %v1132
        %v1137 = vmul.f32 %v1064, %v1132
        %v1138 = vmul.f32 %v1065, %v1132
        %v1145 = vrot.slane %v1133, 2
        %v1146 = vrot.slane %v1134, 2
        %v1147 = vrot.slane %v1135, 2
        %v1148 = vrot.slane %v1136, 2
        %v1149 = vrot.slane %v1137, 2
        %v1150 = vrot.slane %v1138, 2
        %v1157 = vadd.f32 %v1123, %v1145
        %v1158 = vadd.f32 %v1124, %v1146
        %v1159 = vadd.f32 %v1125, %v1147
        %v1160 = vadd.f32 %v1126, %v1148
        %v1161 = vadd.f32 %v1127, %v1149
        %v1162 = vadd.f32 %v1128, %v1150
        %v1163 = vlaneseq
        %v1164 = vshrl.u32 %v1163, 7
        %v1165 = vsub.s32 0, %v1164
        %v1166 = vrot.slane %v1069, %v1165
        %v1167 = vmul.f32 %v1061, %v1166
        %v1168 = vmul.f32 %v1062, %v1166
        %v1169 = vmul.f32 %v1063, %v1166
        %v1170 = vmul.f32 %v1064, %v1166
        %v1171 = vmul.f32 %v1065, %v1166
        %v1172 = vmul.f32 %v1066, %v1166
        %v1173 = vadd.f32 %v1157, %v1167
        %v1174 = vadd.f32 %v1158, %v1168
        %v1175 = vadd.f32 %v1159, %v1169
        %v1176 = vadd.f32 %v1160, %v1170
        %v1177 = vadd.f32 %v1161, %v1171
        %v1178 = vadd.f32 %v1162, %v1172
        %v1179 = vlaneseq
        %v1180 = vshrl.u32 %v1179, 7
        %v1181 = vsub.s32 1, %v1180
        %v1182 = vrot.slane %v1069, %v1181
        %v1183 = vmul.f32 %v1061, %v1182
        %v1184 = vmul.f32 %v1062, %v1182
        %v1185 = vmul.f32 %v1063, %v1182
        %v1186 = vmul.f32 %v1064, %v1182
        %v1187 = vmul.f32 %v1065, %v1182
        %v1188 = vmul.f32 %v1066, %v1182
        %v1195 = vrot.slane %v1183, 1
        %v1196 = vrot.slane %v1184, 1
        %v1197 = vrot.slane %v1185, 1
        %v1198 = vrot.slane %v1186, 1
        %v1199 = vrot.slane %v1187, 1
        %v1200 = vrot.slane %v1188, 1
        %v1207 = vadd.f32 %v1173, %v1195
        %v1208 = vadd.f32 %v1174, %v1196
        %v1209 = vadd.f32 %v1175, %v1197
        %v1210 = vadd.f32 %v1176, %v1198
        %v1211 = vadd.f32 %v1177, %v1199
        %v1212 = vadd.f32 %v1178, %v1200
        %v1213 = vlaneseq
        %v1214 = vshrl.u32 %v1213, 7
        %v1215 = vsub.s32 2, %v1214
        %v1216 = vrot.slane %v1069, %v1215
        %v1217 = vmul.f32 %v1061, %v1216
        %v1218 = vmul.f32 %v1062, %v1216
        %v1219 = vmul.f32 %v1063, %v1216
        %v1220 = vmul.f32 %v1064, %v1216
        %v1221 = vmul.f32 %v1065, %v1216
        %v1222 = vmul.f32 %v1066, %v1216
        %v1229 = vrot.slane %v1217, 2
        %v1230 = vrot.slane %v1218, 2
        %v1231 = vrot.slane %v1219, 2
        %v1232 = vrot.slane %v1220, 2
        %v1233 = vrot.slane %v1221, 2
        %v1234 = vrot.slane %v1222, 2
        %v1241 = vadd.f32 %v1207, %v1229
        %v1242 = vadd.f32 %v1208, %v1230
        %v1243 = vadd.f32 %v1209, %v1231
        %v1244 = vadd.f32 %v1210, %v1232
        %v1245 = vadd.f32 %v1211, %v1233
        %v1246 = vadd.f32 %v1212, %v1234
        %v1247 = vlaneseq
        %v1248 = vshrl.u32 %v1247, 7
        %v1249 = vsub.s32 0, %v1248
        %v1250 = vrot.slane %v1070, %v1249
        %v1251 = vmul.f32 %v1062, %v1250
        %v1252 = vmul.f32 %v1063, %v1250
        %v1253 = vmul.f32 %v1064, %v1250
        %v1254 = vmul.f32 %v1065, %v1250
        %v1255 = vmul.f32 %v1066, %v1250
        %v1256 = vmul.f32 %v1067, %v1250
        %v1257 = vadd.f32 %v1241, %v1251
        %v1258 = vadd.f32 %v1242, %v1252
        %v1259 = vadd.f32 %v1243, %v1253
        %v1260 = vadd.f32 %v1244, %v1254
        %v1261 = vadd.f32 %v1245, %v1255
        %v1262 = vadd.f32 %v1246, %v1256
        %v1263 = vlaneseq
        %v1264 = vshrl.u32 %v1263, 7
        %v1265 = vsub.s32 1, %v1264
        %v1266 = vrot.slane %v1070, %v1265
        %v1267 = vmul.f32 %v1062, %v1266
        %v1268 = vmul.f32 %v1063, %v1266
        %v1269 = vmul.f32 %v1064, %v1266
        %v1270 = vmul.f32 %v1065, %v1266
        %v1271 = vmul.f32 %v1066, %v1266
        %v1272 = vmul.f32 %v1067, %v1266
        %v1279 = vrot.slane %v1267, 1
        %v1280 = vrot.slane %v1268, 1
        %v1281 = vrot.slane %v1269, 1
        %v1282 = vrot.slane %v1270, 1
        %v1283 = vrot.slane %v1271, 1
        %v1284 = vrot.slane %v1272, 1
        %v1291 = vadd.f32 %v1257, %v1279
        %v1292 = vadd.f32 %v1258, %v1280
        %v1293 = vadd.f32 %v1259, %v1281
        %v1294 = vadd.f32 %v1260, %v1282
        %v1295 = vadd.f32 %v1261, %v1283
        %v1296 = vadd.f32 %v1262, %v1284
        %v1297 = vlaneseq
        %v1298 = vshrl.u32 %v1297, 7
        %v1299 = vsub.s32 2, %v1298
        %v1300 = vrot.slane %v1070, %v1299
        %v1301 = vmul.f32 %v1062, %v1300
        %v1302 = vmul.f32 %v1063, %v1300
        %v1303 = vmul.f32 %v1064, %v1300
        %v1304 = vmul.f32 %v1065, %v1300
        %v1305 = vmul.f32 %v1066, %v1300
        %v1306 = vmul.f32 %v1067, %v1300
        %v1313 = vrot.slane %v1301, 2
        %v1314 = vrot.slane %v1302, 2
        %v1315 = vrot.slane %v1303, 2
        %v1316 = vrot.slane %v1304, 2
        %v1317 = vrot.slane %v1305, 2
        %v1318 = vrot.slane %v1306, 2
        %v1325 = vadd.f32 %v1291, %v1313
        %v1326 = vadd.f32 %v1292, %v1314
        %v1327 = vadd.f32 %v1293, %v1315
        %v1328 = vadd.f32 %v1294, %v1316
        %v1329 = vadd.f32 %v1295, %v1317
        %v1330 = vadd.f32 %v1296, %v1318
        %v1331 = vld [vmem:[#allocation4 + $0x9] sm:$0x1]
        %v1333 = vlaneseq
        %v1334 = vshrl.u32 %v1333, 7
        %v1335 = vsub.s32 0, %v1334
        %v1336 = vrot.slane %v1331, %v1335
        %v1338 = vmul.f32 %v1325, %v1336
        %v1339 = vmul.f32 %v1326, %v1336
        %v1340 = vmul.f32 %v1327, %v1336
        %v1341 = vmul.f32 %v1328, %v1336
        %v1342 = vmul.f32 %v1329, %v1336
        %v1343 = vmul.f32 %v1330, %v1336
        %v1344 = vld [vmem:[#allocation4 + $0xa] sm:$0x1]
        %v1346 = vlaneseq
        %v1347 = vshrl.u32 %v1346, 7
        %v1348 = vsub.s32 0, %v1347
        %v1349 = vrot.slane %v1344, %v1348
        %v1351 = vadd.f32 %v1338, %v1349
        %v1352 = vadd.f32 %v1339, %v1349
        %v1353 = vadd.f32 %v1340, %v1349
        %v1354 = vadd.f32 %v1341, %v1349
        %v1355 = vadd.f32 %v1342, %v1349
        %v1356 = vadd.f32 %v1343, %v1349
        %v1357 = vmul.f32 %v1351, 0.5
        %v1358 = vmul.f32 %v1352, 0.5
        %v1359 = vmul.f32 %v1353, 0.5
        %v1360 = vmul.f32 %v1354, 0.5
        %v1361 = vmul.f32 %v1355, 0.5
        %v1362 = vmul.f32 %v1356, 0.5
        %v1363 = vmul.f32 %v1351, 0.044715
        %v1364 = vmul.f32 %v1352, 0.044715
        %v1365 = vmul.f32 %v1353, 0.044715
        %v1366 = vmul.f32 %v1354, 0.044715
        %v1367 = vmul.f32 %v1355, 0.044715
        %v1368 = vmul.f32 %v1356, 0.044715
        %v1369 = vmul.f32 %v1363, %v1351
        %v1370 = vmul.f32 %v1364, %v1352
        %v1371 = vmul.f32 %v1365, %v1353
        %v1372 = vmul.f32 %v1366, %v1354
        %v1373 = vmul.f32 %v1367, %v1355
        %v1374 = vmul.f32 %v1368, %v1356
        %v1375 = vmul.f32 %v1369, %v1351
        %v1376 = vmul.f32 %v1370, %v1352
        %v1377 = vmul.f32 %v1371, %v1353
        %v1378 = vmul.f32 %v1372, %v1354
        %v1379 = vmul.f32 %v1373, %v1355
        %v1380 = vmul.f32 %v1374, %v1356
        %v1381 = vadd.f32 %v1351, %v1375
        %v1382 = vadd.f32 %v1352, %v1376
        %v1383 = vadd.f32 %v1353, %v1377
        %v1384 = vadd.f32 %v1354, %v1378
        %v1385 = vadd.f32 %v1355, %v1379
        %v1386 = vadd.f32 %v1356, %v1380
        %v1387 = vmul.f32 %v1381, 0.7978846
        %v1388 = vmul.f32 %v1382, 0.7978846
        %v1389 = vmul.f32 %v1383, 0.7978846
        %v1390 = vmul.f32 %v1384, 0.7978846
        %v1391 = vmul.f32 %v1385, 0.7978846
        %v1392 = vmul.f32 %v1386, 0.7978846
        %v1393 = vtanh.pop %v1387
        %v1394 = vtanh.pop %v1388
        %v1395 = vtanh.pop %v1389
        %v1396 = vtanh.pop %v1390
        %v1397 = vtanh.pop %v1391
        %v1398 = vtanh.pop %v1392
        %v1399 = vadd.f32 %v1393, 1.0
        %v1400 = vadd.f32 %v1394, 1.0
        %v1401 = vadd.f32 %v1395, 1.0
        %v1402 = vadd.f32 %v1396, 1.0
        %v1403 = vadd.f32 %v1397, 1.0
        %v1404 = vadd.f32 %v1398, 1.0
        %v1405 = vmul.f32 %v1357, %v1399
        %v1406 = vmul.f32 %v1358, %v1400
        %v1407 = vmul.f32 %v1359, %v1401
        %v1408 = vmul.f32 %v1360, %v1402
        %v1409 = vmul.f32 %v1361, %v1403
        %v1410 = vmul.f32 %v1362, %v1404
        %1411 = vst.msk [vmem:[#allocation3] sm:$0x3f] %vm1025, %v1405
        %1412 = vst.msk [vmem:[#allocation3 + $0x6] sm:$0x3f] %vm1025, %v1406
        %1413 = vst.msk [vmem:[#allocation3 + $0xc] sm:$0x3f] %vm1025, %v1407
        %1414 = vst.msk [vmem:[#allocation3 + $0x12] sm:$0x3f] %vm1025, %v1408
        %1415 = vst.msk [vmem:[#allocation3 + $0x18] sm:$0x3f] %vm1025, %v1409
        %1416 = vst.msk [vmem:[#allocation3 + $0x1e] sm:$0x3f] %vm1025, %v1410
        %v1417 = vld [vmem:[#allocation3] sm:$0xff]
        %v1418 = vld [vmem:[#allocation3 + $0x8] sm:$0xff]
        %v1419 = vld [vmem:[#allocation3 + $0x10] sm:$0xff]
        %v1420 = vld [vmem:[#allocation3 + $0x18] sm:$0xff]
        %v1421 = vld [vmem:[#allocation3 + $0x20] sm:$0xf]
        %v1422 = vsel %vm587, %v1417, 0.0
        %v1423 = vsel %vm587, %v1418, 0.0
        %v1424 = vadd.f32 %v1422, %v1423
        %v1425 = vsel %vm587, %v1419, 0.0
        %v1426 = vadd.f32 %v1424, %v1425
        %v1427 = vsel %vm587, %v1420, 0.0
        %v1428 = vadd.f32 %v1426, %v1427
        %v1429 = vsel %vm600, %v1421, 0.0
        %v1430 = vadd.f32 %v1428, %v1429
        %v1431 = vrot.slane %v1430, 4
        %v1432 = vadd.f32 %v1430, %v1431
        %v1433 = vrot.slane %v1432, 2
        %v1434 = vadd.f32 %v1432, %v1433
        %v1435 = vrot.slane %v1434, 1
        %v1436 = vadd.f32 %v1434, %v1435
        %v1437 = vmul.f32 %v1436, 0.027777778
        %v1438 = vld [vmem:[%s5] sm:$0xff]
        %v1439 = vld [vmem:[%s5 + $0x8] sm:$0xff]
        %v1440 = vld [vmem:[%s5 + $0x10] sm:$0xff]
        %v1441 = vld [vmem:[%s5 + $0x18] sm:$0xff]
        %v1442 = vld [vmem:[#allocation4 + $0xb] sm:$0x1]
        %v1444 = vsel %vm587, %v1437, 0
        %1446 = vmatprep.subr.mxu0 0.0
        %1447 = vmatpush1.msra.mxu0 %v1438
        %1448 = vmatprep.subr.mxu0 0.0
        %1449 = vmatpush1.msra.mxu0 %v1439
        %1450 = vmatprep.subr.mxu0 0.0
        %1451 = vmatpush1.msra.mxu0 %v1440
        %1452 = vmatprep.subr.mxu0 0.0
        %1453 = vmatpush1.msra.mxu0 %v1441
        %1454 = vmatprep.subr.mxu0 0.0
        %1455 = vmatpush1.msra.mxu0 0.0
        %1456 = vmatprep.subr.mxu0 0.0
        %1457 = vmatpush1.msra.mxu0 0.0
        %1458 = vmatprep.subr.mxu0 0.0
        %1459 = vmatpush1.msra.mxu0 0.0
        %1460 = vmatprep.subr.mxu0 0.0
        %1461 = vmatpush1.msra.mxu0 0.0
        %1462 = vmatprep.subr.mxu0 0.0
        %1463 = vmatpush1.msra.mxu0 0.0
        %1464 = vmatprep.subr.mxu0 0.0
        %1465 = vmatpush1.msra.mxu0 0.0
        %1466 = vmatprep.subr.mxu0 0.0
        %1467 = vmatpush1.msra.mxu0 0.0
        %1468 = vmatprep.subr.mxu0 0.0
        %1469 = vmatpush1.msra.mxu0 0.0
        %1470 = vmatprep.subr.mxu0 0.0
        %1471 = vmatpush1.msra.mxu0 0.0
        %1472 = vmatprep.subr.mxu0 0.0
        %1473 = vmatpush1.msra.mxu0 0.0
        %1474 = vmatprep.subr.mxu0 0.0
        %1475 = vmatpush1.msra.mxu0 0.0
        %1476 = vmatprep.subr.mxu0 0.0
        %1477 = vmatpush1.msra.mxu0 0.0
        %1478 = vmatprep.subr.mxu0 0.0
        %1479 = vmatpush1.msra.mxu0 0.0
        %1480 = vmatprep.subr.mxu0 0.0
        %1481 = vmatpush1.msra.mxu0 0.0
        %1482 = vmatprep.subr.mxu0 0.0
        %1483 = vmatpush1.msra.mxu0 0.0
        %1484 = vmatprep.subr.mxu0 0.0
        %1485 = vmatpush1.msra.mxu0 0.0
        %1486 = vmatprep.subr.mxu0 0.0
        %1487 = vmatpush1.msra.mxu0 0.0
        %1488 = vmatprep.subr.mxu0 0.0
        %1489 = vmatpush1.msra.mxu0 0.0
        %1490 = vmatprep.subr.mxu0 0.0
        %1491 = vmatpush1.msra.mxu0 0.0
        %1492 = vmatprep.subr.mxu0 0.0
        %1493 = vmatpush1.msra.mxu0 0.0
        %1494 = vmatprep.subr.mxu0 0.0
        %1495 = vmatpush1.msra.mxu0 0.0
        %1496 = vmatprep.subr.mxu0 0.0
        %1497 = vmatpush1.msra.mxu0 0.0
        %1498 = vmatprep.subr.mxu0 0.0
        %1499 = vmatpush1.msra.mxu0 0.0
        %1500 = vmatprep.subr.mxu0 0.0
        %1501 = vmatpush1.msra.mxu0 0.0
        %1502 = vmatprep.subr.mxu0 0.0
        %1503 = vmatpush1.msra.mxu0 0.0
        %1504 = vmatprep.subr.mxu0 0.0
        %1505 = vmatpush1.msra.mxu0 0.0
        %1506 = vmatprep.subr.mxu0 0.0
        %1507 = vmatpush1.msra.mxu0 0.0
        %1508 = vmatprep.subr.mxu0 0.0
        %1509 = vmatpush1.msra.mxu0 0.0
        %1510 = vmatprep.mubr.f32.mxu0 0.0
        %1511 = vmatmul.mubr.f32.gmra.mrb[0].mxu0 %v1444
        %v1512 = vpop.f32.mrb[0].mxu0
        %v1513 = vadd.f32 %v1442, %v1512
        %v1514 = vpop.f32.mrb[0].mxu0
        %1515 = vdwg.mxu0
        %v1516 = vmul.f32 %v1513, 0.5
        %v1517 = vmul.f32 %v1513, 0.044715
        %v1518 = vmul.f32 %v1517, %v1513
        %v1519 = vmul.f32 %v1518, %v1513
        %v1520 = vadd.f32 %v1513, %v1519
        %v1521 = vmul.f32 %v1520, 0.7978846
        %v1522 = vtanh.pop %v1521
        %v1523 = vadd.f32 %v1522, 1.0
        %v1524 = vmul.f32 %v1516, %v1523
        %v1525 = vld [vmem:[#allocation9] sm:$0xf]
        %v1526 = vld [vmem:[#allocation4 + $0xc] sm:$0x1]
        %vm1527 = vcmask 31744
        %v1529 = vsel %vm1527, %v1524, 0
        %vm1531 = vcmask 1043456
        %v1533 = vsel %vm1531, %v1525, 0
        %1535 = vmatprep.subr.mxu0 0.0
        %1536 = vmatpush1.msra.mxu0 %v1533
        %1537 = vmatprep.subr.mxu0 0.0
        %1538 = vmatpush1.msra.mxu0 0.0
        %1539 = vmatprep.subr.mxu0 0.0
        %1540 = vmatpush1.msra.mxu0 0.0
        %1541 = vmatprep.subr.mxu0 0.0
        %1542 = vmatpush1.msra.mxu0 0.0
        %1543 = vmatprep.subr.mxu0 0.0
        %1544 = vmatpush1.msra.mxu0 0.0
        %1545 = vmatprep.subr.mxu0 0.0
        %1546 = vmatpush1.msra.mxu0 0.0
        %1547 = vmatprep.subr.mxu0 0.0
        %1548 = vmatpush1.msra.mxu0 0.0
        %1549 = vmatprep.subr.mxu0 0.0
        %1550 = vmatpush1.msra.mxu0 0.0
        %1551 = vmatprep.subr.mxu0 0.0
        %1552 = vmatpush1.msra.mxu0 0.0
        %1553 = vmatprep.subr.mxu0 0.0
        %1554 = vmatpush1.msra.mxu0 0.0
        %1555 = vmatprep.subr.mxu0 0.0
        %1556 = vmatpush1.msra.mxu0 0.0
        %1557 = vmatprep.subr.mxu0 0.0
        %1558 = vmatpush1.msra.mxu0 0.0
        %1559 = vmatprep.subr.mxu0 0.0
        %1560 = vmatpush1.msra.mxu0 0.0
        %1561 = vmatprep.subr.mxu0 0.0
        %1562 = vmatpush1.msra.mxu0 0.0
        %1563 = vmatprep.subr.mxu0 0.0
        %1564 = vmatpush1.msra.mxu0 0.0
        %1565 = vmatprep.subr.mxu0 0.0
        %1566 = vmatpush1.msra.mxu0 0.0
        %1567 = vmatprep.subr.mxu0 0.0
        %1568 = vmatpush1.msra.mxu0 0.0
        %1569 = vmatprep.subr.mxu0 0.0
        %1570 = vmatpush1.msra.mxu0 0.0
        %1571 = vmatprep.subr.mxu0 0.0
        %1572 = vmatpush1.msra.mxu0 0.0
        %1573 = vmatprep.subr.mxu0 0.0
        %1574 = vmatpush1.msra.mxu0 0.0
        %1575 = vmatprep.subr.mxu0 0.0
        %1576 = vmatpush1.msra.mxu0 0.0
        %1577 = vmatprep.subr.mxu0 0.0
        %1578 = vmatpush1.msra.mxu0 0.0
        %1579 = vmatprep.subr.mxu0 0.0
        %1580 = vmatpush1.msra.mxu0 0.0
        %1581 = vmatprep.subr.mxu0 0.0
        %1582 = vmatpush1.msra.mxu0 0.0
        %1583 = vmatprep.subr.mxu0 0.0
        %1584 = vmatpush1.msra.mxu0 0.0
        %1585 = vmatprep.subr.mxu0 0.0
        %1586 = vmatpush1.msra.mxu0 0.0
        %1587 = vmatprep.subr.mxu0 0.0
        %1588 = vmatpush1.msra.mxu0 0.0
        %1589 = vmatprep.subr.mxu0 0.0
        %1590 = vmatpush1.msra.mxu0 0.0
        %1591 = vmatprep.subr.mxu0 0.0
        %1592 = vmatpush1.msra.mxu0 0.0
        %1593 = vmatprep.subr.mxu0 0.0
        %1594 = vmatpush1.msra.mxu0 0.0
        %1595 = vmatprep.subr.mxu0 0.0
        %1596 = vmatpush1.msra.mxu0 0.0
        %1597 = vmatprep.subr.mxu0 0.0
        %1598 = vmatpush1.msra.mxu0 0.0
        %1599 = vmatprep.mubr.f32.mxu0 0.0
        %1600 = vmatmul.mubr.f32.gmra.mrb[0].mxu0 %v1529
        %v1601 = vpop.f32.mrb[0].mxu0
        %v1602 = vadd.f32 %v1526, %v1601
        %v1603 = vpop.f32.mrb[0].mxu0
        %1604 = vdwg.mxu0
        %v1605 = vxor.u32 %v1602, 2147483648
        %v1606 = vmul.f32 %v1605, 1.442695
        %v1607 = vpow.pop %v1606
        %v1608 = vadd.f32 %v1607, 1.0
        %v1609 = vrcp.pop %v1608
        %v1610 = vmul.f32 1.0, %v1609
        %v1611 = vld [vmem:[#allocation11] sm:$0xf]
        %v1612 = vld [vmem:[#allocation11 + $0x4] sm:$0xf]
        %v1613 = vld [vmem:[#allocation11 + $0x8] sm:$0xf]
        %v1614 = vld [vmem:[#allocation11 + $0xc] sm:$0xf]
        %v1615 = vpack.c.bf16 %v1418, %v1417
        %v1616 = vpack.c.bf16 %v1420, %v1419
        %v1617 = vpack.c.bf16 %v1421, %v1421
        %v1618 = vld [vmem:[#allocation4 + $0xd] sm:$0x1]
        %v1620 = vlaneseq
        %v1621 = vshrl.u32 %v1620, 7
        %v1622 = vsub.s32 0, %v1621
        %v1623 = vrot.slane %v1618, %v1622
        %v1629 = vunpack.c.l.b16 %v1611
        %v1630 = vunpack.c.l.b16 %v1612
        %v1631 = vunpack.c.l.b16 %v1613
        %v1632 = vunpack.c.l.b16 %v1614
        %v1633 = vpack.c.b16 %v1630, %v1629
        %v1634 = vpack.c.b16 %v1632, %v1631
        %v1638 = vsel %vm587, %v1615, 0
        %v1641 = vsel %vm587, %v1616, 0
        %v1644 = vsel %vm587, %v1617, 0
        %1646 = vmatprep.subr.bf16.mxu0 0
        %1647 = vmatpush1.bf16.msra.mxu0 %v1633
        %1648 = vmatprep.subr.bf16.mxu0 0
        %1649 = vmatpush1.bf16.msra.mxu0 %v1634
        %1650 = vmatprep.subr.bf16.mxu0 0
        %1651 = vmatpush1.bf16.msra.mxu0 0
        %1652 = vmatprep.subr.bf16.mxu0 0
        %1653 = vmatpush1.bf16.msra.mxu0 0
        %1654 = vmatprep.subr.bf16.mxu0 0
        %1655 = vmatpush1.bf16.msra.mxu0 0
        %1656 = vmatprep.subr.bf16.mxu0 0
        %1657 = vmatpush1.bf16.msra.mxu0 0
        %1658 = vmatprep.subr.bf16.mxu0 0
        %1659 = vmatpush1.bf16.msra.mxu0 0
        %1660 = vmatprep.subr.bf16.mxu0 0
        %1661 = vmatpush1.bf16.msra.mxu0 0
        %1662 = vmatprep.subr.bf16.mxu0 0
        %1663 = vmatpush1.bf16.msra.mxu0 0
        %1664 = vmatprep.subr.bf16.mxu0 0
        %1665 = vmatpush1.bf16.msra.mxu0 0
        %1666 = vmatprep.subr.bf16.mxu0 0
        %1667 = vmatpush1.bf16.msra.mxu0 0
        %1668 = vmatprep.subr.bf16.mxu0 0
        %1669 = vmatpush1.bf16.msra.mxu0 0
        %1670 = vmatprep.subr.bf16.mxu0 0
        %1671 = vmatpush1.bf16.msra.mxu0 0
        %1672 = vmatprep.subr.bf16.mxu0 0
        %1673 = vmatpush1.bf16.msra.mxu0 0
        %1674 = vmatprep.subr.bf16.mxu0 0
        %1675 = vmatpush1.bf16.msra.mxu0 0
        %1676 = vmatprep.subr.bf16.mxu0 0
        %1677 = vmatpush1.bf16.msra.mxu0 0
        %1678 = vmatprep.mubr.bf16.mxu0 0
        %1679 = vmatmul.mubr.bf16.gmra.mrb[0].mxu0 %v1638
        %v1680 = vpop.f32.mrb[0].mxu0
        %v1681 = vadd.f32 %v1623, %v1680
        %v1682 = vpop.f32.mrb[0].mxu0
        %v1683 = vpop.f32.mrb[0].mxu0
        %v1684 = vadd.f32 %v1623, %v1683
        %v1685 = vpop.f32.mrb[0].mxu0
        %1686 = vmatprep.mubr.bf16.mxu0 0
        %1687 = vmatmul.mubr.bf16.gmra.mrb[0].mxu0 %v1641
        %v1688 = vpop.f32.mrb[0].mxu0
        %v1689 = vadd.f32 %v1623, %v1688
        %v1690 = vpop.f32.mrb[0].mxu0
        %v1691 = vpop.f32.mrb[0].mxu0
        %v1692 = vadd.f32 %v1623, %v1691
        %v1693 = vpop.f32.mrb[0].mxu0
        %1694 = vmatprep.mubr.bf16.mxu0 0
        %1695 = vmatmul.mubr.bf16.gmra.mrb[0].mxu0 %v1644
        %v1696 = vpop.f32.mrb[0].mxu0
        %v1697 = vadd.f32 %v1623, %v1696
        %v1698 = vpop.f32.mrb[0].mxu0
        %v1699 = vpop.f32.mrb[0].mxu0
        %v1700 = vpop.f32.mrb[0].mxu0
        %1701 = vdwg.mxu0
        %v1702 = vld [vmem:[#allocation12] sm:$0xf]
        %v1703 = vld [vmem:[#allocation12 + $0x4] sm:$0xf]
        %v1704 = vpack.c.bf16 %v861, %v860
        %v1705 = vpack.c.bf16 %v863, %v862
        %v1706 = vpack.c.bf16 %v864, %v864
        %v1707 = vld [vmem:[#allocation4 + $0x10] sm:$0x1]
        %v1709 = vlaneseq
        %v1710 = vshrl.u32 %v1709, 7
        %v1711 = vsub.s32 0, %v1710
        %v1712 = vrot.slane %v1707, %v1711
        %v1716 = vunpack.c.l.b16 %v1702
        %v1717 = vunpack.c.l.b16 %v1703
        %v1718 = vpack.c.b16 %v1717, %v1716
        %v1721 = vsel %vm775, %v1704, 0
        %v1724 = vsel %vm775, %v1705, 0
        %v1727 = vsel %vm775, %v1706, 0
        %1729 = vmatprep.subr.bf16.mxu0 0
        %1730 = vmatpush1.bf16.msra.mxu0 %v1718
        %1731 = vmatprep.subr.bf16.mxu0 0
        %1732 = vmatpush1.bf16.msra.mxu0 0
        %1733 = vmatprep.subr.bf16.mxu0 0
        %1734 = vmatpush1.bf16.msra.mxu0 0
        %1735 = vmatprep.subr.bf16.mxu0 0
        %1736 = vmatpush1.bf16.msra.mxu0 0
        %1737 = vmatprep.subr.bf16.mxu0 0
        %1738 = vmatpush1.bf16.msra.mxu0 0
        %1739 = vmatprep.subr.bf16.mxu0 0
        %1740 = vmatpush1.bf16.msra.mxu0 0
        %1741 = vmatprep.subr.bf16.mxu0 0
        %1742 = vmatpush1.bf16.msra.mxu0 0
        %1743 = vmatprep.subr.bf16.mxu0 0
        %1744 = vmatpush1.bf16.msra.mxu0 0
        %1745 = vmatprep.subr.bf16.mxu0 0
        %1746 = vmatpush1.bf16.msra.mxu0 0
        %1747 = vmatprep.subr.bf16.mxu0 0
        %1748 = vmatpush1.bf16.msra.mxu0 0
        %1749 = vmatprep.subr.bf16.mxu0 0
        %1750 = vmatpush1.bf16.msra.mxu0 0
        %1751 = vmatprep.subr.bf16.mxu0 0
        %1752 = vmatpush1.bf16.msra.mxu0 0
        %1753 = vmatprep.subr.bf16.mxu0 0
        %1754 = vmatpush1.bf16.msra.mxu0 0
        %1755 = vmatprep.subr.bf16.mxu0 0
        %1756 = vmatpush1.bf16.msra.mxu0 0
        %1757 = vmatprep.subr.bf16.mxu0 0
        %1758 = vmatpush1.bf16.msra.mxu0 0
        %1759 = vmatprep.subr.bf16.mxu0 0
        %1760 = vmatpush1.bf16.msra.mxu0 0
        %1761 = vmatprep.mubr.bf16.mxu0 0
        %1762 = vmatmul.mubr.bf16.gmra.mrb[0].mxu0 %v1721
        %v1763 = vpop.f32.mrb[0].mxu0
        %v1764 = vadd.f32 %v1712, %v1763
        %v1765 = vpop.f32.mrb[0].mxu0
        %v1766 = vpop.f32.mrb[0].mxu0
        %v1767 = vadd.f32 %v1712, %v1766
        %v1768 = vpop.f32.mrb[0].mxu0
        %1769 = vmatprep.mubr.bf16.mxu0 0
        %1770 = vmatmul.mubr.bf16.gmra.mrb[0].mxu0 %v1724
        %v1771 = vpop.f32.mrb[0].mxu0
        %v1772 = vadd.f32 %v1712, %v1771
        %v1773 = vpop.f32.mrb[0].mxu0
        %v1774 = vpop.f32.mrb[0].mxu0
        %v1775 = vadd.f32 %v1712, %v1774
        %v1776 = vpop.f32.mrb[0].mxu0
        %1777 = vmatprep.mubr.bf16.mxu0 0
        %1778 = vmatmul.mubr.bf16.gmra.mrb[0].mxu0 %v1727
        %v1779 = vpop.f32.mrb[0].mxu0
        %v1780 = vadd.f32 %v1712, %v1779
        %v1781 = vpop.f32.mrb[0].mxu0
        %v1782 = vpop.f32.mrb[0].mxu0
        %v1783 = vpop.f32.mrb[0].mxu0
        %1784 = vdwg.mxu0
        %v1785 = vmul.f32 %v1764, 0.35355338
        %v1786 = vmul.f32 %v1767, 0.35355338
        %v1787 = vmul.f32 %v1772, 0.35355338
        %v1788 = vmul.f32 %v1775, 0.35355338
        %v1789 = vmul.f32 %v1780, 0.35355338
        %1795 = vrot.lane.b32.xlu0 %v1764, 112
        %v1796 = vpop.permute.xlu0 %1795
        %1797 = vrot.lane.b32.xlu0 %v1767, 112
        %v1798 = vpop.permute.xlu0 %1797
        %1799 = vrot.lane.b32.xlu0 %v1772, 112
        %v1800 = vpop.permute.xlu0 %1799
        %1801 = vrot.lane.b32.xlu0 %v1775, 112
        %v1802 = vpop.permute.xlu0 %1801
        %1803 = vrot.lane.b32.xlu0 %v1780, 112
        %v1804 = vpop.permute.xlu0 %1803
        %1810 = vxpose.xlu0.b32.start [1/16] %v1796, 128
        %1811 = vxpose.xlu0.b32.cont [2/16] %v1798, 128
        %1812 = vxpose.xlu0.b32.cont [3/16] %v1800, 128
        %1813 = vxpose.xlu0.b32.cont [4/16] %v1802, 128
        %1814 = vxpose.xlu0.b32.cont [5/16] %v1804, 128
        %1815 = vxpose.xlu0.b32.cont [6/16] 0.0, 128
        %1816 = vxpose.xlu0.b32.cont [7/16] 0.0, 128
        %1817 = vxpose.xlu0.b32.cont [8/16] 0.0, 128
        %1818 = vxpose.xlu0.b32.cont [9/16] 0.0, 128
        %1819 = vxpose.xlu0.b32.cont [10/16] 0.0, 128
        %1820 = vxpose.xlu0.b32.cont [11/16] 0.0, 128
        %1821 = vxpose.xlu0.b32.cont [12/16] 0.0, 128
        %1822 = vxpose.xlu0.b32.cont [13/16] 0.0, 128
        %1823 = vxpose.xlu0.b32.cont [14/16] 0.0, 128
        %1824 = vxpose.xlu0.b32.cont [15/16] 0.0, 128
        %1825 = vxpose.xlu0.b32.end [16/16] 0.0, 128
        %v1826 = vpop.trf.xlu0
        %v1827 = vpop.trf.xlu0
        %v1828 = vpop.trf.xlu0
        %v1829 = vpop.trf.xlu0
        %v1830 = vpop.trf.xlu0
        %v1831 = vpop.trf.xlu0
        %v1832 = vpop.trf.xlu0
        %v1833 = vpop.trf.xlu0
        %v1834 = vpop.trf.xlu0
        %v1835 = vpop.trf.xlu0
        %v1836 = vpop.trf.xlu0
        %v1837 = vpop.trf.xlu0
        %v1838 = vpop.trf.xlu0
        %v1839 = vpop.trf.xlu0
        %v1840 = vpop.trf.xlu0
        %v1841 = vpop.trf.xlu0
        %v1842 = vlaneseq
        %v1843 = vshrl.u32 %v1842, 7
        %v1844 = vsub.s32 0, %v1843
        %v1845 = vrot.slane %v1610, %v1844
        %1847 = vrot.lane.b32.xlu0 %v1845, 32
        %v1848 = vpop.permute.xlu0 %1847
        %v1850 = vmul.f32 %v1764, %v1848
        %v1851 = vmul.f32 %v1767, %v1848
        %v1852 = vmul.f32 %v1772, %v1848
        %v1853 = vmul.f32 %v1775, %v1848
        %v1854 = vmul.f32 %v1780, %v1848
        %v1855 = vpack.c.bf16 %v1786, %v1785
        %v1856 = vpack.c.bf16 %v1788, %v1787
        %v1857 = vpack.c.bf16 %v1789, %v1789
        %v1858 = vpack.c.bf16 %v1826, %v1826
        %v1859 = vld [vmem:[%s2] sm:$0xff]
        %v1860 = vld [vmem:[%s2 + $0x8] sm:$0xff]
        %v1861 = vld [vmem:[%s2 + $0x10] sm:$0xff]
        %v1862 = vld [vmem:[%s2 + $0x18] sm:$0xff]
        %v1863 = vld [vmem:[%s2 + $0x20] sm:$0xf]
        %vm1864 = vcmask 64512
        %v1866 = vsel %vm1864, %v1855, 0
        %v1869 = vsel %vm1864, %v1856, 0
        %v1872 = vsel %vm1864, %v1857, 0
        %v1875 = vsel %vm1531, %v1858, 0
        %1877 = vmatprep.subr.bf16.mxu0 0
        %1878 = vmatpush1.bf16.msra.mxu0 %v1875
        %1879 = vmatprep.subr.bf16.mxu0 0
        %1880 = vmatpush1.bf16.msra.mxu0 0
        %1881 = vmatprep.subr.bf16.mxu0 0
        %1882 = vmatpush1.bf16.msra.mxu0 0
        %1883 = vmatprep.subr.bf16.mxu0 0
        %1884 = vmatpush1.bf16.msra.mxu0 0
        %1885 = vmatprep.subr.bf16.mxu0 0
        %1886 = vmatpush1.bf16.msra.mxu0 0
        %1887 = vmatprep.subr.bf16.mxu0 0
        %1888 = vmatpush1.bf16.msra.mxu0 0
        %1889 = vmatprep.subr.bf16.mxu0 0
        %1890 = vmatpush1.bf16.msra.mxu0 0
        %1891 = vmatprep.subr.bf16.mxu0 0
        %1892 = vmatpush1.bf16.msra.mxu0 0
        %1893 = vmatprep.subr.bf16.mxu0 0
        %1894 = vmatpush1.bf16.msra.mxu0 0
        %1895 = vmatprep.subr.bf16.mxu0 0
        %1896 = vmatpush1.bf16.msra.mxu0 0
        %1897 = vmatprep.subr.bf16.mxu0 0
        %1898 = vmatpush1.bf16.msra.mxu0 0
        %1899 = vmatprep.subr.bf16.mxu0 0
        %1900 = vmatpush1.bf16.msra.mxu0 0
        %1901 = vmatprep.subr.bf16.mxu0 0
        %1902 = vmatpush1.bf16.msra.mxu0 0
        %1903 = vmatprep.subr.bf16.mxu0 0
        %1904 = vmatpush1.bf16.msra.mxu0 0
        %1905 = vmatprep.subr.bf16.mxu0 0
        %1906 = vmatpush1.bf16.msra.mxu0 0
        %1907 = vmatprep.subr.bf16.mxu0 0
        %1908 = vmatpush1.bf16.msra.mxu0 0
        %1909 = vmatprep.mubr.bf16.mxu0 0
        %1910 = vmatmul.mubr.bf16.gmra.mrb[0].mxu0 %v1866
        %v1911 = vpop.f32.mrb[0].mxu0
        %v1912 = vadd.f32 %v1859, %v1911
        %v1913 = vpop.f32.mrb[0].mxu0
        %v1914 = vpop.f32.mrb[0].mxu0
        %v1915 = vadd.f32 %v1860, %v1914
        %v1916 = vpop.f32.mrb[0].mxu0
        %1917 = vmatprep.mubr.bf16.mxu0 0
        %1918 = vmatmul.mubr.bf16.gmra.mrb[0].mxu0 %v1869
        %v1919 = vpop.f32.mrb[0].mxu0
        %v1920 = vadd.f32 %v1861, %v1919
        %v1921 = vpop.f32.mrb[0].mxu0
        %v1922 = vpop.f32.mrb[0].mxu0
        %v1923 = vadd.f32 %v1862, %v1922
        %v1924 = vpop.f32.mrb[0].mxu0
        %1925 = vmatprep.mubr.bf16.mxu0 0
        %1926 = vmatmul.mubr.bf16.gmra.mrb[0].mxu0 %v1872
        %v1927 = vpop.f32.mrb[0].mxu0
        %v1928 = vadd.f32 %v1863, %v1927
        %v1929 = vpop.f32.mrb[0].mxu0
        %v1930 = vpop.f32.mrb[0].mxu0
        %v1931 = vpop.f32.mrb[0].mxu0
        %1932 = vdwg.mxu0
        %vm1933 = vcmask 293888
        %v1934 = vsel %vm1933, %v1912, -inf
        %1935 = vmax.xlane.f32.xlu0 %v1934
        %v1936 = vpop.xlane.xlu0 %1935
        %v1937 = vsel %vm1933, %v1915, -inf
        %1938 = vmax.xlane.f32.xlu0 %v1937
        %v1939 = vpop.xlane.xlu0 %1938
        %v1940 = vsel %vm1933, %v1920, -inf
        %1941 = vmax.xlane.f32.xlu0 %v1940
        %v1942 = vpop.xlane.xlu0 %1941
        %v1943 = vsel %vm1933, %v1923, -inf
        %1944 = vmax.xlane.f32.xlu0 %v1943
        %v1945 = vpop.xlane.xlu0 %1944
        %vm1946 = vcmask 289792
        %v1947 = vsel %vm1946, %v1928, -inf
        %1948 = vmax.xlane.f32.xlu0 %v1947
        %v1949 = vpop.xlane.xlu0 %1948
        %v1950 = vsub.f32 %v1912, %v1936
        %v1951 = vsub.f32 %v1915, %v1939
        %v1952 = vsub.f32 %v1920, %v1942
        %v1953 = vsub.f32 %v1923, %v1945
        %v1954 = vsub.f32 %v1928, %v1949
        %v1955 = vmul.f32 %v1950, 1.442695
        %v1956 = vpow.pop %v1955
        %v1957 = vmul.f32 %v1951, 1.442695
        %v1958 = vpow.pop %v1957
        %v1959 = vmul.f32 %v1952, 1.442695
        %v1960 = vpow.pop %v1959
        %v1961 = vmul.f32 %v1953, 1.442695
        %v1962 = vpow.pop %v1961
        %v1963 = vmul.f32 %v1954, 1.442695
        %v1964 = vpow.pop %v1963
        %v1965 = vsel %vm1933, %v1956, 0.0
        %1966 = vadd.xlane.f32.xlu0 %v1965
        %v1967 = vpop.xlane.xlu0 %1966
        %v1968 = vsel %vm1933, %v1958, 0.0
        %1969 = vadd.xlane.f32.xlu0 %v1968
        %v1970 = vpop.xlane.xlu0 %1969
        %v1971 = vsel %vm1933, %v1960, 0.0
        %1972 = vadd.xlane.f32.xlu0 %v1971
        %v1973 = vpop.xlane.xlu0 %1972
        %v1974 = vsel %vm1933, %v1962, 0.0
        %1975 = vadd.xlane.f32.xlu0 %v1974
        %v1976 = vpop.xlane.xlu0 %1975
        %v1977 = vsel %vm1946, %v1964, 0.0
        %1978 = vadd.xlane.f32.xlu0 %v1977
        %v1979 = vpop.xlane.xlu0 %1978
        %v1980 = vrcp.pop %v1967
        %v1981 = vrcp.pop %v1970
        %v1982 = vrcp.pop %v1973
        %v1983 = vrcp.pop %v1976
        %v1984 = vrcp.pop %v1979
        %v1985 = vmul.f32 %v1956, %v1980
        %v1986 = vmul.f32 %v1958, %v1981
        %v1987 = vmul.f32 %v1960, %v1982
        %v1988 = vmul.f32 %v1962, %v1983
        %v1989 = vmul.f32 %v1964, %v1984
        %v1990 = vpack.c.bf16 %v1986, %v1985
        %v1991 = vpack.c.bf16 %v1988, %v1987
        %v1992 = vpack.c.bf16 %v1989, %v1989
        %v1993 = vpack.c.bf16 %v1851, %v1850
        %v1994 = vpack.c.bf16 %v1853, %v1852
        %v1995 = vpack.c.bf16 %v1854, %v1854
        %1999 = vrot.lane.b32.xlu0 %v1993, 96
        %v2000 = vpop.permute.xlu0 %1999
        %2001 = vrot.lane.b32.xlu0 %v1994, 96
        %v2002 = vpop.permute.xlu0 %2001
        %2003 = vrot.lane.b32.xlu0 %v1995, 96
        %v2004 = vpop.permute.xlu0 %2003
        %v2008 = vsel %vm1933, %v1990, 0
        %v2011 = vsel %vm1933, %v1991, 0
        %v2014 = vsel %vm1933, %v1992, 0
        %vm2016 = vcmask 1041408
        %v2018 = vsel %vm2016, %v2004, 0
        %2020 = vmatprep.subr.bf16.mxu0 0
        %2021 = vmatpush1.bf16.msra.mxu0 %v2000
        %2022 = vmatprep.subr.bf16.mxu0 0
        %2023 = vmatpush1.bf16.msra.mxu0 %v2002
        %2024 = vmatprep.subr.bf16.mxu0 0
        %2025 = vmatpush1.bf16.msra.mxu0 %v2018
        %2026 = vmatprep.subr.bf16.mxu0 0
        %2027 = vmatpush1.bf16.msra.mxu0 0
        %2028 = vmatprep.subr.bf16.mxu0 0
        %2029 = vmatpush1.bf16.msra.mxu0 0
        %2030 = vmatprep.subr.bf16.mxu0 0
        %2031 = vmatpush1.bf16.msra.mxu0 0
        %2032 = vmatprep.subr.bf16.mxu0 0
        %2033 = vmatpush1.bf16.msra.mxu0 0
        %2034 = vmatprep.subr.bf16.mxu0 0
        %2035 = vmatpush1.bf16.msra.mxu0 0
        %2036 = vmatprep.subr.bf16.mxu0 0
        %2037 = vmatpush1.bf16.msra.mxu0 0
        %2038 = vmatprep.subr.bf16.mxu0 0
        %2039 = vmatpush1.bf16.msra.mxu0 0
        %2040 = vmatprep.subr.bf16.mxu0 0
        %2041 = vmatpush1.bf16.msra.mxu0 0
        %2042 = vmatprep.subr.bf16.mxu0 0
        %2043 = vmatpush1.bf16.msra.mxu0 0
        %2044 = vmatprep.subr.bf16.mxu0 0
        %2045 = vmatpush1.bf16.msra.mxu0 0
        %2046 = vmatprep.subr.bf16.mxu0 0
        %2047 = vmatpush1.bf16.msra.mxu0 0
        %2048 = vmatprep.subr.bf16.mxu0 0
        %2049 = vmatpush1.bf16.msra.mxu0 0
        %2050 = vmatprep.subr.bf16.mxu0 0
        %2051 = vmatpush1.bf16.msra.mxu0 0
        %2052 = vmatprep.mubr.bf16.mxu0 0
        %2053 = vmatmul.mubr.bf16.gmra.mrb[0].mxu0 %v2008
        %v2054 = vpop.f32.mrb[0].mxu0
        %v2055 = vadd.f32 0.0, %v2054
        %v2056 = vpop.f32.mrb[0].mxu0
        %v2057 = vpop.f32.mrb[0].mxu0
        %v2058 = vadd.f32 0.0, %v2057
        %v2059 = vpop.f32.mrb[0].mxu0
        %2060 = vmatprep.mubr.bf16.mxu0 0
        %2061 = vmatmul.mubr.bf16.gmra.mrb[0].mxu0 %v2011
        %v2062 = vpop.f32.mrb[0].mxu0
        %v2063 = vadd.f32 0.0, %v2062
        %v2064 = vpop.f32.mrb[0].mxu0
        %v2065 = vpop.f32.mrb[0].mxu0
        %v2066 = vadd.f32 0.0, %v2065
        %v2067 = vpop.f32.mrb[0].mxu0
        %2068 = vmatprep.mubr.bf16.mxu0 0
        %2069 = vmatmul.mubr.bf16.gmra.mrb[0].mxu0 %v2014
        %v2070 = vpop.f32.mrb[0].mxu0
        %v2071 = vadd.f32 0.0, %v2070
        %v2072 = vpop.f32.mrb[0].mxu0
        %v2073 = vpop.f32.mrb[0].mxu0
        %v2074 = vpop.f32.mrb[0].mxu0
        %2075 = vdwg.mxu0
        %v2076 = vpack.c.bf16 %v1827, %v1827
        %s2077 = scalar_lea.vmem %s2, 40
        %v2078 = vld [vmem:[%s2077] sm:$0xff]
        %v2079 = vld [vmem:[%s2077 + $0x8] sm:$0xff]
        %v2080 = vld [vmem:[%s2077 + $0x10] sm:$0xff]
        %v2081 = vld [vmem:[%s2077 + $0x18] sm:$0xff]
        %v2082 = vld [vmem:[%s2077 + $0x20] sm:$0xf]
        %2086 = vrot.lane.b32.xlu0 %v1855, 120
        %v2087 = vpop.permute.xlu0 %2086
        %2088 = vrot.lane.b32.xlu0 %v1856, 120
        %v2089 = vpop.permute.xlu0 %2088
        %2090 = vrot.lane.b32.xlu0 %v1857, 120
        %v2091 = vpop.permute.xlu0 %2090
        %v2093 = vsel %vm1864, %v2087, 0
        %v2096 = vsel %vm1864, %v2089, 0
        %v2099 = vsel %vm1864, %v2091, 0
        %v2102 = vsel %vm1531, %v2076, 0
        %2104 = vmatprep.subr.bf16.mxu0 0
        %2105 = vmatpush1.bf16.msra.mxu0 %v2102
        %2106 = vmatprep.subr.bf16.mxu0 0
        %2107 = vmatpush1.bf16.msra.mxu0 0
        %2108 = vmatprep.subr.bf16.mxu0 0
        %2109 = vmatpush1.bf16.msra.mxu0 0
        %2110 = vmatprep.subr.bf16.mxu0 0
        %2111 = vmatpush1.bf16.msra.mxu0 0
        %2112 = vmatprep.subr.bf16.mxu0 0
        %2113 = vmatpush1.bf16.msra.mxu0 0
        %2114 = vmatprep.subr.bf16.mxu0 0
        %2115 = vmatpush1.bf16.msra.mxu0 0
        %2116 = vmatprep.subr.bf16.mxu0 0
        %2117 = vmatpush1.bf16.msra.mxu0 0
        %2118 = vmatprep.subr.bf16.mxu0 0
        %2119 = vmatpush1.bf16.msra.mxu0 0
        %2120 = vmatprep.subr.bf16.mxu0 0
        %2121 = vmatpush1.bf16.msra.mxu0 0
        %2122 = vmatprep.subr.bf16.mxu0 0
        %2123 = vmatpush1.bf16.msra.mxu0 0
        %2124 = vmatprep.subr.bf16.mxu0 0
        %2125 = vmatpush1.bf16.msra.mxu0 0
        %2126 = vmatprep.subr.bf16.mxu0 0
        %2127 = vmatpush1.bf16.msra.mxu0 0
        %2128 = vmatprep.subr.bf16.mxu0 0
        %2129 = vmatpush1.bf16.msra.mxu0 0
        %2130 = vmatprep.subr.bf16.mxu0 0
        %2131 = vmatpush1.bf16.msra.mxu0 0
        %2132 = vmatprep.subr.bf16.mxu0 0
        %2133 = vmatpush1.bf16.msra.mxu0 0
        %2134 = vmatprep.subr.bf16.mxu0 0
        %2135 = vmatpush1.bf16.msra.mxu0 0
        %2136 = vmatprep.mubr.bf16.mxu0 0
        %2137 = vmatmul.mubr.bf16.gmra.mrb[0].mxu0 %v2093
        %v2138 = vpop.f32.mrb[0].mxu0
        %v2139 = vadd.f32 %v2078, %v2138
        %v2140 = vpop.f32.mrb[0].mxu0
        %v2141 = vpop.f32.mrb[0].mxu0
        %v2142 = vadd.f32 %v2079, %v2141
        %v2143 = vpop.f32.mrb[0].mxu0
        %2144 = vmatprep.mubr.bf16.mxu0 0
        %2145 = vmatmul.mubr.bf16.gmra.mrb[0].mxu0 %v2096
        %v2146 = vpop.f32.mrb[0].mxu0
        %v2147 = vadd.f32 %v2080, %v2146
        %v2148 = vpop.f32.mrb[0].mxu0
        %v2149 = vpop.f32.mrb[0].mxu0
        %v2150 = vadd.f32 %v2081, %v2149
        %v2151 = vpop.f32.mrb[0].mxu0
        %2152 = vmatprep.mubr.bf16.mxu0 0
        %2153 = vmatmul.mubr.bf16.gmra.mrb[0].mxu0 %v2099
        %v2154 = vpop.f32.mrb[0].mxu0
        %v2155 = vadd.f32 %v2082, %v2154
        %v2156 = vpop.f32.mrb[0].mxu0
        %v2157 = vpop.f32.mrb[0].mxu0
        %v2158 = vpop.f32.mrb[0].mxu0
        %2159 = vdwg.mxu0
        %v2160 = vsel %vm1933, %v2139, -inf
        %2161 = vmax.xlane.f32.xlu0 %v2160
        %v2162 = vpop.xlane.xlu0 %2161
        %v2163 = vsel %vm1933, %v2142, -inf
        %2164 = vmax.xlane.f32.xlu0 %v2163
        %v2165 = vpop.xlane.xlu0 %2164
        %v2166 = vsel %vm1933, %v2147, -inf
        %2167 = vmax.xlane.f32.xlu0 %v2166
        %v2168 = vpop.xlane.xlu0 %2167
        %v2169 = vsel %vm1933, %v2150, -inf
        %2170 = vmax.xlane.f32.xlu0 %v2169
        %v2171 = vpop.xlane.xlu0 %2170
        %v2172 = vsel %vm1946, %v2155, -inf
        %2173 = vmax.xlane.f32.xlu0 %v2172
        %v2174 = vpop.xlane.xlu0 %2173
        %v2175 = vsub.f32 %v2139, %v2162
        %v2176 = vsub.f32 %v2142, %v2165
        %v2177 = vsub.f32 %v2147, %v2168
        %v2178 = vsub.f32 %v2150, %v2171
        %v2179 = vsub.f32 %v2155, %v2174
        %v2180 = vmul.f32 %v2175, 1.442695
        %v2181 = vpow.pop %v2180
        %v2182 = vmul.f32 %v2176, 1.442695
        %v2183 = vpow.pop %v2182
        %v2184 = vmul.f32 %v2177, 1.442695
        %v2185 = vpow.pop %v2184
        %v2186 = vmul.f32 %v2178, 1.442695
        %v2187 = vpow.pop %v2186
        %v2188 = vmul.f32 %v2179, 1.442695
        %v2189 = vpow.pop %v2188
        %v2190 = vsel %vm1933, %v2181, 0.0
        %2191 = vadd.xlane.f32.xlu0 %v2190
        %v2192 = vpop.xlane.xlu0 %2191
        %v2193 = vsel %vm1933, %v2183, 0.0
        %2194 = vadd.xlane.f32.xlu0 %v2193
        %v2195 = vpop.xlane.xlu0 %2194
        %v2196 = vsel %vm1933, %v2185, 0.0
        %2197 = vadd.xlane.f32.xlu0 %v2196
        %v2198 = vpop.xlane.xlu0 %2197
        %v2199 = vsel %vm1933, %v2187, 0.0
        %2200 = vadd.xlane.f32.xlu0 %v2199
        %v2201 = vpop.xlane.xlu0 %2200
        %v2202 = vsel %vm1946, %v2189, 0.0
        %2203 = vadd.xlane.f32.xlu0 %v2202
        %v2204 = vpop.xlane.xlu0 %2203
        %v2205 = vrcp.pop %v2192
        %v2206 = vrcp.pop %v2195
        %v2207 = vrcp.pop %v2198
        %v2208 = vrcp.pop %v2201
        %v2209 = vrcp.pop %v2204
        %v2210 = vmul.f32 %v2181, %v2205
        %v2211 = vmul.f32 %v2183, %v2206
        %v2212 = vmul.f32 %v2185, %v2207
        %v2213 = vmul.f32 %v2187, %v2208
        %v2214 = vmul.f32 %v2189, %v2209
        %v2215 = vpack.c.bf16 %v2211, %v2210
        %v2216 = vpack.c.bf16 %v2213, %v2212
        %v2217 = vpack.c.bf16 %v2214, %v2214
        %2218 = vrot.lane.b32.xlu0 %v1993, 88
        %v2219 = vpop.permute.xlu0 %2218
        %2220 = vrot.lane.b32.xlu0 %v1994, 88
        %v2221 = vpop.permute.xlu0 %2220
        %2222 = vrot.lane.b32.xlu0 %v1995, 88
        %v2223 = vpop.permute.xlu0 %2222
        %v2227 = vsel %vm1933, %v2215, 0
        %v2230 = vsel %vm1933, %v2216, 0
        %v2233 = vsel %vm1933, %v2217, 0
        %v2236 = vsel %vm2016, %v2223, 0
        %2238 = vmatprep.subr.bf16.mxu0 0
        %2239 = vmatpush1.bf16.msra.mxu0 %v2219
        %2240 = vmatprep.subr.bf16.mxu0 0
        %2241 = vmatpush1.bf16.msra.mxu0 %v2221
        %2242 = vmatprep.subr.bf16.mxu0 0
        %2243 = vmatpush1.bf16.msra.mxu0 %v2236
        %2244 = vmatprep.subr.bf16.mxu0 0
        %2245 = vmatpush1.bf16.msra.mxu0 0
        %2246 = vmatprep.subr.bf16.mxu0 0
        %2247 = vmatpush1.bf16.msra.mxu0 0
        %2248 = vmatprep.subr.bf16.mxu0 0
        %2249 = vmatpush1.bf16.msra.mxu0 0
        %2250 = vmatprep.subr.bf16.mxu0 0
        %2251 = vmatpush1.bf16.msra.mxu0 0
        %2252 = vmatprep.subr.bf16.mxu0 0
        %2253 = vmatpush1.bf16.msra.mxu0 0
        %2254 = vmatprep.subr.bf16.mxu0 0
        %2255 = vmatpush1.bf16.msra.mxu0 0
        %2256 = vmatprep.subr.bf16.mxu0 0
        %2257 = vmatpush1.bf16.msra.mxu0 0
        %2258 = vmatprep.subr.bf16.mxu0 0
        %2259 = vmatpush1.bf16.msra.mxu0 0
        %2260 = vmatprep.subr.bf16.mxu0 0
        %2261 = vmatpush1.bf16.msra.mxu0 0
        %2262 = vmatprep.subr.bf16.mxu0 0
        %2263 = vmatpush1.bf16.msra.mxu0 0
        %2264 = vmatprep.subr.bf16.mxu0 0
        %2265 = vmatpush1.bf16.msra.mxu0 0
        %2266 = vmatprep.subr.bf16.mxu0 0
        %2267 = vmatpush1.bf16.msra.mxu0 0
        %2268 = vmatprep.subr.bf16.mxu0 0
        %2269 = vmatpush1.bf16.msra.mxu0 0
        %2270 = vmatprep.mubr.bf16.mxu0 0
        %2271 = vmatmul.mubr.bf16.gmra.mrb[0].mxu0 %v2227
        %v2272 = vpop.f32.mrb[0].mxu0
        %v2273 = vadd.f32 0.0, %v2272
        %v2274 = vpop.f32.mrb[0].mxu0
        %v2275 = vpop.f32.mrb[0].mxu0
        %v2276 = vadd.f32 0.0, %v2275
        %v2277 = vpop.f32.mrb[0].mxu0
        %2278 = vmatprep.mubr.bf16.mxu0 0
        %2279 = vmatmul.mubr.bf16.gmra.mrb[0].mxu0 %v2230
        %v2280 = vpop.f32.mrb[0].mxu0
        %v2281 = vadd.f32 0.0, %v2280
        %v2282 = vpop.f32.mrb[0].mxu0
        %v2283 = vpop.f32.mrb[0].mxu0
        %v2284 = vadd.f32 0.0, %v2283
        %v2285 = vpop.f32.mrb[0].mxu0
        %2286 = vmatprep.mubr.bf16.mxu0 0
        %2287 = vmatmul.mubr.bf16.gmra.mrb[0].mxu0 %v2233
        %v2288 = vpop.f32.mrb[0].mxu0
        %v2289 = vadd.f32 0.0, %v2288
        %v2290 = vpop.f32.mrb[0].mxu0
        %v2291 = vpop.f32.mrb[0].mxu0
        %v2292 = vpop.f32.mrb[0].mxu0
        %2293 = vdwg.mxu0
        %2299 = vrot.lane.b32.xlu0 %v2273, 8
        %v2300 = vpop.permute.xlu0 %2299
        %2301 = vrot.lane.b32.xlu0 %v2276, 8
        %v2302 = vpop.permute.xlu0 %2301
        %2303 = vrot.lane.b32.xlu0 %v2281, 8
        %v2304 = vpop.permute.xlu0 %2303
        %2305 = vrot.lane.b32.xlu0 %v2284, 8
        %v2306 = vpop.permute.xlu0 %2305
        %2307 = vrot.lane.b32.xlu0 %v2289, 8
        %v2308 = vpop.permute.xlu0 %2307
        %v2314 = vsel %vm1864, %v2055, %v2300
        %v2315 = vsel %vm1864, %v2058, %v2302
        %v2316 = vsel %vm1864, %v2063, %v2304
        %v2317 = vsel %vm1864, %v2066, %v2306
        %v2318 = vsel %vm1864, %v2071, %v2308
        %v2319 = vld [vmem:[#allocation14] sm:$0xff]
        %v2320 = vld [vmem:[#allocation14 + $0x8] sm:$0xff]
        %v2321 = vld [vmem:[#allocation4 + $0x11] sm:$0x1]
        %v2323 = vlaneseq
        %v2324 = vshrl.u32 %v2323, 7
        %v2325 = vsub.s32 0, %v2324
        %v2326 = vrot.slane %v2321, %v2325
        %v2329 = vsel %vm775, %v2314, 0
        %v2332 = vsel %vm775, %v2315, 0
        %v2335 = vsel %vm775, %v2316, 0
        %v2338 = vsel %vm775, %v2317, 0
        %v2341 = vsel %vm775, %v2318, 0
        %2343 = vmatprep.subr.mxu0 0.0
        %2344 = vmatpush1.msra.mxu0 %v2319
        %2345 = vmatprep.subr.mxu0 0.0
        %2346 = vmatpush1.msra.mxu0 %v2320
        %2347 = vmatprep.subr.mxu0 0.0
        %2348 = vmatpush1.msra.mxu0 0.0
        %2349 = vmatprep.subr.mxu0 0.0
        %2350 = vmatpush1.msra.mxu0 0.0
        %2351 = vmatprep.subr.mxu0 0.0
        %2352 = vmatpush1.msra.mxu0 0.0
        %2353 = vmatprep.subr.mxu0 0.0
        %2354 = vmatpush1.msra.mxu0 0.0
        %2355 = vmatprep.subr.mxu0 0.0
        %2356 = vmatpush1.msra.mxu0 0.0
        %2357 = vmatprep.subr.mxu0 0.0
        %2358 = vmatpush1.msra.mxu0 0.0
        %2359 = vmatprep.subr.mxu0 0.0
        %2360 = vmatpush1.msra.mxu0 0.0
        %2361 = vmatprep.subr.mxu0 0.0
        %2362 = vmatpush1.msra.mxu0 0.0
        %2363 = vmatprep.subr.mxu0 0.0
        %2364 = vmatpush1.msra.mxu0 0.0
        %2365 = vmatprep.subr.mxu0 0.0
        %2366 = vmatpush1.msra.mxu0 0.0
        %2367 = vmatprep.subr.mxu0 0.0
        %2368 = vmatpush1.msra.mxu0 0.0
        %2369 = vmatprep.subr.mxu0 0.0
        %2370 = vmatpush1.msra.mxu0 0.0
        %2371 = vmatprep.subr.mxu0 0.0
        %2372 = vmatpush1.msra.mxu0 0.0
        %2373 = vmatprep.subr.mxu0 0.0
        %2374 = vmatpush1.msra.mxu0 0.0
        %2375 = vmatprep.subr.mxu0 0.0
        %2376 = vmatpush1.msra.mxu0 0.0
        %2377 = vmatprep.subr.mxu0 0.0
        %2378 = vmatpush1.msra.mxu0 0.0
        %2379 = vmatprep.subr.mxu0 0.0
        %2380 = vmatpush1.msra.mxu0 0.0
        %2381 = vmatprep.subr.mxu0 0.0
        %2382 = vmatpush1.msra.mxu0 0.0
        %2383 = vmatprep.subr.mxu0 0.0
        %2384 = vmatpush1.msra.mxu0 0.0
        %2385 = vmatprep.subr.mxu0 0.0
        %2386 = vmatpush1.msra.mxu0 0.0
        %2387 = vmatprep.subr.mxu0 0.0
        %2388 = vmatpush1.msra.mxu0 0.0
        %2389 = vmatprep.subr.mxu0 0.0
        %2390 = vmatpush1.msra.mxu0 0.0
        %2391 = vmatprep.subr.mxu0 0.0
        %2392 = vmatpush1.msra.mxu0 0.0
        %2393 = vmatprep.subr.mxu0 0.0
        %2394 = vmatpush1.msra.mxu0 0.0
        %2395 = vmatprep.subr.mxu0 0.0
        %2396 = vmatpush1.msra.mxu0 0.0
        %2397 = vmatprep.subr.mxu0 0.0
        %2398 = vmatpush1.msra.mxu0 0.0
        %2399 = vmatprep.subr.mxu0 0.0
        %2400 = vmatpush1.msra.mxu0 0.0
        %2401 = vmatprep.subr.mxu0 0.0
        %2402 = vmatpush1.msra.mxu0 0.0
        %2403 = vmatprep.subr.mxu0 0.0
        %2404 = vmatpush1.msra.mxu0 0.0
        %2405 = vmatprep.subr.mxu0 0.0
        %2406 = vmatpush1.msra.mxu0 0.0
        %2407 = vmatprep.mubr.f32.mxu0 0.0
        %2408 = vmatmul.mubr.f32.gmra.mrb[0].mxu0 %v2329
        %v2409 = vpop.f32.mrb[0].mxu0
        %v2410 = vadd.f32 %v2326, %v2409
        %v2411 = vpop.f32.mrb[0].mxu0
        %2412 = vmatprep.mubr.f32.mxu0 0.0
        %2413 = vmatmul.mubr.f32.gmra.mrb[0].mxu0 %v2332
        %v2414 = vpop.f32.mrb[0].mxu0
        %v2415 = vadd.f32 %v2326, %v2414
        %v2416 = vpop.f32.mrb[0].mxu0
        %2417 = vmatprep.mubr.f32.mxu0 0.0
        %2418 = vmatmul.mubr.f32.gmra.mrb[0].mxu0 %v2335
        %v2419 = vpop.f32.mrb[0].mxu0
        %v2420 = vadd.f32 %v2326, %v2419
        %v2421 = vpop.f32.mrb[0].mxu0
        %2422 = vmatprep.mubr.f32.mxu0 0.0
        %2423 = vmatmul.mubr.f32.gmra.mrb[0].mxu0 %v2338
        %v2424 = vpop.f32.mrb[0].mxu0
        %v2425 = vadd.f32 %v2326, %v2424
        %v2426 = vpop.f32.mrb[0].mxu0
        %2427 = vmatprep.mubr.f32.mxu0 0.0
        %2428 = vmatmul.mubr.f32.gmra.mrb[0].mxu0 %v2341
        %v2429 = vpop.f32.mrb[0].mxu0
        %v2430 = vadd.f32 %v2326, %v2429
        %v2431 = vpop.f32.mrb[0].mxu0
        %2432 = vdwg.mxu0
        %v2433 = vmul.f32 %v2410, 0.5
        %v2434 = vmul.f32 %v2415, 0.5
        %v2435 = vmul.f32 %v2420, 0.5
        %v2436 = vmul.f32 %v2425, 0.5
        %v2437 = vmul.f32 %v2430, 0.5
        %v2438 = vmul.f32 %v2410, 0.044715
        %v2439 = vmul.f32 %v2415, 0.044715
        %v2440 = vmul.f32 %v2420, 0.044715
        %v2441 = vmul.f32 %v2425, 0.044715
        %v2442 = vmul.f32 %v2430, 0.044715
        %v2443 = vmul.f32 %v2438, %v2410
        %v2444 = vmul.f32 %v2439, %v2415
        %v2445 = vmul.f32 %v2440, %v2420
        %v2446 = vmul.f32 %v2441, %v2425
        %v2447 = vmul.f32 %v2442, %v2430
        %v2448 = vmul.f32 %v2443, %v2410
        %v2449 = vmul.f32 %v2444, %v2415
        %v2450 = vmul.f32 %v2445, %v2420
        %v2451 = vmul.f32 %v2446, %v2425
        %v2452 = vmul.f32 %v2447, %v2430
        %v2453 = vadd.f32 %v2410, %v2448
        %v2454 = vadd.f32 %v2415, %v2449
        %v2455 = vadd.f32 %v2420, %v2450
        %v2456 = vadd.f32 %v2425, %v2451
        %v2457 = vadd.f32 %v2430, %v2452
        %v2458 = vmul.f32 %v2453, 0.7978846
        %v2459 = vmul.f32 %v2454, 0.7978846
        %v2460 = vmul.f32 %v2455, 0.7978846
        %v2461 = vmul.f32 %v2456, 0.7978846
        %v2462 = vmul.f32 %v2457, 0.7978846
        %v2463 = vtanh.pop %v2458
        %v2464 = vtanh.pop %v2459
        %v2465 = vtanh.pop %v2460
        %v2466 = vtanh.pop %v2461
        %v2467 = vtanh.pop %v2462
        %v2468 = vadd.f32 %v2463, 1.0
        %v2469 = vadd.f32 %v2464, 1.0
        %v2470 = vadd.f32 %v2465, 1.0
        %v2471 = vadd.f32 %v2466, 1.0
        %v2472 = vadd.f32 %v2467, 1.0
        %v2473 = vmul.f32 %v2433, %v2468
        %v2474 = vmul.f32 %v2434, %v2469
        %v2475 = vmul.f32 %v2435, %v2470
        %v2476 = vmul.f32 %v2436, %v2471
        %v2477 = vmul.f32 %v2437, %v2472
        %v2478 = vld [vmem:[#allocation15] sm:$0x3]
        %v2479 = vld [vmem:[#allocation4 + $0x12] sm:$0x1]
        %v2481 = vlaneseq
        %v2482 = vshrl.u32 %v2481, 7
        %v2483 = vsub.s32 0, %v2482
        %v2484 = vrot.slane %v2479, %v2483
        %vm2486 = vcmask 15360
        %v2488 = vsel %vm2486, %v2473, 0
        %v2491 = vsel %vm2486, %v2474, 0
        %v2494 = vsel %vm2486, %v2475, 0
        %v2497 = vsel %vm2486, %v2476, 0
        %v2500 = vsel %vm2486, %v2477, 0
        %v2503 = vsel %vm2016, %v2478, 0
        %2505 = vmatprep.subr.mxu0 0.0
        %2506 = vmatpush1.msra.mxu0 %v2503
        %2507 = vmatprep.subr.mxu0 0.0
        %2508 = vmatpush1.msra.mxu0 0.0
        %2509 = vmatprep.subr.mxu0 0.0
        %2510 = vmatpush1.msra.mxu0 0.0
        %2511 = vmatprep.subr.mxu0 0.0
        %2512 = vmatpush1.msra.mxu0 0.0
        %2513 = vmatprep.subr.mxu0 0.0
        %2514 = vmatpush1.msra.mxu0 0.0
        %2515 = vmatprep.subr.mxu0 0.0
        %2516 = vmatpush1.msra.mxu0 0.0
        %2517 = vmatprep.subr.mxu0 0.0
        %2518 = vmatpush1.msra.mxu0 0.0
        %2519 = vmatprep.subr.mxu0 0.0
        %2520 = vmatpush1.msra.mxu0 0.0
        %2521 = vmatprep.subr.mxu0 0.0
        %2522 = vmatpush1.msra.mxu0 0.0
        %2523 = vmatprep.subr.mxu0 0.0
        %2524 = vmatpush1.msra.mxu0 0.0
        %2525 = vmatprep.subr.mxu0 0.0
        %2526 = vmatpush1.msra.mxu0 0.0
        %2527 = vmatprep.subr.mxu0 0.0
        %2528 = vmatpush1.msra.mxu0 0.0
        %2529 = vmatprep.subr.mxu0 0.0
        %2530 = vmatpush1.msra.mxu0 0.0
        %2531 = vmatprep.subr.mxu0 0.0
        %2532 = vmatpush1.msra.mxu0 0.0
        %2533 = vmatprep.subr.mxu0 0.0
        %2534 = vmatpush1.msra.mxu0 0.0
        %2535 = vmatprep.subr.mxu0 0.0
        %2536 = vmatpush1.msra.mxu0 0.0
        %2537 = vmatprep.subr.mxu0 0.0
        %2538 = vmatpush1.msra.mxu0 0.0
        %2539 = vmatprep.subr.mxu0 0.0
        %2540 = vmatpush1.msra.mxu0 0.0
        %2541 = vmatprep.subr.mxu0 0.0
        %2542 = vmatpush1.msra.mxu0 0.0
        %2543 = vmatprep.subr.mxu0 0.0
        %2544 = vmatpush1.msra.mxu0 0.0
        %2545 = vmatprep.subr.mxu0 0.0
        %2546 = vmatpush1.msra.mxu0 0.0
        %2547 = vmatprep.subr.mxu0 0.0
        %2548 = vmatpush1.msra.mxu0 0.0
        %2549 = vmatprep.subr.mxu0 0.0
        %2550 = vmatpush1.msra.mxu0 0.0
        %2551 = vmatprep.subr.mxu0 0.0
        %2552 = vmatpush1.msra.mxu0 0.0
        %2553 = vmatprep.subr.mxu0 0.0
        %2554 = vmatpush1.msra.mxu0 0.0
        %2555 = vmatprep.subr.mxu0 0.0
        %2556 = vmatpush1.msra.mxu0 0.0
        %2557 = vmatprep.subr.mxu0 0.0
        %2558 = vmatpush1.msra.mxu0 0.0
        %2559 = vmatprep.subr.mxu0 0.0
        %2560 = vmatpush1.msra.mxu0 0.0
        %2561 = vmatprep.subr.mxu0 0.0
        %2562 = vmatpush1.msra.mxu0 0.0
        %2563 = vmatprep.subr.mxu0 0.0
        %2564 = vmatpush1.msra.mxu0 0.0
        %2565 = vmatprep.subr.mxu0 0.0
        %2566 = vmatpush1.msra.mxu0 0.0
        %2567 = vmatprep.subr.mxu0 0.0
        %2568 = vmatpush1.msra.mxu0 0.0
        %2569 = vmatprep.mubr.f32.mxu0 0.0
        %2570 = vmatmul.mubr.f32.gmra.mrb[0].mxu0 %v2488
        %v2571 = vpop.f32.mrb[0].mxu0
        %v2572 = vadd.f32 %v2484, %v2571
        %v2573 = vpop.f32.mrb[0].mxu0
        %2574 = vmatprep.mubr.f32.mxu0 0.0
        %2575 = vmatmul.mubr.f32.gmra.mrb[0].mxu0 %v2491
        %v2576 = vpop.f32.mrb[0].mxu0
        %v2577 = vadd.f32 %v2484, %v2576
        %v2578 = vpop.f32.mrb[0].mxu0
        %2579 = vmatprep.mubr.f32.mxu0 0.0
        %2580 = vmatmul.mubr.f32.gmra.mrb[0].mxu0 %v2494
        %v2581 = vpop.f32.mrb[0].mxu0
        %v2582 = vadd.f32 %v2484, %v2581
        %v2583 = vpop.f32.mrb[0].mxu0
        %2584 = vmatprep.mubr.f32.mxu0 0.0
        %2585 = vmatmul.mubr.f32.gmra.mrb[0].mxu0 %v2497
        %v2586 = vpop.f32.mrb[0].mxu0
        %v2587 = vadd.f32 %v2484, %v2586
        %v2588 = vpop.f32.mrb[0].mxu0
        %2589 = vmatprep.mubr.f32.mxu0 0.0
        %2590 = vmatmul.mubr.f32.gmra.mrb[0].mxu0 %v2500
        %v2591 = vpop.f32.mrb[0].mxu0
        %v2592 = vadd.f32 %v2484, %v2591
        %v2593 = vpop.f32.mrb[0].mxu0
        %2594 = vdwg.mxu0
        %v2595 = vxor.u32 %v2572, 2147483648
        %v2596 = vxor.u32 %v2577, 2147483648
        %v2597 = vxor.u32 %v2582, 2147483648
        %v2598 = vxor.u32 %v2587, 2147483648
        %v2599 = vxor.u32 %v2592, 2147483648
        %v2600 = vmul.f32 %v2595, 1.442695
        %v2601 = vpow.pop %v2600
        %v2602 = vmul.f32 %v2596, 1.442695
        %v2603 = vpow.pop %v2602
        %v2604 = vmul.f32 %v2597, 1.442695
        %v2605 = vpow.pop %v2604
        %v2606 = vmul.f32 %v2598, 1.442695
        %v2607 = vpow.pop %v2606
        %v2608 = vmul.f32 %v2599, 1.442695
        %v2609 = vpow.pop %v2608
        %v2610 = vadd.f32 %v2601, 1.0
        %v2611 = vadd.f32 %v2603, 1.0
        %v2612 = vadd.f32 %v2605, 1.0
        %v2613 = vadd.f32 %v2607, 1.0
        %v2614 = vadd.f32 %v2609, 1.0
        %v2615 = vrcp.pop %v2610
        %v2616 = vmul.f32 1.0, %v2615
        %v2617 = vrcp.pop %v2611
        %v2618 = vmul.f32 1.0, %v2617
        %v2619 = vrcp.pop %v2612
        %v2620 = vmul.f32 1.0, %v2619
        %v2621 = vrcp.pop %v2613
        %v2622 = vmul.f32 1.0, %v2621
        %v2623 = vrcp.pop %v2614
        %v2624 = vmul.f32 1.0, %v2623
        %2626 = vset.pattern.permute.xlu0 0
        %2627 = vperm.xlu0 %2626, %v2616
        %v2628 = vpop.permute.xlu0 %2627
        %2631 = vset.pattern.permute.xlu0 0
        %2632 = vperm.xlu0 %2631, %v2618
        %v2633 = vpop.permute.xlu0 %2632
        %2636 = vset.pattern.permute.xlu0 0
        %2637 = vperm.xlu0 %2636, %v2620
        %v2638 = vpop.permute.xlu0 %2637
        %2641 = vset.pattern.permute.xlu0 0
        %2642 = vperm.xlu0 %2641, %v2622
        %v2643 = vpop.permute.xlu0 %2642
        %2646 = vset.pattern.permute.xlu0 0
        %2647 = vperm.xlu0 %2646, %v2624
        %v2648 = vpop.permute.xlu0 %2647
        %v2650 = vmul.f32 %v2628, %v1681
        %v2651 = vmul.f32 %v2633, %v1684
        %v2652 = vmul.f32 %v2638, %v1689
        %v2653 = vmul.f32 %v2643, %v1692
        %v2654 = vmul.f32 %v2648, %v1697
        %v2655 = vld [vmem:[#allocation4 + $0xe] sm:$0x1]
        %v2657 = vlaneseq
        %v2658 = vshrl.u32 %v2657, 7
        %v2659 = vsub.s32 0, %v2658
        %v2660 = vrot.slane %v2655, %v2659
        %v2662 = vmul.f32 %v2650, %v2660
        %v2663 = vmul.f32 %v2651, %v2660
        %v2664 = vmul.f32 %v2652, %v2660
        %v2665 = vmul.f32 %v2653, %v2660
        %v2666 = vmul.f32 %v2654, %v2660
        %v2667 = vld [vmem:[#allocation4 + $0xf] sm:$0x1]
        %v2669 = vlaneseq
        %v2670 = vshrl.u32 %v2669, 7
        %v2671 = vsub.s32 0, %v2670
        %v2672 = vrot.slane %v2667, %v2671
        %v2674 = vadd.f32 %v2662, %v2672
        %v2675 = vadd.f32 %v2663, %v2672
        %v2676 = vadd.f32 %v2664, %v2672
        %v2677 = vadd.f32 %v2665, %v2672
        %v2678 = vadd.f32 %v2666, %v2672
        %v2679 = vld [vmem:[#allocation4 + $0x13] sm:$0x1]
        %v2680 = vld [vmem:[#allocation4 + $0x14] sm:$0x1]
        %v2681 = vsel %vm775, %v2314, 0.0
        %2682 = vadd.xlane.f32.xlu0 %v2681
        %v2683 = vpop.xlane.xlu0 %2682
        %v2684 = vsel %vm775, %v2315, 0.0
        %2685 = vadd.xlane.f32.xlu0 %v2684
        %v2686 = vpop.xlane.xlu0 %2685
        %v2687 = vsel %vm775, %v2316, 0.0
        %2688 = vadd.xlane.f32.xlu0 %v2687
        %v2689 = vpop.xlane.xlu0 %2688
        %v2690 = vsel %vm775, %v2317, 0.0
        %2691 = vadd.xlane.f32.xlu0 %v2690
        %v2692 = vpop.xlane.xlu0 %2691
        %v2693 = vsel %vm788, %v2318, 0.0
        %2694 = vadd.xlane.f32.xlu0 %v2693
        %v2695 = vpop.xlane.xlu0 %2694
        %v2696 = vmul.f32 %v2683, %v792
        %v2697 = vmul.f32 %v2686, %v792
        %v2698 = vmul.f32 %v2689, %v792
        %v2699 = vmul.f32 %v2692, %v792
        %v2700 = vmul.f32 %v2695, %v792
        %v2701 = vsub.f32 %v2314, %v2696
        %v2702 = vsub.f32 %v2315, %v2697
        %v2703 = vsub.f32 %v2316, %v2698
        %v2704 = vsub.f32 %v2317, %v2699
        %v2705 = vsub.f32 %v2318, %v2700
        %v2706 = vmul.f32 %v2701, %v2701
        %v2707 = vmul.f32 %v2702, %v2702
        %v2708 = vmul.f32 %v2703, %v2703
        %v2709 = vmul.f32 %v2704, %v2704
        %v2710 = vmul.f32 %v2705, %v2705
        %v2711 = vsel %vm775, %v2706, 0.0
        %2712 = vadd.xlane.f32.xlu0 %v2711
        %v2713 = vpop.xlane.xlu0 %2712
        %v2714 = vsel %vm775, %v2707, 0.0
        %2715 = vadd.xlane.f32.xlu0 %v2714
        %v2716 = vpop.xlane.xlu0 %2715
        %v2717 = vsel %vm775, %v2708, 0.0
        %2718 = vadd.xlane.f32.xlu0 %v2717
        %v2719 = vpop.xlane.xlu0 %2718
        %v2720 = vsel %vm775, %v2709, 0.0
        %2721 = vadd.xlane.f32.xlu0 %v2720
        %v2722 = vpop.xlane.xlu0 %2721
        %v2723 = vsel %vm788, %v2710, 0.0
        %2724 = vadd.xlane.f32.xlu0 %v2723
        %v2725 = vpop.xlane.xlu0 %2724
        %v2726 = vmul.f32 %v2713, %v792
        %v2727 = vmul.f32 %v2716, %v792
        %v2728 = vmul.f32 %v2719, %v792
        %v2729 = vmul.f32 %v2722, %v792
        %v2730 = vmul.f32 %v2725, %v792
        %v2731 = vadd.f32 %v2726, 1e-05
        %v2732 = vadd.f32 %v2727, 1e-05
        %v2733 = vadd.f32 %v2728, 1e-05
        %v2734 = vadd.f32 %v2729, 1e-05
        %v2735 = vadd.f32 %v2730, 1e-05
        %v2736 = vrsqrt.pop %v2731
        %v2737 = vrsqrt.pop %v2732
        %v2738 = vrsqrt.pop %v2733
        %v2739 = vrsqrt.pop %v2734
        %v2740 = vrsqrt.pop %v2735
        %v2741 = vmul.f32 %v2701, %v2736
        %v2742 = vmul.f32 %v2702, %v2737
        %v2743 = vmul.f32 %v2703, %v2738
        %v2744 = vmul.f32 %v2704, %v2739
        %v2745 = vmul.f32 %v2705, %v2740
        %v2747 = vlaneseq
        %v2748 = vshrl.u32 %v2747, 7
        %v2749 = vsub.s32 0, %v2748
        %v2750 = vrot.slane %v2679, %v2749
        %v2752 = vmul.f32 %v2741, %v2750
        %v2753 = vmul.f32 %v2742, %v2750
        %v2754 = vmul.f32 %v2743, %v2750
        %v2755 = vmul.f32 %v2744, %v2750
        %v2756 = vmul.f32 %v2745, %v2750
        %v2758 = vlaneseq
        %v2759 = vshrl.u32 %v2758, 7
        %v2760 = vsub.s32 0, %v2759
        %v2761 = vrot.slane %v2680, %v2760
        %v2763 = vadd.f32 %v2752, %v2761
        %v2764 = vadd.f32 %v2753, %v2761
        %v2765 = vadd.f32 %v2754, %v2761
        %v2766 = vadd.f32 %v2755, %v2761
        %v2767 = vadd.f32 %v2756, %v2761
        %2773 = vrot.lane.b32.xlu0 %v2674, 16
        %v2774 = vpop.permute.xlu0 %2773
        %2775 = vrot.lane.b32.xlu0 %v2675, 16
        %v2776 = vpop.permute.xlu0 %2775
        %2777 = vrot.lane.b32.xlu0 %v2676, 16
        %v2778 = vpop.permute.xlu0 %2777
        %2779 = vrot.lane.b32.xlu0 %v2677, 16
        %v2780 = vpop.permute.xlu0 %2779
        %2781 = vrot.lane.b32.xlu0 %v2678, 16
        %v2782 = vpop.permute.xlu0 %2781
        %v2788 = vsel %vm775, %v2763, %v2774
        %v2789 = vsel %vm775, %v2764, %v2776
        %v2790 = vsel %vm775, %v2765, %v2778
        %v2791 = vsel %vm775, %v2766, %v2780
        %v2792 = vsel %vm775, %v2767, %v2782
        %v2793 = vld [vmem:[%s11] sm:$0xf]
        %v2794 = vld [vmem:[%s11 + $0x4] sm:$0xf]
        %v2795 = vld [vmem:[%s11 + $0x8] sm:$0xf]
        %v2796 = vld [vmem:[%s11 + $0xc] sm:$0xf]
        %v2797 = vpack.c.bf16 %v2789, %v2788
        %v2798 = vpack.c.bf16 %v2791, %v2790
        %v2799 = vpack.c.bf16 %v2792, %v2792
        %v2800 = vld [vmem:[#allocation4 + $0x15] sm:$0x1]
        %v2802 = vlaneseq
        %v2803 = vshrl.u32 %v2802, 7
        %v2804 = vsub.s32 0, %v2803
        %v2805 = vrot.slane %v2800, %v2804
        %v2811 = vunpack.c.l.b16 %v2793
        %v2812 = vunpack.c.l.b16 %v2794
        %v2813 = vunpack.c.l.b16 %v2795
        %v2814 = vunpack.c.l.b16 %v2796
        %v2815 = vpack.c.b16 %v2812, %v2811
        %v2816 = vpack.c.b16 %v2814, %v2813
        %v2820 = vsel %vm587, %v2797, 0
        %v2823 = vsel %vm587, %v2798, 0
        %v2826 = vsel %vm587, %v2799, 0
        %2828 = vmatprep.subr.bf16.mxu0 0
        %2829 = vmatpush1.bf16.msra.mxu0 %v2815
        %2830 = vmatprep.subr.bf16.mxu0 0
        %2831 = vmatpush1.bf16.msra.mxu0 %v2816
        %2832 = vmatprep.subr.bf16.mxu0 0
        %2833 = vmatpush1.bf16.msra.mxu0 0
        %2834 = vmatprep.subr.bf16.mxu0 0
        %2835 = vmatpush1.bf16.msra.mxu0 0
        %2836 = vmatprep.subr.bf16.mxu0 0
        %2837 = vmatpush1.bf16.msra.mxu0 0
        %2838 = vmatprep.subr.bf16.mxu0 0
        %2839 = vmatpush1.bf16.msra.mxu0 0
        %2840 = vmatprep.subr.bf16.mxu0 0
        %2841 = vmatpush1.bf16.msra.mxu0 0
        %2842 = vmatprep.subr.bf16.mxu0 0
        %2843 = vmatpush1.bf16.msra.mxu0 0
        %2844 = vmatprep.subr.bf16.mxu0 0
        %2845 = vmatpush1.bf16.msra.mxu0 0
        %2846 = vmatprep.subr.bf16.mxu0 0
        %2847 = vmatpush1.bf16.msra.mxu0 0
        %2848 = vmatprep.subr.bf16.mxu0 0
        %2849 = vmatpush1.bf16.msra.mxu0 0
        %2850 = vmatprep.subr.bf16.mxu0 0
        %2851 = vmatpush1.bf16.msra.mxu0 0
        %2852 = vmatprep.subr.bf16.mxu0 0
        %2853 = vmatpush1.bf16.msra.mxu0 0
        %2854 = vmatprep.subr.bf16.mxu0 0
        %2855 = vmatpush1.bf16.msra.mxu0 0
        %2856 = vmatprep.subr.bf16.mxu0 0
        %2857 = vmatpush1.bf16.msra.mxu0 0
        %2858 = vmatprep.subr.bf16.mxu0 0
        %2859 = vmatpush1.bf16.msra.mxu0 0
        %2860 = vmatprep.mubr.bf16.mxu0 0
        %2861 = vmatmul.mubr.bf16.gmra.mrb[0].mxu0 %v2820
        %v2862 = vpop.f32.mrb[0].mxu0
        %v2863 = vadd.f32 %v2805, %v2862
        %v2864 = vpop.f32.mrb[0].mxu0
        %v2865 = vpop.f32.mrb[0].mxu0
        %v2866 = vadd.f32 %v2805, %v2865
        %v2867 = vpop.f32.mrb[0].mxu0
        %2868 = vmatprep.mubr.bf16.mxu0 0
        %2869 = vmatmul.mubr.bf16.gmra.mrb[0].mxu0 %v2823
        %v2870 = vpop.f32.mrb[0].mxu0
        %v2871 = vadd.f32 %v2805, %v2870
        %v2872 = vpop.f32.mrb[0].mxu0
        %v2873 = vpop.f32.mrb[0].mxu0
        %v2874 = vadd.f32 %v2805, %v2873
        %v2875 = vpop.f32.mrb[0].mxu0
        %2876 = vmatprep.mubr.bf16.mxu0 0
        %2877 = vmatmul.mubr.bf16.gmra.mrb[0].mxu0 %v2826
        %v2878 = vpop.f32.mrb[0].mxu0
        %v2879 = vadd.f32 %v2805, %v2878
        %v2880 = vpop.f32.mrb[0].mxu0
        %v2881 = vpop.f32.mrb[0].mxu0
        %v2882 = vpop.f32.mrb[0].mxu0
        %2883 = vdwg.mxu0
        %v2884 = vadd.f32 %v580, %v2863
        %v2885 = vadd.f32 %v581, %v2866
        %v2886 = vadd.f32 %v582, %v2871
        %v2887 = vadd.f32 %v583, %v2874
        %v2888 = vadd.f32 %v584, %v2879
        %v2889 = vld [vmem:[#allocation4 + $0x16] sm:$0x1]
        %v2890 = vld [vmem:[#allocation4 + $0x17] sm:$0x1]
        %v2891 = vsel %vm587, %v2884, 0.0
        %2892 = vadd.xlane.f32.xlu0 %v2891
        %v2893 = vpop.xlane.xlu0 %2892
        %v2894 = vsel %vm587, %v2885, 0.0
        %2895 = vadd.xlane.f32.xlu0 %v2894
        %v2896 = vpop.xlane.xlu0 %2895
        %v2897 = vsel %vm587, %v2886, 0.0
        %2898 = vadd.xlane.f32.xlu0 %v2897
        %v2899 = vpop.xlane.xlu0 %2898
        %v2900 = vsel %vm587, %v2887, 0.0
        %2901 = vadd.xlane.f32.xlu0 %v2900
        %v2902 = vpop.xlane.xlu0 %2901
        %v2903 = vsel %vm600, %v2888, 0.0
        %2904 = vadd.xlane.f32.xlu0 %v2903
        %v2905 = vpop.xlane.xlu0 %2904
        %v2906 = vmul.f32 %v2893, %v604
        %v2907 = vmul.f32 %v2896, %v604
        %v2908 = vmul.f32 %v2899, %v604
        %v2909 = vmul.f32 %v2902, %v604
        %v2910 = vmul.f32 %v2905, %v604
        %v2911 = vsub.f32 %v2884, %v2906
        %v2912 = vsub.f32 %v2885, %v2907
        %v2913 = vsub.f32 %v2886, %v2908
        %v2914 = vsub.f32 %v2887, %v2909
        %v2915 = vsub.f32 %v2888, %v2910
        %v2916 = vmul.f32 %v2911, %v2911
        %v2917 = vmul.f32 %v2912, %v2912
        %v2918 = vmul.f32 %v2913, %v2913
        %v2919 = vmul.f32 %v2914, %v2914
        %v2920 = vmul.f32 %v2915, %v2915
        %v2921 = vsel %vm587, %v2916, 0.0
        %2922 = vadd.xlane.f32.xlu0 %v2921
        %v2923 = vpop.xlane.xlu0 %2922
        %v2924 = vsel %vm587, %v2917, 0.0
        %2925 = vadd.xlane.f32.xlu0 %v2924
        %v2926 = vpop.xlane.xlu0 %2925
        %v2927 = vsel %vm587, %v2918, 0.0
        %2928 = vadd.xlane.f32.xlu0 %v2927
        %v2929 = vpop.xlane.xlu0 %2928
        %v2930 = vsel %vm587, %v2919, 0.0
        %2931 = vadd.xlane.f32.xlu0 %v2930
        %v2932 = vpop.xlane.xlu0 %2931
        %v2933 = vsel %vm600, %v2920, 0.0
        %2934 = vadd.xlane.f32.xlu0 %v2933
        %v2935 = vpop.xlane.xlu0 %2934
        %v2936 = vmul.f32 %v2923, %v604
        %v2937 = vmul.f32 %v2926, %v604
        %v2938 = vmul.f32 %v2929, %v604
        %v2939 = vmul.f32 %v2932, %v604
        %v2940 = vmul.f32 %v2935, %v604
        %v2941 = vadd.f32 %v2936, 1e-05
        %v2942 = vadd.f32 %v2937, 1e-05
        %v2943 = vadd.f32 %v2938, 1e-05
        %v2944 = vadd.f32 %v2939, 1e-05
        %v2945 = vadd.f32 %v2940, 1e-05
        %v2946 = vrsqrt.pop %v2941
        %v2947 = vrsqrt.pop %v2942
        %v2948 = vrsqrt.pop %v2943
        %v2949 = vrsqrt.pop %v2944
        %v2950 = vrsqrt.pop %v2945
        %v2951 = vmul.f32 %v2911, %v2946
        %v2952 = vmul.f32 %v2912, %v2947
        %v2953 = vmul.f32 %v2913, %v2948
        %v2954 = vmul.f32 %v2914, %v2949
        %v2955 = vmul.f32 %v2915, %v2950
        %v2957 = vlaneseq
        %v2958 = vshrl.u32 %v2957, 7
        %v2959 = vsub.s32 0, %v2958
        %v2960 = vrot.slane %v2889, %v2959
        %v2962 = vmul.f32 %v2951, %v2960
        %v2963 = vmul.f32 %v2952, %v2960
        %v2964 = vmul.f32 %v2953, %v2960
        %v2965 = vmul.f32 %v2954, %v2960
        %v2966 = vmul.f32 %v2955, %v2960
        %v2968 = vlaneseq
        %v2969 = vshrl.u32 %v2968, 7
        %v2970 = vsub.s32 0, %v2969
        %v2971 = vrot.slane %v2890, %v2970
        %v2973 = vadd.f32 %v2962, %v2971
        %v2974 = vadd.f32 %v2963, %v2971
        %v2975 = vadd.f32 %v2964, %v2971
        %v2976 = vadd.f32 %v2965, %v2971
        %v2977 = vadd.f32 %v2966, %v2971
        %v2978 = vld [vmem:[%s12] sm:$0xf]
        %v2979 = vld [vmem:[%s12 + $0x4] sm:$0xf]
        %v2980 = vld [vmem:[%s12 + $0x8] sm:$0xf]
        %v2981 = vld [vmem:[%s12 + $0xc] sm:$0xf]
        %v2982 = vpack.c.bf16 %v2974, %v2973
        %v2983 = vpack.c.bf16 %v2976, %v2975
        %v2984 = vpack.c.bf16 %v2977, %v2977
        %v2985 = vld [vmem:[#allocation4 + $0x18] sm:$0x1]
        %v2987 = vlaneseq
        %v2988 = vshrl.u32 %v2987, 7
        %v2989 = vsub.s32 0, %v2988
        %v2990 = vrot.slane %v2985, %v2989
        %v2996 = vunpack.c.l.b16 %v2978
        %v2997 = vunpack.c.l.b16 %v2979
        %v2998 = vunpack.c.l.b16 %v2980
        %v2999 = vunpack.c.l.b16 %v2981
        %v3000 = vpack.c.b16 %v2997, %v2996
        %v3001 = vpack.c.b16 %v2999, %v2998
        %v3005 = vsel %vm587, %v2982, 0
        %v3008 = vsel %vm587, %v2983, 0
        %v3011 = vsel %vm587, %v2984, 0
        %3013 = vmatprep.subr.bf16.mxu0 0
        %3014 = vmatpush1.bf16.msra.mxu0 %v3000
        %3015 = vmatprep.subr.bf16.mxu0 0
        %3016 = vmatpush1.bf16.msra.mxu0 %v3001
        %3017 = vmatprep.subr.bf16.mxu0 0
        %3018 = vmatpush1.bf16.msra.mxu0 0
        %3019 = vmatprep.subr.bf16.mxu0 0
        %3020 = vmatpush1.bf16.msra.mxu0 0
        %3021 = vmatprep.subr.bf16.mxu0 0
        %3022 = vmatpush1.bf16.msra.mxu0 0
        %3023 = vmatprep.subr.bf16.mxu0 0
        %3024 = vmatpush1.bf16.msra.mxu0 0
        %3025 = vmatprep.subr.bf16.mxu0 0
        %3026 = vmatpush1.bf16.msra.mxu0 0
        %3027 = vmatprep.subr.bf16.mxu0 0
        %3028 = vmatpush1.bf16.msra.mxu0 0
        %3029 = vmatprep.subr.bf16.mxu0 0
        %3030 = vmatpush1.bf16.msra.mxu0 0
        %3031 = vmatprep.subr.bf16.mxu0 0
        %3032 = vmatpush1.bf16.msra.mxu0 0
        %3033 = vmatprep.subr.bf16.mxu0 0
        %3034 = vmatpush1.bf16.msra.mxu0 0
        %3035 = vmatprep.subr.bf16.mxu0 0
        %3036 = vmatpush1.bf16.msra.mxu0 0
        %3037 = vmatprep.subr.bf16.mxu0 0
        %3038 = vmatpush1.bf16.msra.mxu0 0
        %3039 = vmatprep.subr.bf16.mxu0 0
        %3040 = vmatpush1.bf16.msra.mxu0 0
        %3041 = vmatprep.subr.bf16.mxu0 0
        %3042 = vmatpush1.bf16.msra.mxu0 0
        %3043 = vmatprep.subr.bf16.mxu0 0
        %3044 = vmatpush1.bf16.msra.mxu0 0
        %3045 = vmatprep.mubr.bf16.mxu0 0
        %3046 = vmatmul.mubr.bf16.gmra.mrb[0].mxu0 %v3005
        %v3047 = vpop.f32.mrb[0].mxu0
        %v3048 = vadd.f32 %v2990, %v3047
        %v3049 = vpop.f32.mrb[0].mxu0
        %v3050 = vpop.f32.mrb[0].mxu0
        %v3051 = vadd.f32 %v2990, %v3050
        %v3052 = vpop.f32.mrb[0].mxu0
        %3053 = vmatprep.mubr.bf16.mxu0 0
        %3054 = vmatmul.mubr.bf16.gmra.mrb[0].mxu0 %v3008
        %v3055 = vpop.f32.mrb[0].mxu0
        %v3056 = vadd.f32 %v2990, %v3055
        %v3057 = vpop.f32.mrb[0].mxu0
        %v3058 = vpop.f32.mrb[0].mxu0
        %v3059 = vadd.f32 %v2990, %v3058
        %v3060 = vpop.f32.mrb[0].mxu0
        %3061 = vmatprep.mubr.bf16.mxu0 0
        %3062 = vmatmul.mubr.bf16.gmra.mrb[0].mxu0 %v3011
        %v3063 = vpop.f32.mrb[0].mxu0
        %v3064 = vadd.f32 %v2990, %v3063
        %v3065 = vpop.f32.mrb[0].mxu0
        %v3066 = vpop.f32.mrb[0].mxu0
        %v3067 = vpop.f32.mrb[0].mxu0
        %3068 = vdwg.mxu0
        %v3069 = vmul.f32 %v3048, 0.5
        %v3070 = vmul.f32 %v3051, 0.5
        %v3071 = vmul.f32 %v3056, 0.5
        %v3072 = vmul.f32 %v3059, 0.5
        %v3073 = vmul.f32 %v3064, 0.5
        %v3074 = vmul.f32 %v3048, 0.044715
        %v3075 = vmul.f32 %v3051, 0.044715
        %v3076 = vmul.f32 %v3056, 0.044715
        %v3077 = vmul.f32 %v3059, 0.044715
        %v3078 = vmul.f32 %v3064, 0.044715
        %v3079 = vmul.f32 %v3074, %v3048
        %v3080 = vmul.f32 %v3075, %v3051
        %v3081 = vmul.f32 %v3076, %v3056
        %v3082 = vmul.f32 %v3077, %v3059
        %v3083 = vmul.f32 %v3078, %v3064
        %v3084 = vmul.f32 %v3079, %v3048
        %v3085 = vmul.f32 %v3080, %v3051
        %v3086 = vmul.f32 %v3081, %v3056
        %v3087 = vmul.f32 %v3082, %v3059
        %v3088 = vmul.f32 %v3083, %v3064
        %v3089 = vadd.f32 %v3048, %v3084
        %v3090 = vadd.f32 %v3051, %v3085
        %v3091 = vadd.f32 %v3056, %v3086
        %v3092 = vadd.f32 %v3059, %v3087
        %v3093 = vadd.f32 %v3064, %v3088
        %v3094 = vmul.f32 %v3089, 0.7978846
        %v3095 = vmul.f32 %v3090, 0.7978846
        %v3096 = vmul.f32 %v3091, 0.7978846
        %v3097 = vmul.f32 %v3092, 0.7978846
        %v3098 = vmul.f32 %v3093, 0.7978846
        %v3099 = vtanh.pop %v3094
        %v3100 = vtanh.pop %v3095
        %v3101 = vtanh.pop %v3096
        %v3102 = vtanh.pop %v3097
        %v3103 = vtanh.pop %v3098
        %v3104 = vadd.f32 %v3099, 1.0
        %v3105 = vadd.f32 %v3100, 1.0
        %v3106 = vadd.f32 %v3101, 1.0
        %v3107 = vadd.f32 %v3102, 1.0
        %v3108 = vadd.f32 %v3103, 1.0
        %v3109 = vmul.f32 %v3069, %v3104
        %v3110 = vmul.f32 %v3070, %v3105
        %v3111 = vmul.f32 %v3071, %v3106
        %v3112 = vmul.f32 %v3072, %v3107
        %v3113 = vmul.f32 %v3073, %v3108
        %v3114 = vld [vmem:[%s13] sm:$0xf]
        %v3115 = vld [vmem:[%s13 + $0x4] sm:$0xf]
        %v3116 = vld [vmem:[%s13 + $0x8] sm:$0xf]
        %v3117 = vld [vmem:[%s13 + $0xc] sm:$0xf]
        %v3118 = vld [vmem:[%s13 + $0x10] sm:$0xf]
        %v3119 = vld [vmem:[%s13 + $0x14] sm:$0xf]
        %v3120 = vld [vmem:[%s13 + $0x18] sm:$0xf]
        %v3121 = vld [vmem:[%s13 + $0x1c] sm:$0xf]
        %v3122 = vld [vmem:[%s13 + $0x20] sm:$0xf]
        %v3123 = vld [vmem:[%s13 + $0x24] sm:$0xf]
        %v3124 = vld [vmem:[%s13 + $0x28] sm:$0xf]
        %v3125 = vld [vmem:[%s13 + $0x2c] sm:$0xf]
        %v3126 = vld [vmem:[%s13 + $0x30] sm:$0xf]
        %v3127 = vld [vmem:[%s13 + $0x34] sm:$0xf]
        %v3128 = vld [vmem:[%s13 + $0x38] sm:$0xf]
        %v3129 = vld [vmem:[%s13 + $0x3c] sm:$0xf]
        %v3130 = vpack.c.bf16 %v3110, %v3109
        %v3131 = vpack.c.bf16 %v3112, %v3111
        %v3132 = vpack.c.bf16 %v3113, %v3113
        %v3149 = vunpack.c.l.b16 %v3114
        %v3150 = vunpack.c.l.b16 %v3115
        %v3151 = vunpack.c.l.b16 %v3116
        %v3152 = vunpack.c.l.b16 %v3117
        %v3153 = vunpack.c.l.b16 %v3118
        %v3154 = vunpack.c.l.b16 %v3119
        %v3155 = vunpack.c.l.b16 %v3120
        %v3156 = vunpack.c.l.b16 %v3121
        %v3157 = vunpack.c.l.b16 %v3122
        %v3158 = vunpack.c.l.b16 %v3123
        %v3159 = vunpack.c.l.b16 %v3124
        %v3160 = vunpack.c.l.b16 %v3125
        %v3161 = vunpack.c.l.b16 %v3126
        %v3162 = vunpack.c.l.b16 %v3127
        %v3163 = vunpack.c.l.b16 %v3128
        %v3164 = vunpack.c.l.b16 %v3129
        %v3165 = vpack.c.b16 %v3150, %v3149
        %v3166 = vpack.c.b16 %v3152, %v3151
        %v3167 = vpack.c.b16 %v3154, %v3153
        %v3168 = vpack.c.b16 %v3156, %v3155
        %v3169 = vpack.c.b16 %v3158, %v3157
        %v3170 = vpack.c.b16 %v3160, %v3159
        %v3171 = vpack.c.b16 %v3162, %v3161
        %v3172 = vpack.c.b16 %v3164, %v3163
        %3181 = vmatprep.subr.bf16.mxu0 0
        %3182 = vmatpush1.bf16.msra.mxu0 %v3165
        %3183 = vmatprep.subr.bf16.mxu0 0
        %3184 = vmatpush1.bf16.msra.mxu0 %v3166
        %3185 = vmatprep.subr.bf16.mxu0 0
        %3186 = vmatpush1.bf16.msra.mxu0 %v3167
        %3187 = vmatprep.subr.bf16.mxu0 0
        %3188 = vmatpush1.bf16.msra.mxu0 %v3168
        %3189 = vmatprep.subr.bf16.mxu0 0
        %3190 = vmatpush1.bf16.msra.mxu0 %v3169
        %3191 = vmatprep.subr.bf16.mxu0 0
        %3192 = vmatpush1.bf16.msra.mxu0 %v3170
        %3193 = vmatprep.subr.bf16.mxu0 0
        %3194 = vmatpush1.bf16.msra.mxu0 %v3171
        %3195 = vmatprep.subr.bf16.mxu0 0
        %3196 = vmatpush1.bf16.msra.mxu0 %v3172
        %3197 = vmatprep.subr.bf16.mxu0 0
        %3198 = vmatpush1.bf16.msra.mxu0 0
        %3199 = vmatprep.subr.bf16.mxu0 0
        %3200 = vmatpush1.bf16.msra.mxu0 0
        %3201 = vmatprep.subr.bf16.mxu0 0
        %3202 = vmatpush1.bf16.msra.mxu0 0
        %3203 = vmatprep.subr.bf16.mxu0 0
        %3204 = vmatpush1.bf16.msra.mxu0 0
        %3205 = vmatprep.subr.bf16.mxu0 0
        %3206 = vmatpush1.bf16.msra.mxu0 0
        %3207 = vmatprep.subr.bf16.mxu0 0
        %3208 = vmatpush1.bf16.msra.mxu0 0
        %3209 = vmatprep.subr.bf16.mxu0 0
        %3210 = vmatpush1.bf16.msra.mxu0 0
        %3211 = vmatprep.subr.bf16.mxu0 0
        %3212 = vmatpush1.bf16.msra.mxu0 0
        %3213 = vmatprep.mubr.bf16.mxu0 0
        %3214 = vmatmul.mubr.bf16.gmra.mrb[0].mxu0 %v3130
        %v3215 = vpop.f32.mrb[0].mxu0
        %v3216 = vadd.f32 0.0, %v3215
        %v3217 = vpop.f32.mrb[0].mxu0
        %v3218 = vpop.f32.mrb[0].mxu0
        %v3219 = vadd.f32 0.0, %v3218
        %v3220 = vpop.f32.mrb[0].mxu0
        %3221 = vmatprep.mubr.bf16.mxu0 0
        %3222 = vmatmul.mubr.bf16.gmra.mrb[0].mxu0 %v3131
        %v3223 = vpop.f32.mrb[0].mxu0
        %v3224 = vadd.f32 0.0, %v3223
        %v3225 = vpop.f32.mrb[0].mxu0
        %v3226 = vpop.f32.mrb[0].mxu0
        %v3227 = vadd.f32 0.0, %v3226
        %v3228 = vpop.f32.mrb[0].mxu0
        %3229 = vmatprep.mubr.bf16.mxu0 0
        %3230 = vmatmul.mubr.bf16.gmra.mrb[0].mxu0 %v3132
        %v3231 = vpop.f32.mrb[0].mxu0
        %v3232 = vadd.f32 0.0, %v3231
        %v3233 = vpop.f32.mrb[0].mxu0
        %v3234 = vpop.f32.mrb[0].mxu0
        %v3235 = vpop.f32.mrb[0].mxu0
        %3236 = vdwg.mxu0
        %v3237 = vadd.f32 %v2884, %v3216
        %v3238 = vadd.f32 %v2885, %v3219
        %v3239 = vadd.f32 %v2886, %v3224
        %v3240 = vadd.f32 %v2887, %v3227
        %v3241 = vadd.f32 %v2888, %v3232
        %v3242 = vld [vmem:[#allocation4 + $0x19] sm:$0x1]
        %v3244 = vlaneseq
        %v3245 = vshrl.u32 %v3244, 7
        %v3246 = vsub.s32 0, %v3245
        %v3247 = vrot.slane %v3242, %v3246
        %v3249 = vadd.f32 %v3237, %v3247
        %v3250 = vadd.f32 %v3238, %v3247
        %v3251 = vadd.f32 %v3239, %v3247
        %v3252 = vadd.f32 %v3240, %v3247
        %v3253 = vadd.f32 %v3241, %v3247
        %3254 = vst.msk [vmem:[%s578] sm:$0xff] %vm587, %v3249
        %3255 = vst.msk [vmem:[%s578 + $0x8] sm:$0xff] %vm587, %v3250
        %3256 = vst.msk [vmem:[%s578 + $0x10] sm:$0xff] %vm587, %v3251
        %3257 = vst.msk [vmem:[%s578 + $0x18] sm:$0xff] %vm587, %v3252
        %3258 = vst.msk [vmem:[%s578 + $0x20] sm:$0xf] %vm600, %v3253
        %p3259 = scmp.lt.s32.totalorder %s30, 1
        %s3260 = scalar_select %p3259, %s30, 1
        %s3261 = smul.addr %s3260, 5
        %s3262 = smul.addr %s3261, 8
        %s3263 = scalar_lea.vmem %s14, %s3262
        // Predicated region
        $region109: #{_lambda_.1} parent=75 // pred_check
          %p3264 = pneg %p347
        $region110: #{_lambda_.1} parent=75 // pred_check_branch
          %3266 = sbr.rel (%p3264) target = $region112
        $region111: #{_lambda_.1} parent=75 // pred_region
          _
        $region112: #{_lambda_.1} parent=75 // pred_fallthru
          _
      $region76: #{_lambda_.1} parent=5 // pred_fallthru
        _
      %p3267 = scmp.le.s32.totalorder 2, %s25
      // Predicated region
      $region113: #{_lambda_.1} parent=5 // pred_check
        %p3268 = pneg %p3267
      $region114: #{_lambda_.1} parent=5 // pred_check_branch
        %3270 = sbr.rel (%p3268) target = $region116
      $region115: #{_lambda_.1} parent=5 // pred_region
        %s3271 = ssub.s32 %s25, 2
        // Predicated region
        $region117: #{_lambda_.1} parent=115 // pred_check
          %p3272 = pneg %p353
        $region118: #{_lambda_.1} parent=115 // pred_check_branch
          %3274 = sbr.rel (%p3272) target = $region120
        $region119: #{_lambda_.1} parent=115 // pred_region
          %p3275 = scmp.lt.s32.totalorder %s31, 1
          %s3276 = scalar_select %p3275, %s31, 1
          %s3277 = smul.addr %s3276, 5
          %s3278 = smul.addr %s3277, 8
          %s3279 = scalar_lea.vmem %s14, %s3278
        $region120: #{_lambda_.1} parent=115 // pred_fallthru
          _
      $region116: #{_lambda_.1} parent=5 // pred_fallthru
        _
    $region6: #{_lambda_.1} parent=1 // loop_footer
      %s29 = sadd.s32 1, %s25
    $region7: #{_lambda_.1} parent=1 // loop_footer_branch
      %24 = sbr.rel target = $region3
    $region8: #{_lambda_.1} parent=1 // loop_exit
      _
    %3280 = vsyncpa [#allocation5], 1
    %s3281 = scalar_lea.sflag [#allocation5], 1
    %3282 = vsyncpa %s3281, 1
    %3283 = vsyncpa [#allocation7], 1
    %3284 = vsyncpa [#allocation10], 1
    %3285 = vsyncpa [#allocation13], 1
    %3286 = vsyncpa [#allocation16], 1

</llo_original>
